<compile_context>
chip_gen: v7x
topology: tpu7x:2x2x1
jax: 0.10.0
libtpu: 0.0.40
codegen_flags: <defaults>
</compile_context>

<pallas_src>
import functools

import jax
import jax.numpy as jnp
from jax.experimental import pallas as pl
from jax.experimental.pallas import tpu as pltpu


# ----------------------------------------------------------------------------
# Pallas kernels
# ----------------------------------------------------------------------------
def _prenet_kernel(x_ref, w1_ref, b1_ref, w2_ref, b2_ref, o_ref):
    """Fused PreNet: relu(x@W1+b1) -> relu(.@W2+b2). Dropout == identity (eval)."""
    h = jnp.dot(x_ref[...], w1_ref[...], preferred_element_type=jnp.float32) + b1_ref[...]
    h = jnp.maximum(h, 0.0)
    h = jnp.dot(h, w2_ref[...], preferred_element_type=jnp.float32) + b2_ref[...]
    o_ref[...] = jnp.maximum(h, 0.0)


def _cbhg_conv_kernel(xp_ref, wbank_ref, sb_ref, hb_ref, w1_ref, s1_ref, h1_ref,
                      w2_ref, h2_ref, o_ref, scr1, scr2, *, K, T, P, C):
    """Fused CBHG conv stack for one batch row.

    xp_ref: (1, T+2P, C)   zero-padded PreNet output (P = K//2)
    wbank:  (K*C, K*C)     all K bank convs block-packed (zero taps where the
                           individual kernel is shorter than K)
    sb/hb:  (1, K*C)       folded BN scale/shift per bank
    w1:     (3*K*C, C)     conv_project1 (k=3) weight, s1/h1 its folded BN
    w2:     (3*C, C)       conv_project2 (k=3) weight with BN scale pre-folded
    h2:     (1, C)         conv_project2 folded BN shift
    o_ref:  (1, T, C)
    scr1:   VMEM (T+2, K*C)   padded staging buffer (maxpool + proj1 window)
    scr2:   VMEM (T+2, C)     padded staging buffer (proj2 window)
    """
    KC = K * C

    # ---- conv bank: all K kernel sizes in ONE (T, K*C) @ (K*C, K*C) matmul ----
    wm = jnp.concatenate([xp_ref[0, pl.ds(j, T), :] for j in range(K)], axis=1)
    xb = jnp.dot(wm, wbank_ref[...], preferred_element_type=jnp.float32)
    xb = jnp.maximum(xb, 0.0) * sb_ref[...] + hb_ref[...]            # relu THEN BN

    # ---- MaxPool1d(kernel=2, stride=1, padding=1)[..., :T]  (front pad = -inf) ----
    scr1[pl.ds(1, T), :] = xb
    scr1[pl.ds(0, 1), :] = jnp.full((1, KC), -jnp.inf, jnp.float32)
    scr1[pl.ds(T + 1, 1), :] = jnp.zeros((1, KC), jnp.float32)
    pooled = jnp.maximum(xb, scr1[pl.ds(0, T), :])                   # max(x[t], x[t-1])

    # ---- conv_project1: k=3 conv -> relu -> BN ----
    scr1[pl.ds(1, T), :] = pooled
    scr1[pl.ds(0, 1), :] = jnp.zeros((1, KC), jnp.float32)           # zero conv padding
    wm1 = jnp.concatenate([scr1[pl.ds(j, T), :] for j in range(3)], axis=1)   # (T, 3KC)
    y1 = jnp.dot(wm1, w1_ref[...], preferred_element_type=jnp.float32)
    y1 = jnp.maximum(y1, 0.0) * s1_ref[...] + h1_ref[...]

    # ---- conv_project2: k=3 conv (no relu); BN scale folded into w2 ----
    scr2[pl.ds(0, 1), :] = jnp.zeros((1, C), jnp.float32)
    scr2[pl.ds(T + 1, 1), :] = jnp.zeros((1, C), jnp.float32)
    scr2[pl.ds(1, T), :] = y1
    wm2 = jnp.concatenate([scr2[pl.ds(j, T), :] for j in range(3)], axis=1)   # (T, 3C)
    y2 = jnp.dot(wm2, w2_ref[...], preferred_element_type=jnp.float32) + h2_ref[...]

    # ---- residual add (pre-bank input = centre of the padded block) ----
    o_ref[0] = y2 + xp_ref[0, pl.ds(P, T), :]


def _highway_gates_kernel(x_ref, w_ref, b_ref, wih_ref, bih_ref, o_ref, *, L, C):
    """All highway layers + the GRU input-gate matmul for both directions.

    x_ref:  (M, C)
    w_ref:  (L, C, 2C)   [W1 | W2] per layer (transposed to (in, out))
    b_ref:  (L, 1, 2C)   [b1(=0) | b2]
    wih:    (C, 6H)      [Wih_fwd^T | Wih_bwd^T]
    bih:    (1, 6H)      b_ih with b_hh r/z slices folded in
    o_ref:  (M, 6H)      precomputed GRU input gates for both directions
    """
    h = x_ref[...]
    for l in range(L):                       # L is static -> unrolled
        y = jnp.dot(h, w_ref[l], preferred_element_type=jnp.float32) + b_ref[l]
        g = jax.nn.sigmoid(y[:, C:])
        h = g * jnp.maximum(y[:, :C], 0.0) + (1.0 - g) * h
    o_ref[...] = jnp.dot(h, wih_ref[...], preferred_element_type=jnp.float32) + bih_ref[...]


def _bigru_kernel(gxf_ref, gxb_ref, whh_ref, bhn_ref, of_ref, ob_ref, *, T, B, H):
    """Both GRU directions in one recurrence (PyTorch gate order r, z, n).

    gxf_ref: (T, B, 3H)  forward  x-gates (b_ih + b_hh[r,z] folded in)
    gxb_ref: (T, B, 3H)  backward x-gates (time index = original time)
    whh_ref: (2H, 6H)    block-diag [Whh_f^T, 0; 0, Whh_b^T]
    bhn_ref: (1, 6H)     zeros except the n-slices (= b_hn per direction)
    of/ob:   (T, B, H)   per-direction outputs, already in original time order
    """
    whh = whh_ref[...]
    bhn = bhn_ref[...]

    def step(t, h):                                   # h: (B, 2H) = [h_fwd | h_bwd]
        tb = T - 1 - t
        gxf = gxf_ref[t]                              # (B, 3H)
        gxb = gxb_ref[tb]                             # (B, 3H)
        gh = jnp.dot(h, whh, preferred_element_type=jnp.float32) + bhn   # (B, 6H)

        def one_dir(gx, gh_d, h_d):
            r = jax.nn.sigmoid(gx[:, 0:H] + gh_d[:, 0:H])
            z = jax.nn.sigmoid(gx[:, H:2 * H] + gh_d[:, H:2 * H])
            n = jnp.tanh(gx[:, 2 * H:3 * H] + r * gh_d[:, 2 * H:3 * H])
            return (1.0 - z) * n + z * h_d

        hf = one_dir(gxf, gh[:, :3 * H], h[:, :H])
        hb = one_dir(gxb, gh[:, 3 * H:], h[:, H:])
        of_ref[t] = hf
        ob_ref[tb] = hb                               # un-reverse backward output here
        return jnp.concatenate([hf, hb], axis=-1)

    jax.lax.fori_loop(0, T, step, jnp.zeros((B, 2 * H), jnp.float32), unroll=True)


def _linear_kernel(x_ref, w_ref, b_ref, o_ref):
    o_ref[...] = jnp.dot(x_ref[...], w_ref[...],
                         preferred_element_type=jnp.float32) + b_ref[...]


# ----------------------------------------------------------------------------
# Wrappers (pallas_call plumbing)
# ----------------------------------------------------------------------------
def prenet(x2d, w1, b1, w2, b2):
    M, E = x2d.shape
    return pl.pallas_call(
        _prenet_kernel,
        out_shape=jax.ShapeDtypeStruct((M, E), jnp.float32),
        grid=(1,),
        in_specs=[
            pl.BlockSpec((M, E), lambda i: (0, 0)),
            pl.BlockSpec((E, E), lambda i: (0, 0)),
            pl.BlockSpec((1, E), lambda i: (0, 0)),
            pl.BlockSpec((E, E), lambda i: (0, 0)),
            pl.BlockSpec((1, E), lambda i: (0, 0)),
        ],
        out_specs=pl.BlockSpec((M, E), lambda i: (0, 0)),
    )(x2d, w1, b1, w2, b2)


def cbhg_conv(xpad, p, *, B, T, C, K, P):
    KC = K * C
    Tp = T + 2 * P
    return pl.pallas_call(
        functools.partial(_cbhg_conv_kernel, K=K, T=T, P=P, C=C),
        out_shape=jax.ShapeDtypeStruct((B, T, C), jnp.float32),
        grid=(B,),
        in_specs=[
            pl.BlockSpec((1, Tp, C), lambda b: (b, 0, 0)),
            pl.BlockSpec((KC, KC), lambda b: (0, 0)),
            pl.BlockSpec((1, KC), lambda b: (0, 0)),
            pl.BlockSpec((1, KC), lambda b: (0, 0)),
            pl.BlockSpec((3 * KC, C), lambda b: (0, 0)),
            pl.BlockSpec((1, C), lambda b: (0, 0)),
            pl.BlockSpec((1, C), lambda b: (0, 0)),
            pl.BlockSpec((3 * C, C), lambda b: (0, 0)),
            pl.BlockSpec((1, C), lambda b: (0, 0)),
        ],
        out_specs=pl.BlockSpec((1, T, C), lambda b: (b, 0, 0)),
        scratch_shapes=[
            pltpu.VMEM((T + 2, KC), jnp.float32),
            pltpu.VMEM((T + 2, C), jnp.float32),
        ],
        compiler_params=pltpu.CompilerParams(
            dimension_semantics=("parallel",)),        # shards across TCs on v7x
    )(xpad, p["bank_w"], p["bank_scale"], p["bank_shift"],
      p["proj1_w"], p["proj1_scale"], p["proj1_shift"],
      p["proj2_w"], p["proj2_shift"])


def highway_gates(x2d, hw_w, hw_b, wih, bih):
    M, C = x2d.shape
    L = hw_w.shape[0]
    G = wih.shape[1]
    return pl.pallas_call(
        functools.partial(_highway_gates_kernel, L=L, C=C),
        out_shape=jax.ShapeDtypeStruct((M, G), jnp.float32),
        grid=(1,),
        in_specs=[
            pl.BlockSpec((M, C), lambda i: (0, 0)),
            pl.BlockSpec((L, C, 2 * C), lambda i: (0, 0, 0)),
            pl.BlockSpec((L, 1, 2 * C), lambda i: (0, 0, 0)),
            pl.BlockSpec((C, G), lambda i: (0, 0)),
            pl.BlockSpec((1, G), lambda i: (0, 0)),
        ],
        out_specs=pl.BlockSpec((M, G), lambda i: (0, 0)),
    )(x2d, hw_w, hw_b, wih, bih)


def bigru(gxf, gxb, whh, bhn, *, T, B, H):
    return pl.pallas_call(
        functools.partial(_bigru_kernel, T=T, B=B, H=H),
        out_shape=(jax.ShapeDtypeStruct((T, B, H), jnp.float32),
                   jax.ShapeDtypeStruct((T, B, H), jnp.float32)),
        grid=(1,),
        in_specs=[
            pl.BlockSpec((T, B, 3 * H), lambda i: (0, 0, 0)),
            pl.BlockSpec((T, B, 3 * H), lambda i: (0, 0, 0)),
            pl.BlockSpec((2 * H, 6 * H), lambda i: (0, 0)),
            pl.BlockSpec((1, 6 * H), lambda i: (0, 0)),
        ],
        out_specs=(pl.BlockSpec((T, B, H), lambda i: (0, 0, 0)),
                   pl.BlockSpec((T, B, H), lambda i: (0, 0, 0))),
    )(gxf, gxb, whh, bhn)


def linear(x2d, w, b):
    M, Kd = x2d.shape
    N = w.shape[1]
    return pl.pallas_call(
        _linear_kernel,
        out_shape=jax.ShapeDtypeStruct((M, N), jnp.float32),
        grid=(1,),
        in_specs=[
            pl.BlockSpec((M, Kd), lambda i: (0, 0)),
            pl.BlockSpec((Kd, N), lambda i: (0, 0)),
            pl.BlockSpec((1, N), lambda i: (0, 0)),
        ],
        out_specs=pl.BlockSpec((M, N), lambda i: (0, 0)),
    )(x2d, w, b)


# ----------------------------------------------------------------------------
# Deterministic parameter initialization (shapes from the PyTorch __init__),
# with weights pre-packed for the fused kernels.
# ----------------------------------------------------------------------------
def _rand(key, shape, scale=0.1):
    return scale * jax.random.normal(key, shape, dtype=jnp.float32)


def _bn_fold(key, C, eps=1e-5):
    k1, k2, k3, k4 = jax.random.split(key, 4)
    gamma = 1.0 + _rand(k1, (C,))
    beta = _rand(k2, (C,))
    mean = _rand(k3, (C,))
    var = 1.0 + jnp.abs(_rand(k4, (C,)))
    scale = gamma / jnp.sqrt(var + eps)
    shift = beta - mean * scale
    return scale[None, :], shift[None, :]


def init_params(key, *, num_chars, E, C, K, num_highways):
    keys = iter(jax.random.split(key, 64))
    P = K // 2
    p = {}
    p["embed"] = _rand(next(keys), (num_chars, E), 0.3)

    # PreNet(embed_dims, embed_dims, embed_dims)
    p["fc1_w"] = _rand(next(keys), (E, E)); p["fc1_b"] = _rand(next(keys), (1, E))
    p["fc2_w"] = _rand(next(keys), (E, E)); p["fc2_b"] = _rand(next(keys), (1, E))

    # CBHG conv bank: kernel sizes 1..K, block-packed into one (K*C, K*C) weight.
    # Bank k (tap count k, pad k//2) is placed at tap offset P - k//2 so every
    # bank shares the same K-tap window over the once-padded (pad=P) input.
    wbank = jnp.zeros((K, C, K * C), jnp.float32)     # (tap, Cin, K*Cout)
    sb, hb = [], []
    for ki, k in enumerate(range(1, K + 1)):
        wk = _rand(next(keys), (k, C, C))
        off = P - k // 2
        wbank = wbank.at[off:off + k, :, ki * C:(ki + 1) * C].set(wk)
        s, h = _bn_fold(next(keys), C)
        sb.append(s); hb.append(h)
    p["bank_w"] = wbank.reshape(K * C, K * C)
    p["bank_scale"] = jnp.concatenate(sb, axis=-1)    # (1, K*C)
    p["bank_shift"] = jnp.concatenate(hb, axis=-1)

    # conv_project1: Conv1d(K*C, C, 3) + BN (relu=True -> keep scale separate)
    w1 = _rand(next(keys), (3, K * C, C)); s1, h1 = _bn_fold(next(keys), C)
    p["proj1_w"] = w1.reshape(3 * K * C, C)
    p["proj1_scale"], p["proj1_shift"] = s1, h1

    # conv_project2: Conv1d(C, C, 3) + BN, relu=False -> fold BN scale into weights
    w2 = _rand(next(keys), (3, C, C)); s2, h2 = _bn_fold(next(keys), C)
    p["proj2_w"] = (w2 * s2[None]).reshape(3 * C, C)
    p["proj2_shift"] = h2

    # Highways: per layer [W1 | W2] as one (C, 2C) weight; W1.bias zero-filled.
    L = num_highways
    hw_w, hw_b = [], []
    for _ in range(L):
        hw_w.append(jnp.concatenate([_rand(next(keys), (C, C)),
                                     _rand(next(keys), (C, C))], axis=-1))
        hw_b.append(jnp.concatenate([jnp.zeros((1, C), jnp.float32),
                                     _rand(next(keys), (1, C))], axis=-1))
    p["hw_w"] = jnp.stack(hw_w)                       # (L, C, 2C)
    p["hw_b"] = jnp.stack(hw_b)                       # (L, 1, 2C)

    # Bidirectional GRU(C, C): pack both directions.
    H = C

    def gru_dir():
        return (_rand(next(keys), (C, 3 * H)),        # W_ih^T
                _rand(next(keys), (1, 3 * H)),        # b_ih
                _rand(next(keys), (H, 3 * H)),        # W_hh^T
                _rand(next(keys), (1, 3 * H)))        # b_hh

    wif, bif, whf, bhf = gru_dir()
    wib, bib, whb, bhb = gru_dir()
    p["gru_wih"] = jnp.concatenate([wif, wib], axis=-1)               # (C, 6H)

    def fold_bias(bi, bh):   # fold b_hh r/z slices into the precomputed gates
        return bi + jnp.concatenate([bh[:, :2 * H],
                                     jnp.zeros((1, H), jnp.float32)], axis=-1)

    p["gru_bih"] = jnp.concatenate([fold_bias(bif, bhf),
                                    fold_bias(bib, bhb)], axis=-1)    # (1, 6H)
    whh_big = jnp.zeros((2 * H, 6 * H), jnp.float32)
    whh_big = whh_big.at[:H, :3 * H].set(whf)
    whh_big = whh_big.at[H:, 3 * H:].set(whb)
    p["gru_whh"] = whh_big                                            # (2H, 6H)
    zH = jnp.zeros((1, H), jnp.float32)
    p["gru_bhn"] = jnp.concatenate(
        [zH, zH, bhf[:, 2 * H:], zH, zH, bhb[:, 2 * H:]], axis=-1)    # (1, 6H)

    # proj_out: Linear(2C, C)
    p["proj_out_w"] = _rand(next(keys), (2 * C, C))
    p["proj_out_b"] = _rand(next(keys), (1, C))
    return p


# ----------------------------------------------------------------------------
# Forward pass
# ----------------------------------------------------------------------------
def tacotron_encoder(params, token_ids):
    B, T = token_ids.shape
    C = params["fc1_w"].shape[0]          # embed_dims == cbhg_channels
    H = C
    K = params["bank_w"].shape[0] // C
    P = K // 2

    # Embedding lookup (gather; wrapper glue)
    x = jnp.take(params["embed"], token_ids, axis=0)                  # (B, T, C)

    # PreNet (dropout == identity in eval mode), fused fc1/fc2
    x = prenet(x.reshape(B * T, C), params["fc1_w"], params["fc1_b"],
               params["fc2_w"], params["fc2_b"]).reshape(B, T, C)

    # CBHG conv stack (bank -> maxpool -> proj1 -> proj2 + residual), one kernel
    xpad = jnp.pad(x, ((0, 0), (P, P), (0, 0)))                       # (B, T+2P, C)
    x = cbhg_conv(xpad, params, B=B, T=T, C=C, K=K, P=P)              # (B, T, C)

    # highway_mismatch is False (proj_channels[-1] == channels) -> no pre_highway.
    # Highway stack + GRU x-gate matmul fused into one kernel.
    gx = highway_gates(x.reshape(B * T, C), params["hw_w"], params["hw_b"],
                       params["gru_wih"], params["gru_bih"])          # (B*T, 6H)
    gx = jnp.transpose(gx.reshape(B, T, 6 * H), (1, 0, 2))            # (T, B, 6H)
    gxf, gxb = gx[:, :, :3 * H], gx[:, :, 3 * H:]

    # Bidirectional GRU recurrence (both directions in one kernel)
    of, ob = bigru(gxf, gxb, params["gru_whh"], params["gru_bhn"], T=T, B=B, H=H)
    x = jnp.concatenate([jnp.transpose(of, (1, 0, 2)),
                         jnp.transpose(ob, (1, 0, 2))], axis=-1)      # (B, T, 2H)

    # proj_out: Linear(2C -> C)
    y = linear(x.reshape(B * T, 2 * H), params["proj_out_w"], params["proj_out_b"])
    return y.reshape(B, T, C)


# ----------------------------------------------------------------------------
if __name__ == "__main__":
    key = jax.random.PRNGKey(0)
    kp, kd = jax.random.split(key)

    B, T = 2, 8
    num_chars, embed_dims, cbhg_channels, K, num_highways = 30, 32, 32, 4, 2

    params = init_params(
        kp, num_chars=num_chars, E=embed_dims, C=cbhg_channels,
        K=K, num_highways=num_highways,
    )
    tokens = jax.random.randint(kd, (B, T), 0, num_chars)

    fwd = jax.jit(tacotron_encoder)
    out = fwd(params, tokens)
    jax.block_until_ready(out)
    assert out.shape == (B, T, cbhg_channels), out.shape
    assert bool(jnp.all(jnp.isfinite(out)))
    print("KERNEL_OK")
</pallas_src>

<mosaic_0001>
module attributes {stable_mosaic.version = 11 : i64} {
  func.func @_prenet_kernel(%arg0: i32, %arg1: memref<16x32xf32, #tpu.memory_space<vmem>>, %arg2: memref<32x32xf32, #tpu.memory_space<vmem>>, %arg3: memref<1x32xf32, #tpu.memory_space<vmem>>, %arg4: memref<32x32xf32, #tpu.memory_space<vmem>>, %arg5: memref<1x32xf32, #tpu.memory_space<vmem>>, %arg6: memref<16x32xf32, #tpu.memory_space<vmem>>) attributes {dimension_semantics = [#tpu.dimension_semantics<arbitrary>], iteration_bounds = array<i64: 1>, scalar_prefetch = 0 : i64, scratch_operands = 0 : i64, tpu.core_type = #tpu.core_type<tc>, window_params = [{pipeline_mode = #tpu.pipeline_mode<synchronous>, transform_indices = @transform_0, window_bounds = array<i64: 16, 32>}, {pipeline_mode = #tpu.pipeline_mode<synchronous>, transform_indices = @transform_1, window_bounds = array<i64: 32, 32>}, {pipeline_mode = #tpu.pipeline_mode<synchronous>, transform_indices = @transform_2, window_bounds = array<i64: 1, 32>}, {pipeline_mode = #tpu.pipeline_mode<synchronous>, transform_indices = @transform_3, window_bounds = array<i64: 32, 32>}, {pipeline_mode = #tpu.pipeline_mode<synchronous>, transform_indices = @transform_4, window_bounds = array<i64: 1, 32>}, {pipeline_mode = #tpu.pipeline_mode<synchronous>, transform_indices = @transform_5, window_bounds = array<i64: 16, 32>}]} {
    %c0 = arith.constant 0 : index
    %c0_0 = arith.constant 0 : index
    %0 = vector.load %arg1[%c0, %c0_0] : memref<16x32xf32, #tpu.memory_space<vmem>>, vector<16x32xf32>
    %c0_1 = arith.constant 0 : index
    %c0_2 = arith.constant 0 : index
    %1 = vector.load %arg2[%c0_1, %c0_2] : memref<32x32xf32, #tpu.memory_space<vmem>>, vector<32x32xf32>
    %cst = arith.constant dense<0.000000e+00> : vector<16x32xf32>
    %2 = tpu.matmul %0, %1, %cst {dimension_numbers = #tpu.dot_dimension_numbers<[1], [0], [0], [1], [0, 0, 1, 1], [], []>} : vector<16x32xf32>, vector<32x32xf32>, vector<16x32xf32> -> vector<16x32xf32>
    %c0_3 = arith.constant 0 : index
    %c0_4 = arith.constant 0 : index
    %3 = vector.load %arg3[%c0_3, %c0_4] : memref<1x32xf32, #tpu.memory_space<vmem>>, vector<1x32xf32>
    %4 = vector.broadcast %3 : vector<1x32xf32> to vector<16x32xf32>
    %5 = arith.addf %2, %4 : vector<16x32xf32>
    %cst_5 = arith.constant 0.000000e+00 : f32
    %6 = vector.broadcast %cst_5 : f32 to vector<16x32xf32>
    %7 = arith.maximumf %5, %6 : vector<16x32xf32>
    %c0_6 = arith.constant 0 : index
    %c0_7 = arith.constant 0 : index
    %8 = vector.load %arg4[%c0_6, %c0_7] : memref<32x32xf32, #tpu.memory_space<vmem>>, vector<32x32xf32>
    %cst_8 = arith.constant dense<0.000000e+00> : vector<16x32xf32>
    %9 = tpu.matmul %7, %8, %cst_8 {dimension_numbers = #tpu.dot_dimension_numbers<[1], [0], [0], [1], [0, 0, 1, 1], [], []>} : vector<16x32xf32>, vector<32x32xf32>, vector<16x32xf32> -> vector<16x32xf32>
    %c0_9 = arith.constant 0 : index
    %c0_10 = arith.constant 0 : index
    %10 = vector.load %arg5[%c0_9, %c0_10] : memref<1x32xf32, #tpu.memory_space<vmem>>, vector<1x32xf32>
    %11 = vector.broadcast %10 : vector<1x32xf32> to vector<16x32xf32>
    %12 = arith.addf %9, %11 : vector<16x32xf32>
    %cst_11 = arith.constant 0.000000e+00 : f32
    %13 = vector.broadcast %cst_11 : f32 to vector<16x32xf32>
    %14 = arith.maximumf %12, %13 : vector<16x32xf32>
    %c0_12 = arith.constant 0 : index
    %c0_13 = arith.constant 0 : index
    %15 = vector.load %arg6[%c0_12, %c0_13] : memref<16x32xf32, #tpu.memory_space<vmem>>, vector<16x32xf32>
    tpu.vector_store %arg6[%c0_12, %c0_13], %14 {strides = array<i32>} : memref<16x32xf32, #tpu.memory_space<vmem>>, vector<16x32xf32>,
    return
  }
  func.func @transform_0(%arg0: i32) -> (i32, i32) {
    %c0_i32 = arith.constant 0 : i32
    %c0_i32_0 = arith.constant 0 : i32
    %c0_i32_1 = arith.constant 0 : i32
    return %c0_i32, %c0_i32_0 : i32, i32
  }
  func.func @transform_1(%arg0: i32) -> (i32, i32) {
    %c0_i32 = arith.constant 0 : i32
    %c0_i32_0 = arith.constant 0 : i32
    %c0_i32_1 = arith.constant 0 : i32
    return %c0_i32, %c0_i32_0 : i32, i32
  }
  func.func @transform_2(%arg0: i32) -> (i32, i32) {
    %c0_i32 = arith.constant 0 : i32
    %c0_i32_0 = arith.constant 0 : i32
    %c0_i32_1 = arith.constant 0 : i32
    return %c0_i32, %c0_i32_0 : i32, i32
  }
  func.func @transform_3(%arg0: i32) -> (i32, i32) {
    %c0_i32 = arith.constant 0 : i32
    %c0_i32_0 = arith.constant 0 : i32
    %c0_i32_1 = arith.constant 0 : i32
    return %c0_i32, %c0_i32_0 : i32, i32
  }
  func.func @transform_4(%arg0: i32) -> (i32, i32) {
    %c0_i32 = arith.constant 0 : i32
    %c0_i32_0 = arith.constant 0 : i32
    %c0_i32_1 = arith.constant 0 : i32
    return %c0_i32, %c0_i32_0 : i32, i32
  }
  func.func @transform_5(%arg0: i32) -> (i32, i32) {
    %c0_i32 = arith.constant 0 : i32
    %c0_i32_0 = arith.constant 0 : i32
    %c0_i32_1 = arith.constant 0 : i32
    return %c0_i32, %c0_i32_0 : i32, i32
  }
}

module attributes {stable_mosaic.version = 11 : i64} {
  func.func @_cbhg_conv_kernel(%arg0: i32, %arg1: memref<1x12x32xf32, #tpu.memory_space<vmem>>, %arg2: memref<128x128xf32, #tpu.memory_space<vmem>>, %arg3: memref<1x128xf32, #tpu.memory_space<vmem>>, %arg4: memref<1x128xf32, #tpu.memory_space<vmem>>, %arg5: memref<384x32xf32, #tpu.memory_space<vmem>>, %arg6: memref<1x32xf32, #tpu.memory_space<vmem>>, %arg7: memref<1x32xf32, #tpu.memory_space<vmem>>, %arg8: memref<96x32xf32, #tpu.memory_space<vmem>>, %arg9: memref<1x32xf32, #tpu.memory_space<vmem>>, %arg10: memref<1x8x32xf32, #tpu.memory_space<vmem>>, %arg11: memref<10x128xf32, #tpu.memory_space<vmem>>, %arg12: memref<10x32xf32, #tpu.memory_space<vmem>>) attributes {dimension_semantics = [#tpu.dimension_semantics<parallel>], iteration_bounds = array<i64: 2>, scalar_prefetch = 0 : i64, scratch_operands = 2 : i64, tpu.core_type = #tpu.core_type<tc>, window_params = [{transform_indices = @transform_0, window_bounds = array<i64: 1, 12, 32>}, {pipeline_mode = #tpu.pipeline_mode<synchronous>, transform_indices = @transform_1, window_bounds = array<i64: 128, 128>}, {pipeline_mode = #tpu.pipeline_mode<synchronous>, transform_indices = @transform_2, window_bounds = array<i64: 1, 128>}, {pipeline_mode = #tpu.pipeline_mode<synchronous>, transform_indices = @transform_3, window_bounds = array<i64: 1, 128>}, {pipeline_mode = #tpu.pipeline_mode<synchronous>, transform_indices = @transform_4, window_bounds = array<i64: 384, 32>}, {pipeline_mode = #tpu.pipeline_mode<synchronous>, transform_indices = @transform_5, window_bounds = array<i64: 1, 32>}, {pipeline_mode = #tpu.pipeline_mode<synchronous>, transform_indices = @transform_6, window_bounds = array<i64: 1, 32>}, {pipeline_mode = #tpu.pipeline_mode<synchronous>, transform_indices = @transform_7, window_bounds = array<i64: 96, 32>}, {pipeline_mode = #tpu.pipeline_mode<synchronous>, transform_indices = @transform_8, window_bounds = array<i64: 1, 32>}, {transform_indices = @transform_9, window_bounds = array<i64: 1, 8, 32>}]} {
    %c0 = arith.constant 0 : index
    %c0_0 = arith.constant 0 : index
    %c0_1 = arith.constant 0 : index
    %0 = vector.load %arg1[%c0, %c0_0, %c0_1] : memref<1x12x32xf32, #tpu.memory_space<vmem>>, vector<1x8x32xf32>
    %1 = vector.shape_cast %0 : vector<1x8x32xf32> to vector<8x32xf32>
    %c0_2 = arith.constant 0 : index
    %c1 = arith.constant 1 : index
    %c0_3 = arith.constant 0 : index
    %2 = vector.load %arg1[%c0_2, %c1, %c0_3] : memref<1x12x32xf32, #tpu.memory_space<vmem>>, vector<1x8x32xf32>
    %3 = vector.shape_cast %2 : vector<1x8x32xf32> to vector<8x32xf32>
    %c0_4 = arith.constant 0 : index
    %c2 = arith.constant 2 : index
    %c0_5 = arith.constant 0 : index
    %4 = vector.load %arg1[%c0_4, %c2, %c0_5] : memref<1x12x32xf32, #tpu.memory_space<vmem>>, vector<1x8x32xf32>
    %5 = vector.shape_cast %4 : vector<1x8x32xf32> to vector<8x32xf32>
    %c0_6 = arith.constant 0 : index
    %c3 = arith.constant 3 : index
    %c0_7 = arith.constant 0 : index
    %6 = vector.load %arg1[%c0_6, %c3, %c0_7] : memref<1x12x32xf32, #tpu.memory_space<vmem>>, vector<1x8x32xf32>
    %7 = vector.shape_cast %6 : vector<1x8x32xf32> to vector<8x32xf32>
    %8 = tpu.concatenate %1, %3, %5, %7 in 1 : vector<8x32xf32>, vector<8x32xf32>, vector<8x32xf32>, vector<8x32xf32> -> vector<8x128xf32>
    %c0_8 = arith.constant 0 : index
    %c0_9 = arith.constant 0 : index
    %9 = vector.load %arg2[%c0_8, %c0_9] : memref<128x128xf32, #tpu.memory_space<vmem>>, vector<128x128xf32>
    %cst = arith.constant dense<0.000000e+00> : vector<8x128xf32>
    %10 = tpu.matmul %8, %9, %cst {dimension_numbers = #tpu.dot_dimension_numbers<[1], [0], [0], [1], [0, 0, 1, 1], [], []>} : vector<8x128xf32>, vector<128x128xf32>, vector<8x128xf32> -> vector<8x128xf32>
    %cst_10 = arith.constant 0.000000e+00 : f32
    %11 = vector.broadcast %cst_10 : f32 to vector<8x128xf32>
    %12 = arith.maximumf %10, %11 : vector<8x128xf32>
    %c0_11 = arith.constant 0 : index
    %c0_12 = arith.constant 0 : index
    %13 = vector.load %arg3[%c0_11, %c0_12] : memref<1x128xf32, #tpu.memory_space<vmem>>, vector<1x128xf32>
    %14 = vector.broadcast %13 : vector<1x128xf32> to vector<8x128xf32>
    %15 = arith.mulf %12, %14 : vector<8x128xf32>
    %c0_13 = arith.constant 0 : index
    %c0_14 = arith.constant 0 : index
    %16 = vector.load %arg4[%c0_13, %c0_14] : memref<1x128xf32, #tpu.memory_space<vmem>>, vector<1x128xf32>
    %17 = vector.broadcast %16 : vector<1x128xf32> to vector<8x128xf32>
    %18 = arith.addf %15, %17 : vector<8x128xf32>
    %c1_15 = arith.constant 1 : index
    %c0_16 = arith.constant 0 : index
    %19 = vector.load %arg11[%c1_15, %c0_16] : memref<10x128xf32, #tpu.memory_space<vmem>>, vector<8x128xf32>
    tpu.vector_store %arg11[%c1_15, %c0_16], %18 {strides = array<i32>} : memref<10x128xf32, #tpu.memory_space<vmem>>, vector<8x128xf32>,
    %cst_17 = arith.constant 0xFF800000 : f32
    %20 = vector.broadcast %cst_17 : f32 to vector<1x128xf32>
    %c0_18 = arith.constant 0 : index
    %c0_19 = arith.constant 0 : index
    %21 = vector.load %arg11[%c0_18, %c0_19] : memref<10x128xf32, #tpu.memory_space<vmem>>, vector<1x128xf32>
    tpu.vector_store %arg11[%c0_18, %c0_19], %20 {strides = array<i32>} : memref<10x128xf32, #tpu.memory_space<vmem>>, vector<1x128xf32>,
    %cst_20 = arith.constant 0.000000e+00 : f32
    %22 = vector.broadcast %cst_20 : f32 to vector<1x128xf32>
    %c9 = arith.constant 9 : index
    %c0_21 = arith.constant 0 : index
    %23 = vector.load %arg11[%c9, %c0_21] : memref<10x128xf32, #tpu.memory_space<vmem>>, vector<1x128xf32>
    tpu.vector_store %arg11[%c9, %c0_21], %22 {strides = array<i32>} : memref<10x128xf32, #tpu.memory_space<vmem>>, vector<1x128xf32>,
    %c0_22 = arith.constant 0 : index
    %c0_23 = arith.constant 0 : index
    %24 = vector.load %arg11[%c0_22, %c0_23] : memref<10x128xf32, #tpu.memory_space<vmem>>, vector<8x128xf32>
    %25 = arith.maximumf %18, %24 : vector<8x128xf32>
    %c1_24 = arith.constant 1 : index
    %c0_25 = arith.constant 0 : index
    %26 = vector.load %arg11[%c1_24, %c0_25] : memref<10x128xf32, #tpu.memory_space<vmem>>, vector<8x128xf32>
    tpu.vector_store %arg11[%c1_24, %c0_25], %25 {strides = array<i32>} : memref<10x128xf32, #tpu.memory_space<vmem>>, vector<8x128xf32>,
    %cst_26 = arith.constant 0.000000e+00 : f32
    %27 = vector.broadcast %cst_26 : f32 to vector<1x128xf32>
    %c0_27 = arith.constant 0 : index
    %c0_28 = arith.constant 0 : index
    %28 = vector.load %arg11[%c0_27, %c0_28] : memref<10x128xf32, #tpu.memory_space<vmem>>, vector<1x128xf32>
    tpu.vector_store %arg11[%c0_27, %c0_28], %27 {strides = array<i32>} : memref<10x128xf32, #tpu.memory_space<vmem>>, vector<1x128xf32>,
    %c0_29 = arith.constant 0 : index
    %c0_30 = arith.constant 0 : index
    %29 = vector.load %arg11[%c0_29, %c0_30] : memref<10x128xf32, #tpu.memory_space<vmem>>, vector<8x128xf32>
    %c1_31 = arith.constant 1 : index
    %c0_32 = arith.constant 0 : index
    %30 = vector.load %arg11[%c1_31, %c0_32] : memref<10x128xf32, #tpu.memory_space<vmem>>, vector<8x128xf32>
    %c2_33 = arith.constant 2 : index
    %c0_34 = arith.constant 0 : index
    %31 = vector.load %arg11[%c2_33, %c0_34] : memref<10x128xf32, #tpu.memory_space<vmem>>, vector<8x128xf32>
    %32 = tpu.concatenate %29, %30, %31 in 1 : vector<8x128xf32>, vector<8x128xf32>, vector<8x128xf32> -> vector<8x384xf32>
    %c0_35 = arith.constant 0 : index
    %c0_36 = arith.constant 0 : index
    %33 = vector.load %arg5[%c0_35, %c0_36] : memref<384x32xf32, #tpu.memory_space<vmem>>, vector<384x32xf32>
    %cst_37 = arith.constant dense<0.000000e+00> : vector<8x32xf32>
    %34 = tpu.matmul %32, %33, %cst_37 {dimension_numbers = #tpu.dot_dimension_numbers<[1], [0], [0], [1], [0, 0, 1, 1], [], []>} : vector<8x384xf32>, vector<384x32xf32>, vector<8x32xf32> -> vector<8x32xf32>
    %cst_38 = arith.constant 0.000000e+00 : f32
    %35 = vector.broadcast %cst_38 : f32 to vector<8x32xf32>
    %36 = arith.maximumf %34, %35 : vector<8x32xf32>
    %c0_39 = arith.constant 0 : index
    %c0_40 = arith.constant 0 : index
    %37 = vector.load %arg6[%c0_39, %c0_40] : memref<1x32xf32, #tpu.memory_space<vmem>>, vector<1x32xf32>
    %38 = vector.broadcast %37 : vector<1x32xf32> to vector<8x32xf32>
    %39 = arith.mulf %36, %38 : vector<8x32xf32>
    %c0_41 = arith.constant 0 : index
    %c0_42 = arith.constant 0 : index
    %40 = vector.load %arg7[%c0_41, %c0_42] : memref<1x32xf32, #tpu.memory_space<vmem>>, vector<1x32xf32>
    %41 = vector.broadcast %40 : vector<1x32xf32> to vector<8x32xf32>
    %42 = arith.addf %39, %41 : vector<8x32xf32>
    %cst_43 = arith.constant 0.000000e+00 : f32
    %43 = vector.broadcast %cst_43 : f32 to vector<1x32xf32>
    %c0_44 = arith.constant 0 : index
    %c0_45 = arith.constant 0 : index
    %44 = vector.load %arg12[%c0_44, %c0_45] : memref<10x32xf32, #tpu.memory_space<vmem>>, vector<1x32xf32>
    tpu.vector_store %arg12[%c0_44, %c0_45], %43 {strides = array<i32>} : memref<10x32xf32, #tpu.memory_space<vmem>>, vector<1x32xf32>,
    %cst_46 = arith.constant 0.000000e+00 : f32
    %45 = vector.broadcast %cst_46 : f32 to vector<1x32xf32>
    %c9_47 = arith.constant 9 : index
    %c0_48 = arith.constant 0 : index
    %46 = vector.load %arg12[%c9_47, %c0_48] : memref<10x32xf32, #tpu.memory_space<vmem>>, vector<1x32xf32>
    tpu.vector_store %arg12[%c9_47, %c0_48], %45 {strides = array<i32>} : memref<10x32xf32, #tpu.memory_space<vmem>>, vector<1x32xf32>,
    %c1_49 = arith.constant 1 : index
    %c0_50 = arith.constant 0 : index
    %47 = vector.load %arg12[%c1_49, %c0_50] : memref<10x32xf32, #tpu.memory_space<vmem>>, vector<8x32xf32>
    tpu.vector_store %arg12[%c1_49, %c0_50], %42 {strides = array<i32>} : memref<10x32xf32, #tpu.memory_space<vmem>>, vector<8x32xf32>,
    %c0_51 = arith.constant 0 : index
    %c0_52 = arith.constant 0 : index
    %48 = vector.load %arg12[%c0_51, %c0_52] : memref<10x32xf32, #tpu.memory_space<vmem>>, vector<8x32xf32>
    %c1_53 = arith.constant 1 : index
    %c0_54 = arith.constant 0 : index
    %49 = vector.load %arg12[%c1_53, %c0_54] : memref<10x32xf32, #tpu.memory_space<vmem>>, vector<8x32xf32>
    %c2_55 = arith.constant 2 : index
    %c0_56 = arith.constant 0 : index
    %50 = vector.load %arg12[%c2_55, %c0_56] : memref<10x32xf32, #tpu.memory_space<vmem>>, vector<8x32xf32>
    %51 = tpu.concatenate %48, %49, %50 in 1 : vector<8x32xf32>, vector<8x32xf32>, vector<8x32xf32> -> vector<8x96xf32>
    %c0_57 = arith.constant 0 : index
    %c0_58 = arith.constant 0 : index
    %52 = vector.load %arg8[%c0_57, %c0_58] : memref<96x32xf32, #tpu.memory_space<vmem>>, vector<96x32xf32>
    %cst_59 = arith.constant dense<0.000000e+00> : vector<8x32xf32>
    %53 = tpu.matmul %51, %52, %cst_59 {dimension_numbers = #tpu.dot_dimension_numbers<[1], [0], [0], [1], [0, 0, 1, 1], [], []>} : vector<8x96xf32>, vector<96x32xf32>, vector<8x32xf32> -> vector<8x32xf32>
    %c0_60 = arith.constant 0 : index
    %c0_61 = arith.constant 0 : index
    %54 = vector.load %arg9[%c0_60, %c0_61] : memref<1x32xf32, #tpu.memory_space<vmem>>, vector<1x32xf32>
    %55 = vector.broadcast %54 : vector<1x32xf32> to vector<8x32xf32>
    %56 = arith.addf %53, %55 : vector<8x32xf32>
    %c0_62 = arith.constant 0 : index
    %c2_63 = arith.constant 2 : index
    %c0_64 = arith.constant 0 : index
    %57 = vector.load %arg1[%c0_62, %c2_63, %c0_64] : memref<1x12x32xf32, #tpu.memory_space<vmem>>, vector<1x8x32xf32>
    %58 = vector.shape_cast %57 : vector<1x8x32xf32> to vector<8x32xf32>
    %59 = arith.addf %56, %58 : vector<8x32xf32>
    %c0_65 = arith.constant 0 : index
    %c0_66 = arith.constant 0 : index
    %c0_67 = arith.constant 0 : index
    %60 = vector.load %arg10[%c0_65, %c0_66, %c0_67] : memref<1x8x32xf32, #tpu.memory_space<vmem>>, vector<1x8x32xf32>
    %61 = vector.shape_cast %60 : vector<1x8x32xf32> to vector<8x32xf32>
    %62 = vector.shape_cast %59 : vector<8x32xf32> to vector<1x8x32xf32>
    tpu.vector_store %arg10[%c0_65, %c0_66, %c0_67], %62 {strides = array<i32>} : memref<1x8x32xf32, #tpu.memory_space<vmem>>, vector<1x8x32xf32>,
    return
  }
  func.func @transform_0(%arg0: i32) -> (i32, i32, i32) {
    %c0_i32 = arith.constant 0 : i32
    %c0_i32_0 = arith.constant 0 : i32
    %c0_i32_1 = arith.constant 0 : i32
    return %arg0, %c0_i32, %c0_i32_0 : i32, i32, i32
  }
  func.func @transform_1(%arg0: i32) -> (i32, i32) {
    %c0_i32 = arith.constant 0 : i32
    %c0_i32_0 = arith.constant 0 : i32
    %c0_i32_1 = arith.constant 0 : i32
    return %c0_i32, %c0_i32_0 : i32, i32
  }
  func.func @transform_2(%arg0: i32) -> (i32, i32) {
    %c0_i32 = arith.constant 0 : i32
    %c0_i32_0 = arith.constant 0 : i32
    %c0_i32_1 = arith.constant 0 : i32
    return %c0_i32, %c0_i32_0 : i32, i32
  }
  func.func @transform_3(%arg0: i32) -> (i32, i32) {
    %c0_i32 = arith.constant 0 : i32
    %c0_i32_0 = arith.constant 0 : i32
    %c0_i32_1 = arith.constant 0 : i32
    return %c0_i32, %c0_i32_0 : i32, i32
  }
  func.func @transform_4(%arg0: i32) -> (i32, i32) {
    %c0_i32 = arith.constant 0 : i32
    %c0_i32_0 = arith.constant 0 : i32
    %c0_i32_1 = arith.constant 0 : i32
    return %c0_i32, %c0_i32_0 : i32, i32
  }
  func.func @transform_5(%arg0: i32) -> (i32, i32) {
    %c0_i32 = arith.constant 0 : i32
    %c0_i32_0 = arith.constant 0 : i32
    %c0_i32_1 = arith.constant 0 : i32
    return %c0_i32, %c0_i32_0 : i32, i32
  }
  func.func @transform_6(%arg0: i32) -> (i32, i32) {
    %c0_i32 = arith.constant 0 : i32
    %c0_i32_0 = arith.constant 0 : i32
    %c0_i32_1 = arith.constant 0 : i32
    return %c0_i32, %c0_i32_0 : i32, i32
  }
  func.func @transform_7(%arg0: i32) -> (i32, i32) {
    %c0_i32 = arith.constant 0 : i32
    %c0_i32_0 = arith.constant 0 : i32
    %c0_i32_1 = arith.constant 0 : i32
    return %c0_i32, %c0_i32_0 : i32, i32
  }
  func.func @transform_8(%arg0: i32) -> (i32, i32) {
    %c0_i32 = arith.constant 0 : i32
    %c0_i32_0 = arith.constant 0 : i32
    %c0_i32_1 = arith.constant 0 : i32
    return %c0_i32, %c0_i32_0 : i32, i32
  }
  func.func @transform_9(%arg0: i32) -> (i32, i32, i32) {
    %c0_i32 = arith.constant 0 : i32
    %c0_i32_0 = arith.constant 0 : i32
    %c0_i32_1 = arith.constant 0 : i32
    return %arg0, %c0_i32, %c0_i32_0 : i32, i32, i32
  }
}

module attributes {stable_mosaic.version = 11 : i64} {
  func.func @_highway_gates_kernel(%arg0: i32, %arg1: memref<16x32xf32, #tpu.memory_space<vmem>>, %arg2: memref<2x32x64xf32, #tpu.memory_space<vmem>>, %arg3: memref<2x1x64xf32, #tpu.memory_space<vmem>>, %arg4: memref<32x192xf32, #tpu.memory_space<vmem>>, %arg5: memref<1x192xf32, #tpu.memory_space<vmem>>, %arg6: memref<16x192xf32, #tpu.memory_space<vmem>>) attributes {dimension_semantics = [#tpu.dimension_semantics<arbitrary>], iteration_bounds = array<i64: 1>, scalar_prefetch = 0 : i64, scratch_operands = 0 : i64, tpu.core_type = #tpu.core_type<tc>, window_params = [{pipeline_mode = #tpu.pipeline_mode<synchronous>, transform_indices = @transform_0, window_bounds = array<i64: 16, 32>}, {pipeline_mode = #tpu.pipeline_mode<synchronous>, transform_indices = @transform_1, window_bounds = array<i64: 2, 32, 64>}, {pipeline_mode = #tpu.pipeline_mode<synchronous>, transform_indices = @transform_2, window_bounds = array<i64: 2, 1, 64>}, {pipeline_mode = #tpu.pipeline_mode<synchronous>, transform_indices = @transform_3, window_bounds = array<i64: 32, 192>}, {pipeline_mode = #tpu.pipeline_mode<synchronous>, transform_indices = @transform_4, window_bounds = array<i64: 1, 192>}, {pipeline_mode = #tpu.pipeline_mode<synchronous>, transform_indices = @transform_5, window_bounds = array<i64: 16, 192>}]} {
    %c0 = arith.constant 0 : index
    %c0_0 = arith.constant 0 : index
    %0 = vector.load %arg1[%c0, %c0_0] : memref<16x32xf32, #tpu.memory_space<vmem>>, vector<16x32xf32>
    %c0_1 = arith.constant 0 : index
    %c0_2 = arith.constant 0 : index
    %c0_3 = arith.constant 0 : index
    %1 = vector.load %arg2[%c0_1, %c0_2, %c0_3] : memref<2x32x64xf32, #tpu.memory_space<vmem>>, vector<1x32x64xf32>
    %2 = vector.shape_cast %1 : vector<1x32x64xf32> to vector<32x64xf32>
    %cst = arith.constant dense<0.000000e+00> : vector<16x64xf32>
    %3 = tpu.matmul %0, %2, %cst {dimension_numbers = #tpu.dot_dimension_numbers<[1], [0], [0], [1], [0, 0, 1, 1], [], []>} : vector<16x32xf32>, vector<32x64xf32>, vector<16x64xf32> -> vector<16x64xf32>
    %c0_4 = arith.constant 0 : index
    %c0_5 = arith.constant 0 : index
    %c0_6 = arith.constant 0 : index
    %4 = vector.load %arg3[%c0_4, %c0_5, %c0_6] : memref<2x1x64xf32, #tpu.memory_space<vmem>>, vector<1x1x64xf32>
    %5 = vector.shape_cast %4 : vector<1x1x64xf32> to vector<1x64xf32>
    %6 = vector.broadcast %5 : vector<1x64xf32> to vector<16x64xf32>
    %7 = arith.addf %3, %6 : vector<16x64xf32>
    %8 = vector.extract_strided_slice %7 {offsets = [0, 32], sizes = [16, 32], strides = [1, 1]} : vector<16x64xf32> to vector<16x32xf32>
    %9 = arith.negf %8 : vector<16x32xf32>
    %10 = math.exp %9 : vector<16x32xf32>
    %cst_7 = arith.constant 1.000000e+00 : f32
    %11 = vector.broadcast %cst_7 : f32 to vector<16x32xf32>
    %12 = arith.addf %11, %10 : vector<16x32xf32>
    %13 = arith.divf %11, %12 : vector<16x32xf32>
    %14 = vector.extract_strided_slice %7 {offsets = [0, 0], sizes = [16, 32], strides = [1, 1]} : vector<16x64xf32> to vector<16x32xf32>
    %cst_8 = arith.constant 0.000000e+00 : f32
    %15 = vector.broadcast %cst_8 : f32 to vector<16x32xf32>
    %16 = arith.maximumf %14, %15 : vector<16x32xf32>
    %17 = arith.mulf %13, %16 : vector<16x32xf32>
    %cst_9 = arith.constant 1.000000e+00 : f32
    %18 = vector.broadcast %cst_9 : f32 to vector<16x32xf32>
    %19 = arith.subf %18, %13 : vector<16x32xf32>
    %20 = arith.mulf %19, %0 : vector<16x32xf32>
    %21 = arith.addf %17, %20 : vector<16x32xf32>
    %c1 = arith.constant 1 : index
    %c0_10 = arith.constant 0 : index
    %c0_11 = arith.constant 0 : index
    %22 = vector.load %arg2[%c1, %c0_10, %c0_11] : memref<2x32x64xf32, #tpu.memory_space<vmem>>, vector<1x32x64xf32>
    %23 = vector.shape_cast %22 : vector<1x32x64xf32> to vector<32x64xf32>
    %cst_12 = arith.constant dense<0.000000e+00> : vector<16x64xf32>
    %24 = tpu.matmul %21, %23, %cst_12 {dimension_numbers = #tpu.dot_dimension_numbers<[1], [0], [0], [1], [0, 0, 1, 1], [], []>} : vector<16x32xf32>, vector<32x64xf32>, vector<16x64xf32> -> vector<16x64xf32>
    %c1_13 = arith.constant 1 : index
    %c0_14 = arith.constant 0 : index
    %c0_15 = arith.constant 0 : index
    %25 = vector.load %arg3[%c1_13, %c0_14, %c0_15] : memref<2x1x64xf32, #tpu.memory_space<vmem>>, vector<1x1x64xf32>
    %26 = vector.shape_cast %25 : vector<1x1x64xf32> to vector<1x64xf32>
    %27 = vector.broadcast %26 : vector<1x64xf32> to vector<16x64xf32>
    %28 = arith.addf %24, %27 : vector<16x64xf32>
    %29 = vector.extract_strided_slice %28 {offsets = [0, 32], sizes = [16, 32], strides = [1, 1]} : vector<16x64xf32> to vector<16x32xf32>
    %30 = arith.negf %29 : vector<16x32xf32>
    %31 = math.exp %30 : vector<16x32xf32>
    %cst_16 = arith.constant 1.000000e+00 : f32
    %32 = vector.broadcast %cst_16 : f32 to vector<16x32xf32>
    %33 = arith.addf %32, %31 : vector<16x32xf32>
    %34 = arith.divf %32, %33 : vector<16x32xf32>
    %35 = vector.extract_strided_slice %28 {offsets = [0, 0], sizes = [16, 32], strides = [1, 1]} : vector<16x64xf32> to vector<16x32xf32>
    %cst_17 = arith.constant 0.000000e+00 : f32
    %36 = vector.broadcast %cst_17 : f32 to vector<16x32xf32>
    %37 = arith.maximumf %35, %36 : vector<16x32xf32>
    %38 = arith.mulf %34, %37 : vector<16x32xf32>
    %cst_18 = arith.constant 1.000000e+00 : f32
    %39 = vector.broadcast %cst_18 : f32 to vector<16x32xf32>
    %40 = arith.subf %39, %34 : vector<16x32xf32>
    %41 = arith.mulf %40, %21 : vector<16x32xf32>
    %42 = arith.addf %38, %41 : vector<16x32xf32>
    %c0_19 = arith.constant 0 : index
    %c0_20 = arith.constant 0 : index
    %43 = vector.load %arg4[%c0_19, %c0_20] : memref<32x192xf32, #tpu.memory_space<vmem>>, vector<32x192xf32>
    %cst_21 = arith.constant dense<0.000000e+00> : vector<16x192xf32>
    %44 = tpu.matmul %42, %43, %cst_21 {dimension_numbers = #tpu.dot_dimension_numbers<[1], [0], [0], [1], [0, 0, 1, 1], [], []>} : vector<16x32xf32>, vector<32x192xf32>, vector<16x192xf32> -> vector<16x192xf32>
    %c0_22 = arith.constant 0 : index
    %c0_23 = arith.constant 0 : index
    %45 = vector.load %arg5[%c0_22, %c0_23] : memref<1x192xf32, #tpu.memory_space<vmem>>, vector<1x192xf32>
    %46 = vector.broadcast %45 : vector<1x192xf32> to vector<16x192xf32>
    %47 = arith.addf %44, %46 : vector<16x192xf32>
    %c0_24 = arith.constant 0 : index
    %c0_25 = arith.constant 0 : index
    %48 = vector.load %arg6[%c0_24, %c0_25] : memref<16x192xf32, #tpu.memory_space<vmem>>, vector<16x192xf32>
    tpu.vector_store %arg6[%c0_24, %c0_25], %47 {strides = array<i32>} : memref<16x192xf32, #tpu.memory_space<vmem>>, vector<16x192xf32>,
    return
  }
  func.func @transform_0(%arg0: i32) -> (i32, i32) {
    %c0_i32 = arith.constant 0 : i32
    %c0_i32_0 = arith.constant 0 : i32
    %c0_i32_1 = arith.constant 0 : i32
    return %c0_i32, %c0_i32_0 : i32, i32
  }
  func.func @transform_1(%arg0: i32) -> (i32, i32, i32) {
    %c0_i32 = arith.constant 0 : i32
    %c0_i32_0 = arith.constant 0 : i32
    %c0_i32_1 = arith.constant 0 : i32
    %c0_i32_2 = arith.constant 0 : i32
    return %c0_i32, %c0_i32_0, %c0_i32_1 : i32, i32, i32
  }
  func.func @transform_2(%arg0: i32) -> (i32, i32, i32) {
    %c0_i32 = arith.constant 0 : i32
    %c0_i32_0 = arith.constant 0 : i32
    %c0_i32_1 = arith.constant 0 : i32
    %c0_i32_2 = arith.constant 0 : i32
    return %c0_i32, %c0_i32_0, %c0_i32_1 : i32, i32, i32
  }
  func.func @transform_3(%arg0: i32) -> (i32, i32) {
    %c0_i32 = arith.constant 0 : i32
    %c0_i32_0 = arith.constant 0 : i32
    %c0_i32_1 = arith.constant 0 : i32
    return %c0_i32, %c0_i32_0 : i32, i32
  }
  func.func @transform_4(%arg0: i32) -> (i32, i32) {
    %c0_i32 = arith.constant 0 : i32
    %c0_i32_0 = arith.constant 0 : i32
    %c0_i32_1 = arith.constant 0 : i32
    return %c0_i32, %c0_i32_0 : i32, i32
  }
  func.func @transform_5(%arg0: i32) -> (i32, i32) {
    %c0_i32 = arith.constant 0 : i32
    %c0_i32_0 = arith.constant 0 : i32
    %c0_i32_1 = arith.constant 0 : i32
    return %c0_i32, %c0_i32_0 : i32, i32
  }
}

module attributes {stable_mosaic.version = 11 : i64} {
  func.func @_bigru_kernel(%arg0: i32, %arg1: memref<8x2x96xf32, #tpu.memory_space<vmem>>, %arg2: memref<8x2x96xf32, #tpu.memory_space<vmem>>, %arg3: memref<64x192xf32, #tpu.memory_space<vmem>>, %arg4: memref<1x192xf32, #tpu.memory_space<vmem>>, %arg5: memref<8x2x32xf32, #tpu.memory_space<vmem>>, %arg6: memref<8x2x32xf32, #tpu.memory_space<vmem>>) attributes {dimension_semantics = [#tpu.dimension_semantics<arbitrary>], iteration_bounds = array<i64: 1>, scalar_prefetch = 0 : i64, scratch_operands = 0 : i64, tpu.core_type = #tpu.core_type<tc>, window_params = [{pipeline_mode = #tpu.pipeline_mode<synchronous>, transform_indices = @transform_0, window_bounds = array<i64: 8, 2, 96>}, {pipeline_mode = #tpu.pipeline_mode<synchronous>, transform_indices = @transform_1, window_bounds = array<i64: 8, 2, 96>}, {pipeline_mode = #tpu.pipeline_mode<synchronous>, transform_indices = @transform_2, window_bounds = array<i64: 64, 192>}, {pipeline_mode = #tpu.pipeline_mode<synchronous>, transform_indices = @transform_3, window_bounds = array<i64: 1, 192>}, {pipeline_mode = #tpu.pipeline_mode<synchronous>, transform_indices = @transform_4, window_bounds = array<i64: 8, 2, 32>}, {pipeline_mode = #tpu.pipeline_mode<synchronous>, transform_indices = @transform_5, window_bounds = array<i64: 8, 2, 32>}]} {
    %c0 = arith.constant 0 : index
    %c0_0 = arith.constant 0 : index
    %0 = vector.load %arg3[%c0, %c0_0] : memref<64x192xf32, #tpu.memory_space<vmem>>, vector<64x192xf32>
    %c0_1 = arith.constant 0 : index
    %c0_2 = arith.constant 0 : index
    %1 = vector.load %arg4[%c0_1, %c0_2] : memref<1x192xf32, #tpu.memory_space<vmem>>, vector<1x192xf32>
    %cst = arith.constant 0.000000e+00 : f32
    %2 = vector.broadcast %cst : f32 to vector<2x64xf32>
    %c0_i32 = arith.constant 0 : i32
    %c7_i32 = arith.constant 7 : i32
    %3 = arith.subi %c7_i32, %c0_i32 : i32
    %4 = arith.index_cast %c0_i32 : i32 to index
    %c0_3 = arith.constant 0 : index
    %c0_4 = arith.constant 0 : index
    %5 = vector.load %arg1[%4, %c0_3, %c0_4] : memref<8x2x96xf32, #tpu.memory_space<vmem>>, vector<1x2x96xf32>
    %6 = vector.shape_cast %5 : vector<1x2x96xf32> to vector<2x96xf32>
    %7 = arith.index_cast %3 : i32 to index
    %c0_5 = arith.constant 0 : index
    %c0_6 = arith.constant 0 : index
    %8 = vector.load %arg2[%7, %c0_5, %c0_6] : memref<8x2x96xf32, #tpu.memory_space<vmem>>, vector<1x2x96xf32>
    %9 = vector.shape_cast %8 : vector<1x2x96xf32> to vector<2x96xf32>
    %cst_7 = arith.constant dense<0.000000e+00> : vector<2x192xf32>
    %10 = tpu.matmul %2, %0, %cst_7 {dimension_numbers = #tpu.dot_dimension_numbers<[1], [0], [0], [1], [0, 0, 1, 1], [], []>} : vector<2x64xf32>, vector<64x192xf32>, vector<2x192xf32> -> vector<2x192xf32>
    %11 = vector.broadcast %1 : vector<1x192xf32> to vector<2x192xf32>
    %12 = arith.addf %10, %11 : vector<2x192xf32>
    %13 = vector.extract_strided_slice %12 {offsets = [0, 0], sizes = [2, 96], strides = [1, 1]} : vector<2x192xf32> to vector<2x96xf32>
    %14 = vector.extract_strided_slice %2 {offsets = [0, 0], sizes = [2, 32], strides = [1, 1]} : vector<2x64xf32> to vector<2x32xf32>
    %15 = vector.extract_strided_slice %6 {offsets = [0, 0], sizes = [2, 32], strides = [1, 1]} : vector<2x96xf32> to vector<2x32xf32>
    %16 = vector.extract_strided_slice %13 {offsets = [0, 0], sizes = [2, 32], strides = [1, 1]} : vector<2x96xf32> to vector<2x32xf32>
    %17 = arith.addf %15, %16 : vector<2x32xf32>
    %18 = arith.negf %17 : vector<2x32xf32>
    %19 = math.exp %18 : vector<2x32xf32>
    %cst_8 = arith.constant 1.000000e+00 : f32
    %20 = vector.broadcast %cst_8 : f32 to vector<2x32xf32>
    %21 = arith.addf %20, %19 : vector<2x32xf32>
    %22 = arith.divf %20, %21 : vector<2x32xf32>
    %23 = vector.extract_strided_slice %6 {offsets = [0, 32], sizes = [2, 32], strides = [1, 1]} : vector<2x96xf32> to vector<2x32xf32>
    %24 = vector.extract_strided_slice %13 {offsets = [0, 32], sizes = [2, 32], strides = [1, 1]} : vector<2x96xf32> to vector<2x32xf32>
    %25 = arith.addf %23, %24 : vector<2x32xf32>
    %26 = arith.negf %25 : vector<2x32xf32>
    %27 = math.exp %26 : vector<2x32xf32>
    %cst_9 = arith.constant 1.000000e+00 : f32
    %28 = vector.broadcast %cst_9 : f32 to vector<2x32xf32>
    %29 = arith.addf %28, %27 : vector<2x32xf32>
    %30 = arith.divf %28, %29 : vector<2x32xf32>
    %31 = vector.extract_strided_slice %6 {offsets = [0, 64], sizes = [2, 32], strides = [1, 1]} : vector<2x96xf32> to vector<2x32xf32>
    %32 = vector.extract_strided_slice %13 {offsets = [0, 64], sizes = [2, 32], strides = [1, 1]} : vector<2x96xf32> to vector<2x32xf32>
    %33 = arith.mulf %22, %32 : vector<2x32xf32>
    %34 = arith.addf %31, %33 : vector<2x32xf32>
    %35 = math.tanh %34 : vector<2x32xf32>
    %cst_10 = arith.constant 1.000000e+00 : f32
    %36 = vector.broadcast %cst_10 : f32 to vector<2x32xf32>
    %37 = arith.subf %36, %30 : vector<2x32xf32>
    %38 = arith.mulf %37, %35 : vector<2x32xf32>
    %39 = arith.mulf %30, %14 : vector<2x32xf32>
    %40 = arith.addf %38, %39 : vector<2x32xf32>
    %41 = vector.extract_strided_slice %12 {offsets = [0, 96], sizes = [2, 96], strides = [1, 1]} : vector<2x192xf32> to vector<2x96xf32>
    %42 = vector.extract_strided_slice %2 {offsets = [0, 32], sizes = [2, 32], strides = [1, 1]} : vector<2x64xf32> to vector<2x32xf32>
    %43 = vector.extract_strided_slice %9 {offsets = [0, 0], sizes = [2, 32], strides = [1, 1]} : vector<2x96xf32> to vector<2x32xf32>
    %44 = vector.extract_strided_slice %41 {offsets = [0, 0], sizes = [2, 32], strides = [1, 1]} : vector<2x96xf32> to vector<2x32xf32>
    %45 = arith.addf %43, %44 : vector<2x32xf32>
    %46 = arith.negf %45 : vector<2x32xf32>
    %47 = math.exp %46 : vector<2x32xf32>
    %cst_11 = arith.constant 1.000000e+00 : f32
    %48 = vector.broadcast %cst_11 : f32 to vector<2x32xf32>
    %49 = arith.addf %48, %47 : vector<2x32xf32>
    %50 = arith.divf %48, %49 : vector<2x32xf32>
    %51 = vector.extract_strided_slice %9 {offsets = [0, 32], sizes = [2, 32], strides = [1, 1]} : vector<2x96xf32> to vector<2x32xf32>
    %52 = vector.extract_strided_slice %41 {offsets = [0, 32], sizes = [2, 32], strides = [1, 1]} : vector<2x96xf32> to vector<2x32xf32>
    %53 = arith.addf %51, %52 : vector<2x32xf32>
    %54 = arith.negf %53 : vector<2x32xf32>
    %55 = math.exp %54 : vector<2x32xf32>
    %cst_12 = arith.constant 1.000000e+00 : f32
    %56 = vector.broadcast %cst_12 : f32 to vector<2x32xf32>
    %57 = arith.addf %56, %55 : vector<2x32xf32>
    %58 = arith.divf %56, %57 : vector<2x32xf32>
    %59 = vector.extract_strided_slice %9 {offsets = [0, 64], sizes = [2, 32], strides = [1, 1]} : vector<2x96xf32> to vector<2x32xf32>
    %60 = vector.extract_strided_slice %41 {offsets = [0, 64], sizes = [2, 32], strides = [1, 1]} : vector<2x96xf32> to vector<2x32xf32>
    %61 = arith.mulf %50, %60 : vector<2x32xf32>
    %62 = arith.addf %59, %61 : vector<2x32xf32>
    %63 = math.tanh %62 : vector<2x32xf32>
    %cst_13 = arith.constant 1.000000e+00 : f32
    %64 = vector.broadcast %cst_13 : f32 to vector<2x32xf32>
    %65 = arith.subf %64, %58 : vector<2x32xf32>
    %66 = arith.mulf %65, %63 : vector<2x32xf32>
    %67 = arith.mulf %58, %42 : vector<2x32xf32>
    %68 = arith.addf %66, %67 : vector<2x32xf32>
    %69 = arith.index_cast %c0_i32 : i32 to index
    %c0_14 = arith.constant 0 : index
    %c0_15 = arith.constant 0 : index
    %70 = vector.load %arg5[%69, %c0_14, %c0_15] : memref<8x2x32xf32, #tpu.memory_space<vmem>>, vector<1x2x32xf32>
    %71 = vector.shape_cast %70 : vector<1x2x32xf32> to vector<2x32xf32>
    %72 = vector.shape_cast %40 : vector<2x32xf32> to vector<1x2x32xf32>
    tpu.vector_store %arg5[%69, %c0_14, %c0_15], %72 {strides = array<i32>} : memref<8x2x32xf32, #tpu.memory_space<vmem>>, vector<1x2x32xf32>,
    %73 = arith.index_cast %3 : i32 to index
    %c0_16 = arith.constant 0 : index
    %c0_17 = arith.constant 0 : index
    %74 = vector.load %arg6[%73, %c0_16, %c0_17] : memref<8x2x32xf32, #tpu.memory_space<vmem>>, vector<1x2x32xf32>
    %75 = vector.shape_cast %74 : vector<1x2x32xf32> to vector<2x32xf32>
    %76 = vector.shape_cast %68 : vector<2x32xf32> to vector<1x2x32xf32>
    tpu.vector_store %arg6[%73, %c0_16, %c0_17], %76 {strides = array<i32>} : memref<8x2x32xf32, #tpu.memory_space<vmem>>, vector<1x2x32xf32>,
    %77 = tpu.concatenate %40, %68 in 1 : vector<2x32xf32>, vector<2x32xf32> -> vector<2x64xf32>
    %c1_i32 = arith.constant 1 : i32
    %c7_i32_18 = arith.constant 7 : i32
    %78 = arith.subi %c7_i32_18, %c1_i32 : i32
    %79 = arith.index_cast %c1_i32 : i32 to index
    %c0_19 = arith.constant 0 : index
    %c0_20 = arith.constant 0 : index
    %80 = vector.load %arg1[%79, %c0_19, %c0_20] : memref<8x2x96xf32, #tpu.memory_space<vmem>>, vector<1x2x96xf32>
    %81 = vector.shape_cast %80 : vector<1x2x96xf32> to vector<2x96xf32>
    %82 = arith.index_cast %78 : i32 to index
    %c0_21 = arith.constant 0 : index
    %c0_22 = arith.constant 0 : index
    %83 = vector.load %arg2[%82, %c0_21, %c0_22] : memref<8x2x96xf32, #tpu.memory_space<vmem>>, vector<1x2x96xf32>
    %84 = vector.shape_cast %83 : vector<1x2x96xf32> to vector<2x96xf32>
    %cst_23 = arith.constant dense<0.000000e+00> : vector<2x192xf32>
    %85 = tpu.matmul %77, %0, %cst_23 {dimension_numbers = #tpu.dot_dimension_numbers<[1], [0], [0], [1], [0, 0, 1, 1], [], []>} : vector<2x64xf32>, vector<64x192xf32>, vector<2x192xf32> -> vector<2x192xf32>
    %86 = vector.broadcast %1 : vector<1x192xf32> to vector<2x192xf32>
    %87 = arith.addf %85, %86 : vector<2x192xf32>
    %88 = vector.extract_strided_slice %87 {offsets = [0, 0], sizes = [2, 96], strides = [1, 1]} : vector<2x192xf32> to vector<2x96xf32>
    %89 = vector.extract_strided_slice %77 {offsets = [0, 0], sizes = [2, 32], strides = [1, 1]} : vector<2x64xf32> to vector<2x32xf32>
    %90 = vector.extract_strided_slice %81 {offsets = [0, 0], sizes = [2, 32], strides = [1, 1]} : vector<2x96xf32> to vector<2x32xf32>
    %91 = vector.extract_strided_slice %88 {offsets = [0, 0], sizes = [2, 32], strides = [1, 1]} : vector<2x96xf32> to vector<2x32xf32>
    %92 = arith.addf %90, %91 : vector<2x32xf32>
    %93 = arith.negf %92 : vector<2x32xf32>
    %94 = math.exp %93 : vector<2x32xf32>
    %cst_24 = arith.constant 1.000000e+00 : f32
    %95 = vector.broadcast %cst_24 : f32 to vector<2x32xf32>
    %96 = arith.addf %95, %94 : vector<2x32xf32>
    %97 = arith.divf %95, %96 : vector<2x32xf32>
    %98 = vector.extract_strided_slice %81 {offsets = [0, 32], sizes = [2, 32], strides = [1, 1]} : vector<2x96xf32> to vector<2x32xf32>
    %99 = vector.extract_strided_slice %88 {offsets = [0, 32], sizes = [2, 32], strides = [1, 1]} : vector<2x96xf32> to vector<2x32xf32>
    %100 = arith.addf %98, %99 : vector<2x32xf32>
    %101 = arith.negf %100 : vector<2x32xf32>
    %102 = math.exp %101 : vector<2x32xf32>
    %cst_25 = arith.constant 1.000000e+00 : f32
    %103 = vector.broadcast %cst_25 : f32 to vector<2x32xf32>
    %104 = arith.addf %103, %102 : vector<2x32xf32>
    %105 = arith.divf %103, %104 : vector<2x32xf32>
    %106 = vector.extract_strided_slice %81 {offsets = [0, 64], sizes = [2, 32], strides = [1, 1]} : vector<2x96xf32> to vector<2x32xf32>
    %107 = vector.extract_strided_slice %88 {offsets = [0, 64], sizes = [2, 32], strides = [1, 1]} : vector<2x96xf32> to vector<2x32xf32>
    %108 = arith.mulf %97, %107 : vector<2x32xf32>
    %109 = arith.addf %106, %108 : vector<2x32xf32>
    %110 = math.tanh %109 : vector<2x32xf32>
    %cst_26 = arith.constant 1.000000e+00 : f32
    %111 = vector.broadcast %cst_26 : f32 to vector<2x32xf32>
    %112 = arith.subf %111, %105 : vector<2x32xf32>
    %113 = arith.mulf %112, %110 : vector<2x32xf32>
    %114 = arith.mulf %105, %89 : vector<2x32xf32>
    %115 = arith.addf %113, %114 : vector<2x32xf32>
    %116 = vector.extract_strided_slice %87 {offsets = [0, 96], sizes = [2, 96], strides = [1, 1]} : vector<2x192xf32> to vector<2x96xf32>
    %117 = vector.extract_strided_slice %77 {offsets = [0, 32], sizes = [2, 32], strides = [1, 1]} : vector<2x64xf32> to vector<2x32xf32>
    %118 = vector.extract_strided_slice %84 {offsets = [0, 0], sizes = [2, 32], strides = [1, 1]} : vector<2x96xf32> to vector<2x32xf32>
    %119 = vector.extract_strided_slice %116 {offsets = [0, 0], sizes = [2, 32], strides = [1, 1]} : vector<2x96xf32> to vector<2x32xf32>
    %120 = arith.addf %118, %119 : vector<2x32xf32>
    %121 = arith.negf %120 : vector<2x32xf32>
    %122 = math.exp %121 : vector<2x32xf32>
    %cst_27 = arith.constant 1.000000e+00 : f32
    %123 = vector.broadcast %cst_27 : f32 to vector<2x32xf32>
    %124 = arith.addf %123, %122 : vector<2x32xf32>
    %125 = arith.divf %123, %124 : vector<2x32xf32>
    %126 = vector.extract_strided_slice %84 {offsets = [0, 32], sizes = [2, 32], strides = [1, 1]} : vector<2x96xf32> to vector<2x32xf32>
    %127 = vector.extract_strided_slice %116 {offsets = [0, 32], sizes = [2, 32], strides = [1, 1]} : vector<2x96xf32> to vector<2x32xf32>
    %128 = arith.addf %126, %127 : vector<2x32xf32>
    %129 = arith.negf %128 : vector<2x32xf32>
    %130 = math.exp %129 : vector<2x32xf32>
    %cst_28 = arith.constant 1.000000e+00 : f32
    %131 = vector.broadcast %cst_28 : f32 to vector<2x32xf32>
    %132 = arith.addf %131, %130 : vector<2x32xf32>
    %133 = arith.divf %131, %132 : vector<2x32xf32>
    %134 = vector.extract_strided_slice %84 {offsets = [0, 64], sizes = [2, 32], strides = [1, 1]} : vector<2x96xf32> to vector<2x32xf32>
    %135 = vector.extract_strided_slice %116 {offsets = [0, 64], sizes = [2, 32], strides = [1, 1]} : vector<2x96xf32> to vector<2x32xf32>
    %136 = arith.mulf %125, %135 : vector<2x32xf32>
    %137 = arith.addf %134, %136 : vector<2x32xf32>
    %138 = math.tanh %137 : vector<2x32xf32>
    %cst_29 = arith.constant 1.000000e+00 : f32
    %139 = vector.broadcast %cst_29 : f32 to vector<2x32xf32>
    %140 = arith.subf %139, %133 : vector<2x32xf32>
    %141 = arith.mulf %140, %138 : vector<2x32xf32>
    %142 = arith.mulf %133, %117 : vector<2x32xf32>
    %143 = arith.addf %141, %142 : vector<2x32xf32>
    %144 = arith.index_cast %c1_i32 : i32 to index
    %c0_30 = arith.constant 0 : index
    %c0_31 = arith.constant 0 : index
    %145 = vector.load %arg5[%144, %c0_30, %c0_31] : memref<8x2x32xf32, #tpu.memory_space<vmem>>, vector<1x2x32xf32>
    %146 = vector.shape_cast %145 : vector<1x2x32xf32> to vector<2x32xf32>
    %147 = vector.shape_cast %115 : vector<2x32xf32> to vector<1x2x32xf32>
    tpu.vector_store %arg5[%144, %c0_30, %c0_31], %147 {strides = array<i32>} : memref<8x2x32xf32, #tpu.memory_space<vmem>>, vector<1x2x32xf32>,
    %148 = arith.index_cast %78 : i32 to index
    %c0_32 = arith.constant 0 : index
    %c0_33 = arith.constant 0 : index
    %149 = vector.load %arg6[%148, %c0_32, %c0_33] : memref<8x2x32xf32, #tpu.memory_space<vmem>>, vector<1x2x32xf32>
    %150 = vector.shape_cast %149 : vector<1x2x32xf32> to vector<2x32xf32>
    %151 = vector.shape_cast %143 : vector<2x32xf32> to vector<1x2x32xf32>
    tpu.vector_store %arg6[%148, %c0_32, %c0_33], %151 {strides = array<i32>} : memref<8x2x32xf32, #tpu.memory_space<vmem>>, vector<1x2x32xf32>,
    %152 = tpu.concatenate %115, %143 in 1 : vector<2x32xf32>, vector<2x32xf32> -> vector<2x64xf32>
    %c2_i32 = arith.constant 2 : i32
    %c7_i32_34 = arith.constant 7 : i32
    %153 = arith.subi %c7_i32_34, %c2_i32 : i32
    %154 = arith.index_cast %c2_i32 : i32 to index
    %c0_35 = arith.constant 0 : index
    %c0_36 = arith.constant 0 : index
    %155 = vector.load %arg1[%154, %c0_35, %c0_36] : memref<8x2x96xf32, #tpu.memory_space<vmem>>, vector<1x2x96xf32>
    %156 = vector.shape_cast %155 : vector<1x2x96xf32> to vector<2x96xf32>
    %157 = arith.index_cast %153 : i32 to index
    %c0_37 = arith.constant 0 : index
    %c0_38 = arith.constant 0 : index
    %158 = vector.load %arg2[%157, %c0_37, %c0_38] : memref<8x2x96xf32, #tpu.memory_space<vmem>>, vector<1x2x96xf32>
    %159 = vector.shape_cast %158 : vector<1x2x96xf32> to vector<2x96xf32>
    %cst_39 = arith.constant dense<0.000000e+00> : vector<2x192xf32>
    %160 = tpu.matmul %152, %0, %cst_39 {dimension_numbers = #tpu.dot_dimension_numbers<[1], [0], [0], [1], [0, 0, 1, 1], [], []>} : vector<2x64xf32>, vector<64x192xf32>, vector<2x192xf32> -> vector<2x192xf32>
    %161 = vector.broadcast %1 : vector<1x192xf32> to vector<2x192xf32>
    %162 = arith.addf %160, %161 : vector<2x192xf32>
    %163 = vector.extract_strided_slice %162 {offsets = [0, 0], sizes = [2, 96], strides = [1, 1]} : vector<2x192xf32> to vector<2x96xf32>
    %164 = vector.extract_strided_slice %152 {offsets = [0, 0], sizes = [2, 32], strides = [1, 1]} : vector<2x64xf32> to vector<2x32xf32>
    %165 = vector.extract_strided_slice %156 {offsets = [0, 0], sizes = [2, 32], strides = [1, 1]} : vector<2x96xf32> to vector<2x32xf32>
    %166 = vector.extract_strided_slice %163 {offsets = [0, 0], sizes = [2, 32], strides = [1, 1]} : vector<2x96xf32> to vector<2x32xf32>
    %167 = arith.addf %165, %166 : vector<2x32xf32>
    %168 = arith.negf %167 : vector<2x32xf32>
    %169 = math.exp %168 : vector<2x32xf32>
    %cst_40 = arith.constant 1.000000e+00 : f32
    %170 = vector.broadcast %cst_40 : f32 to vector<2x32xf32>
    %171 = arith.addf %170, %169 : vector<2x32xf32>
    %172 = arith.divf %170, %171 : vector<2x32xf32>
    %173 = vector.extract_strided_slice %156 {offsets = [0, 32], sizes = [2, 32], strides = [1, 1]} : vector<2x96xf32> to vector<2x32xf32>
    %174 = vector.extract_strided_slice %163 {offsets = [0, 32], sizes = [2, 32], strides = [1, 1]} : vector<2x96xf32> to vector<2x32xf32>
    %175 = arith.addf %173, %174 : vector<2x32xf32>
    %176 = arith.negf %175 : vector<2x32xf32>
    %177 = math.exp %176 : vector<2x32xf32>
    %cst_41 = arith.constant 1.000000e+00 : f32
    %178 = vector.broadcast %cst_41 : f32 to vector<2x32xf32>
    %179 = arith.addf %178, %177 : vector<2x32xf32>
    %180 = arith.divf %178, %179 : vector<2x32xf32>
    %181 = vector.extract_strided_slice %156 {offsets = [0, 64], sizes = [2, 32], strides = [1, 1]} : vector<2x96xf32> to vector<2x32xf32>
    %182 = vector.extract_strided_slice %163 {offsets = [0, 64], sizes = [2, 32], strides = [1, 1]} : vector<2x96xf32> to vector<2x32xf32>
    %183 = arith.mulf %172, %182 : vector<2x32xf32>
    %184 = arith.addf %181, %183 : vector<2x32xf32>
    %185 = math.tanh %184 : vector<2x32xf32>
    %cst_42 = arith.constant 1.000000e+00 : f32
    %186 = vector.broadcast %cst_42 : f32 to vector<2x32xf32>
    %187 = arith.subf %186, %180 : vector<2x32xf32>
    %188 = arith.mulf %187, %185 : vector<2x32xf32>
    %189 = arith.mulf %180, %164 : vector<2x32xf32>
    %190 = arith.addf %188, %189 : vector<2x32xf32>
    %191 = vector.extract_strided_slice %162 {offsets = [0, 96], sizes = [2, 96], strides = [1, 1]} : vector<2x192xf32> to vector<2x96xf32>
    %192 = vector.extract_strided_slice %152 {offsets = [0, 32], sizes = [2, 32], strides = [1, 1]} : vector<2x64xf32> to vector<2x32xf32>
    %193 = vector.extract_strided_slice %159 {offsets = [0, 0], sizes = [2, 32], strides = [1, 1]} : vector<2x96xf32> to vector<2x32xf32>
    %194 = vector.extract_strided_slice %191 {offsets = [0, 0], sizes = [2, 32], strides = [1, 1]} : vector<2x96xf32> to vector<2x32xf32>
    %195 = arith.addf %193, %194 : vector<2x32xf32>
    %196 = arith.negf %195 : vector<2x32xf32>
    %197 = math.exp %196 : vector<2x32xf32>
    %cst_43 = arith.constant 1.000000e+00 : f32
    %198 = vector.broadcast %cst_43 : f32 to vector<2x32xf32>
    %199 = arith.addf %198, %197 : vector<2x32xf32>
    %200 = arith.divf %198, %199 : vector<2x32xf32>
    %201 = vector.extract_strided_slice %159 {offsets = [0, 32], sizes = [2, 32], strides = [1, 1]} : vector<2x96xf32> to vector<2x32xf32>
    %202 = vector.extract_strided_slice %191 {offsets = [0, 32], sizes = [2, 32], strides = [1, 1]} : vector<2x96xf32> to vector<2x32xf32>
    %203 = arith.addf %201, %202 : vector<2x32xf32>
    %204 = arith.negf %203 : vector<2x32xf32>
    %205 = math.exp %204 : vector<2x32xf32>
    %cst_44 = arith.constant 1.000000e+00 : f32
    %206 = vector.broadcast %cst_44 : f32 to vector<2x32xf32>
    %207 = arith.addf %206, %205 : vector<2x32xf32>
    %208 = arith.divf %206, %207 : vector<2x32xf32>
    %209 = vector.extract_strided_slice %159 {offsets = [0, 64], sizes = [2, 32], strides = [1, 1]} : vector<2x96xf32> to vector<2x32xf32>
    %210 = vector.extract_strided_slice %191 {offsets = [0, 64], sizes = [2, 32], strides = [1, 1]} : vector<2x96xf32> to vector<2x32xf32>
    %211 = arith.mulf %200, %210 : vector<2x32xf32>
    %212 = arith.addf %209, %211 : vector<2x32xf32>
    %213 = math.tanh %212 : vector<2x32xf32>
    %cst_45 = arith.constant 1.000000e+00 : f32
    %214 = vector.broadcast %cst_45 : f32 to vector<2x32xf32>
    %215 = arith.subf %214, %208 : vector<2x32xf32>
    %216 = arith.mulf %215, %213 : vector<2x32xf32>
    %217 = arith.mulf %208, %192 : vector<2x32xf32>
    %218 = arith.addf %216, %217 : vector<2x32xf32>
    %219 = arith.index_cast %c2_i32 : i32 to index
    %c0_46 = arith.constant 0 : index
    %c0_47 = arith.constant 0 : index
    %220 = vector.load %arg5[%219, %c0_46, %c0_47] : memref<8x2x32xf32, #tpu.memory_space<vmem>>, vector<1x2x32xf32>
    %221 = vector.shape_cast %220 : vector<1x2x32xf32> to vector<2x32xf32>
    %222 = vector.shape_cast %190 : vector<2x32xf32> to vector<1x2x32xf32>
    tpu.vector_store %arg5[%219, %c0_46, %c0_47], %222 {strides = array<i32>} : memref<8x2x32xf32, #tpu.memory_space<vmem>>, vector<1x2x32xf32>,
    %223 = arith.index_cast %153 : i32 to index
    %c0_48 = arith.constant 0 : index
    %c0_49 = arith.constant 0 : index
    %224 = vector.load %arg6[%223, %c0_48, %c0_49] : memref<8x2x32xf32, #tpu.memory_space<vmem>>, vector<1x2x32xf32>
    %225 = vector.shape_cast %224 : vector<1x2x32xf32> to vector<2x32xf32>
    %226 = vector.shape_cast %218 : vector<2x32xf32> to vector<1x2x32xf32>
    tpu.vector_store %arg6[%223, %c0_48, %c0_49], %226 {strides = array<i32>} : memref<8x2x32xf32, #tpu.memory_space<vmem>>, vector<1x2x32xf32>,
    %227 = tpu.concatenate %190, %218 in 1 : vector<2x32xf32>, vector<2x32xf32> -> vector<2x64xf32>
    %c3_i32 = arith.constant 3 : i32
    %c7_i32_50 = arith.constant 7 : i32
    %228 = arith.subi %c7_i32_50, %c3_i32 : i32
    %229 = arith.index_cast %c3_i32 : i32 to index
    %c0_51 = arith.constant 0 : index
    %c0_52 = arith.constant 0 : index
    %230 = vector.load %arg1[%229, %c0_51, %c0_52] : memref<8x2x96xf32, #tpu.memory_space<vmem>>, vector<1x2x96xf32>
    %231 = vector.shape_cast %230 : vector<1x2x96xf32> to vector<2x96xf32>
    %232 = arith.index_cast %228 : i32 to index
    %c0_53 = arith.constant 0 : index
    %c0_54 = arith.constant 0 : index
    %233 = vector.load %arg2[%232, %c0_53, %c0_54] : memref<8x2x96xf32, #tpu.memory_space<vmem>>, vector<1x2x96xf32>
    %234 = vector.shape_cast %233 : vector<1x2x96xf32> to vector<2x96xf32>
    %cst_55 = arith.constant dense<0.000000e+00> : vector<2x192xf32>
    %235 = tpu.matmul %227, %0, %cst_55 {dimension_numbers = #tpu.dot_dimension_numbers<[1], [0], [0], [1], [0, 0, 1, 1], [], []>} : vector<2x64xf32>, vector<64x192xf32>, vector<2x192xf32> -> vector<2x192xf32>
    %236 = vector.broadcast %1 : vector<1x192xf32> to vector<2x192xf32>
    %237 = arith.addf %235, %236 : vector<2x192xf32>
    %238 = vector.extract_strided_slice %237 {offsets = [0, 0], sizes = [2, 96], strides = [1, 1]} : vector<2x192xf32> to vector<2x96xf32>
    %239 = vector.extract_strided_slice %227 {offsets = [0, 0], sizes = [2, 32], strides = [1, 1]} : vector<2x64xf32> to vector<2x32xf32>
    %240 = vector.extract_strided_slice %231 {offsets = [0, 0], sizes = [2, 32], strides = [1, 1]} : vector<2x96xf32> to vector<2x32xf32>
    %241 = vector.extract_strided_slice %238 {offsets = [0, 0], sizes = [2, 32], strides = [1, 1]} : vector<2x96xf32> to vector<2x32xf32>
    %242 = arith.addf %240, %241 : vector<2x32xf32>
    %243 = arith.negf %242 : vector<2x32xf32>
    %244 = math.exp %243 : vector<2x32xf32>
    %cst_56 = arith.constant 1.000000e+00 : f32
    %245 = vector.broadcast %cst_56 : f32 to vector<2x32xf32>
    %246 = arith.addf %245, %244 : vector<2x32xf32>
    %247 = arith.divf %245, %246 : vector<2x32xf32>
    %248 = vector.extract_strided_slice %231 {offsets = [0, 32], sizes = [2, 32], strides = [1, 1]} : vector<2x96xf32> to vector<2x32xf32>
    %249 = vector.extract_strided_slice %238 {offsets = [0, 32], sizes = [2, 32], strides = [1, 1]} : vector<2x96xf32> to vector<2x32xf32>
    %250 = arith.addf %248, %249 : vector<2x32xf32>
    %251 = arith.negf %250 : vector<2x32xf32>
    %252 = math.exp %251 : vector<2x32xf32>
    %cst_57 = arith.constant 1.000000e+00 : f32
    %253 = vector.broadcast %cst_57 : f32 to vector<2x32xf32>
    %254 = arith.addf %253, %252 : vector<2x32xf32>
    %255 = arith.divf %253, %254 : vector<2x32xf32>
    %256 = vector.extract_strided_slice %231 {offsets = [0, 64], sizes = [2, 32], strides = [1, 1]} : vector<2x96xf32> to vector<2x32xf32>
    %257 = vector.extract_strided_slice %238 {offsets = [0, 64], sizes = [2, 32], strides = [1, 1]} : vector<2x96xf32> to vector<2x32xf32>
    %258 = arith.mulf %247, %257 : vector<2x32xf32>
    %259 = arith.addf %256, %258 : vector<2x32xf32>
    %260 = math.tanh %259 : vector<2x32xf32>
    %cst_58 = arith.constant 1.000000e+00 : f32
    %261 = vector.broadcast %cst_58 : f32 to vector<2x32xf32>
    %262 = arith.subf %261, %255 : vector<2x32xf32>
    %263 = arith.mulf %262, %260 : vector<2x32xf32>
    %264 = arith.mulf %255, %239 : vector<2x32xf32>
    %265 = arith.addf %263, %264 : vector<2x32xf32>
    %266 = vector.extract_strided_slice %237 {offsets = [0, 96], sizes = [2, 96], strides = [1, 1]} : vector<2x192xf32> to vector<2x96xf32>
    %267 = vector.extract_strided_slice %227 {offsets = [0, 32], sizes = [2, 32], strides = [1, 1]} : vector<2x64xf32> to vector<2x32xf32>
    %268 = vector.extract_strided_slice %234 {offsets = [0, 0], sizes = [2, 32], strides = [1, 1]} : vector<2x96xf32> to vector<2x32xf32>
    %269 = vector.extract_strided_slice %266 {offsets = [0, 0], sizes = [2, 32], strides = [1, 1]} : vector<2x96xf32> to vector<2x32xf32>
    %270 = arith.addf %268, %269 : vector<2x32xf32>
    %271 = arith.negf %270 : vector<2x32xf32>
    %272 = math.exp %271 : vector<2x32xf32>
    %cst_59 = arith.constant 1.000000e+00 : f32
    %273 = vector.broadcast %cst_59 : f32 to vector<2x32xf32>
    %274 = arith.addf %273, %272 : vector<2x32xf32>
    %275 = arith.divf %273, %274 : vector<2x32xf32>
    %276 = vector.extract_strided_slice %234 {offsets = [0, 32], sizes = [2, 32], strides = [1, 1]} : vector<2x96xf32> to vector<2x32xf32>
    %277 = vector.extract_strided_slice %266 {offsets = [0, 32], sizes = [2, 32], strides = [1, 1]} : vector<2x96xf32> to vector<2x32xf32>
    %278 = arith.addf %276, %277 : vector<2x32xf32>
    %279 = arith.negf %278 : vector<2x32xf32>
    %280 = math.exp %279 : vector<2x32xf32>
    %cst_60 = arith.constant 1.000000e+00 : f32
    %281 = vector.broadcast %cst_60 : f32 to vector<2x32xf32>
    %282 = arith.addf %281, %280 : vector<2x32xf32>
    %283 = arith.divf %281, %282 : vector<2x32xf32>
    %284 = vector.extract_strided_slice %234 {offsets = [0, 64], sizes = [2, 32], strides = [1, 1]} : vector<2x96xf32> to vector<2x32xf32>
    %285 = vector.extract_strided_slice %266 {offsets = [0, 64], sizes = [2, 32], strides = [1, 1]} : vector<2x96xf32> to vector<2x32xf32>
    %286 = arith.mulf %275, %285 : vector<2x32xf32>
    %287 = arith.addf %284, %286 : vector<2x32xf32>
    %288 = math.tanh %287 : vector<2x32xf32>
    %cst_61 = arith.constant 1.000000e+00 : f32
    %289 = vector.broadcast %cst_61 : f32 to vector<2x32xf32>
    %290 = arith.subf %289, %283 : vector<2x32xf32>
    %291 = arith.mulf %290, %288 : vector<2x32xf32>
    %292 = arith.mulf %283, %267 : vector<2x32xf32>
    %293 = arith.addf %291, %292 : vector<2x32xf32>
    %294 = arith.index_cast %c3_i32 : i32 to index
    %c0_62 = arith.constant 0 : index
    %c0_63 = arith.constant 0 : index
    %295 = vector.load %arg5[%294, %c0_62, %c0_63] : memref<8x2x32xf32, #tpu.memory_space<vmem>>, vector<1x2x32xf32>
    %296 = vector.shape_cast %295 : vector<1x2x32xf32> to vector<2x32xf32>
    %297 = vector.shape_cast %265 : vector<2x32xf32> to vector<1x2x32xf32>
    tpu.vector_store %arg5[%294, %c0_62, %c0_63], %297 {strides = array<i32>} : memref<8x2x32xf32, #tpu.memory_space<vmem>>, vector<1x2x32xf32>,
    %298 = arith.index_cast %228 : i32 to index
    %c0_64 = arith.constant 0 : index
    %c0_65 = arith.constant 0 : index
    %299 = vector.load %arg6[%298, %c0_64, %c0_65] : memref<8x2x32xf32, #tpu.memory_space<vmem>>, vector<1x2x32xf32>
    %300 = vector.shape_cast %299 : vector<1x2x32xf32> to vector<2x32xf32>
    %301 = vector.shape_cast %293 : vector<2x32xf32> to vector<1x2x32xf32>
    tpu.vector_store %arg6[%298, %c0_64, %c0_65], %301 {strides = array<i32>} : memref<8x2x32xf32, #tpu.memory_space<vmem>>, vector<1x2x32xf32>,
    %302 = tpu.concatenate %265, %293 in 1 : vector<2x32xf32>, vector<2x32xf32> -> vector<2x64xf32>
    %c4_i32 = arith.constant 4 : i32
    %c7_i32_66 = arith.constant 7 : i32
    %303 = arith.subi %c7_i32_66, %c4_i32 : i32
    %304 = arith.index_cast %c4_i32 : i32 to index
    %c0_67 = arith.constant 0 : index
    %c0_68 = arith.constant 0 : index
    %305 = vector.load %arg1[%304, %c0_67, %c0_68] : memref<8x2x96xf32, #tpu.memory_space<vmem>>, vector<1x2x96xf32>
    %306 = vector.shape_cast %305 : vector<1x2x96xf32> to vector<2x96xf32>
    %307 = arith.index_cast %303 : i32 to index
    %c0_69 = arith.constant 0 : index
    %c0_70 = arith.constant 0 : index
    %308 = vector.load %arg2[%307, %c0_69, %c0_70] : memref<8x2x96xf32, #tpu.memory_space<vmem>>, vector<1x2x96xf32>
    %309 = vector.shape_cast %308 : vector<1x2x96xf32> to vector<2x96xf32>
    %cst_71 = arith.constant dense<0.000000e+00> : vector<2x192xf32>
    %310 = tpu.matmul %302, %0, %cst_71 {dimension_numbers = #tpu.dot_dimension_numbers<[1], [0], [0], [1], [0, 0, 1, 1], [], []>} : vector<2x64xf32>, vector<64x192xf32>, vector<2x192xf32> -> vector<2x192xf32>
    %311 = vector.broadcast %1 : vector<1x192xf32> to vector<2x192xf32>
    %312 = arith.addf %310, %311 : vector<2x192xf32>
    %313 = vector.extract_strided_slice %312 {offsets = [0, 0], sizes = [2, 96], strides = [1, 1]} : vector<2x192xf32> to vector<2x96xf32>
    %314 = vector.extract_strided_slice %302 {offsets = [0, 0], sizes = [2, 32], strides = [1, 1]} : vector<2x64xf32> to vector<2x32xf32>
    %315 = vector.extract_strided_slice %306 {offsets = [0, 0], sizes = [2, 32], strides = [1, 1]} : vector<2x96xf32> to vector<2x32xf32>
    %316 = vector.extract_strided_slice %313 {offsets = [0, 0], sizes = [2, 32], strides = [1, 1]} : vector<2x96xf32> to vector<2x32xf32>
    %317 = arith.addf %315, %316 : vector<2x32xf32>
    %318 = arith.negf %317 : vector<2x32xf32>
    %319 = math.exp %318 : vector<2x32xf32>
    %cst_72 = arith.constant 1.000000e+00 : f32
    %320 = vector.broadcast %cst_72 : f32 to vector<2x32xf32>
    %321 = arith.addf %320, %319 : vector<2x32xf32>
    %322 = arith.divf %320, %321 : vector<2x32xf32>
    %323 = vector.extract_strided_slice %306 {offsets = [0, 32], sizes = [2, 32], strides = [1, 1]} : vector<2x96xf32> to vector<2x32xf32>
    %324 = vector.extract_strided_slice %313 {offsets = [0, 32], sizes = [2, 32], strides = [1, 1]} : vector<2x96xf32> to vector<2x32xf32>
    %325 = arith.addf %323, %324 : vector<2x32xf32>
    %326 = arith.negf %325 : vector<2x32xf32>
    %327 = math.exp %326 : vector<2x32xf32>
    %cst_73 = arith.constant 1.000000e+00 : f32
    %328 = vector.broadcast %cst_73 : f32 to vector<2x32xf32>
    %329 = arith.addf %328, %327 : vector<2x32xf32>
    %330 = arith.divf %328, %329 : vector<2x32xf32>
    %331 = vector.extract_strided_slice %306 {offsets = [0, 64], sizes = [2, 32], strides = [1, 1]} : vector<2x96xf32> to vector<2x32xf32>
    %332 = vector.extract_strided_slice %313 {offsets = [0, 64], sizes = [2, 32], strides = [1, 1]} : vector<2x96xf32> to vector<2x32xf32>
    %333 = arith.mulf %322, %332 : vector<2x32xf32>
    %334 = arith.addf %331, %333 : vector<2x32xf32>
    %335 = math.tanh %334 : vector<2x32xf32>
    %cst_74 = arith.constant 1.000000e+00 : f32
    %336 = vector.broadcast %cst_74 : f32 to vector<2x32xf32>
    %337 = arith.subf %336, %330 : vector<2x32xf32>
    %338 = arith.mulf %337, %335 : vector<2x32xf32>
    %339 = arith.mulf %330, %314 : vector<2x32xf32>
    %340 = arith.addf %338, %339 : vector<2x32xf32>
    %341 = vector.extract_strided_slice %312 {offsets = [0, 96], sizes = [2, 96], strides = [1, 1]} : vector<2x192xf32> to vector<2x96xf32>
    %342 = vector.extract_strided_slice %302 {offsets = [0, 32], sizes = [2, 32], strides = [1, 1]} : vector<2x64xf32> to vector<2x32xf32>
    %343 = vector.extract_strided_slice %309 {offsets = [0, 0], sizes = [2, 32], strides = [1, 1]} : vector<2x96xf32> to vector<2x32xf32>
    %344 = vector.extract_strided_slice %341 {offsets = [0, 0], sizes = [2, 32], strides = [1, 1]} : vector<2x96xf32> to vector<2x32xf32>
    %345 = arith.addf %343, %344 : vector<2x32xf32>
    %346 = arith.negf %345 : vector<2x32xf32>
    %347 = math.exp %346 : vector<2x32xf32>
    %cst_75 = arith.constant 1.000000e+00 : f32
    %348 = vector.broadcast %cst_75 : f32 to vector<2x32xf32>
    %349 = arith.addf %348, %347 : vector<2x32xf32>
    %350 = arith.divf %348, %349 : vector<2x32xf32>
    %351 = vector.extract_strided_slice %309 {offsets = [0, 32], sizes = [2, 32], strides = [1, 1]} : vector<2x96xf32> to vector<2x32xf32>
    %352 = vector.extract_strided_slice %341 {offsets = [0, 32], sizes = [2, 32], strides = [1, 1]} : vector<2x96xf32> to vector<2x32xf32>
    %353 = arith.addf %351, %352 : vector<2x32xf32>
    %354 = arith.negf %353 : vector<2x32xf32>
    %355 = math.exp %354 : vector<2x32xf32>
    %cst_76 = arith.constant 1.000000e+00 : f32
    %356 = vector.broadcast %cst_76 : f32 to vector<2x32xf32>
    %357 = arith.addf %356, %355 : vector<2x32xf32>
    %358 = arith.divf %356, %357 : vector<2x32xf32>
    %359 = vector.extract_strided_slice %309 {offsets = [0, 64], sizes = [2, 32], strides = [1, 1]} : vector<2x96xf32> to vector<2x32xf32>
    %360 = vector.extract_strided_slice %341 {offsets = [0, 64], sizes = [2, 32], strides = [1, 1]} : vector<2x96xf32> to vector<2x32xf32>
    %361 = arith.mulf %350, %360 : vector<2x32xf32>
    %362 = arith.addf %359, %361 : vector<2x32xf32>
    %363 = math.tanh %362 : vector<2x32xf32>
    %cst_77 = arith.constant 1.000000e+00 : f32
    %364 = vector.broadcast %cst_77 : f32 to vector<2x32xf32>
    %365 = arith.subf %364, %358 : vector<2x32xf32>
    %366 = arith.mulf %365, %363 : vector<2x32xf32>
    %367 = arith.mulf %358, %342 : vector<2x32xf32>
    %368 = arith.addf %366, %367 : vector<2x32xf32>
    %369 = arith.index_cast %c4_i32 : i32 to index
    %c0_78 = arith.constant 0 : index
    %c0_79 = arith.constant 0 : index
    %370 = vector.load %arg5[%369, %c0_78, %c0_79] : memref<8x2x32xf32, #tpu.memory_space<vmem>>, vector<1x2x32xf32>
    %371 = vector.shape_cast %370 : vector<1x2x32xf32> to vector<2x32xf32>
    %372 = vector.shape_cast %340 : vector<2x32xf32> to vector<1x2x32xf32>
    tpu.vector_store %arg5[%369, %c0_78, %c0_79], %372 {strides = array<i32>} : memref<8x2x32xf32, #tpu.memory_space<vmem>>, vector<1x2x32xf32>,
    %373 = arith.index_cast %303 : i32 to index
    %c0_80 = arith.constant 0 : index
    %c0_81 = arith.constant 0 : index
    %374 = vector.load %arg6[%373, %c0_80, %c0_81] : memref<8x2x32xf32, #tpu.memory_space<vmem>>, vector<1x2x32xf32>
    %375 = vector.shape_cast %374 : vector<1x2x32xf32> to vector<2x32xf32>
    %376 = vector.shape_cast %368 : vector<2x32xf32> to vector<1x2x32xf32>
    tpu.vector_store %arg6[%373, %c0_80, %c0_81], %376 {strides = array<i32>} : memref<8x2x32xf32, #tpu.memory_space<vmem>>, vector<1x2x32xf32>,
    %377 = tpu.concatenate %340, %368 in 1 : vector<2x32xf32>, vector<2x32xf32> -> vector<2x64xf32>
    %c5_i32 = arith.constant 5 : i32
    %c7_i32_82 = arith.constant 7 : i32
    %378 = arith.subi %c7_i32_82, %c5_i32 : i32
    %379 = arith.index_cast %c5_i32 : i32 to index
    %c0_83 = arith.constant 0 : index
    %c0_84 = arith.constant 0 : index
    %380 = vector.load %arg1[%379, %c0_83, %c0_84] : memref<8x2x96xf32, #tpu.memory_space<vmem>>, vector<1x2x96xf32>
    %381 = vector.shape_cast %380 : vector<1x2x96xf32> to vector<2x96xf32>
    %382 = arith.index_cast %378 : i32 to index
    %c0_85 = arith.constant 0 : index
    %c0_86 = arith.constant 0 : index
    %383 = vector.load %arg2[%382, %c0_85, %c0_86] : memref<8x2x96xf32, #tpu.memory_space<vmem>>, vector<1x2x96xf32>
    %384 = vector.shape_cast %383 : vector<1x2x96xf32> to vector<2x96xf32>
    %cst_87 = arith.constant dense<0.000000e+00> : vector<2x192xf32>
    %385 = tpu.matmul %377, %0, %cst_87 {dimension_numbers = #tpu.dot_dimension_numbers<[1], [0], [0], [1], [0, 0, 1, 1], [], []>} : vector<2x64xf32>, vector<64x192xf32>, vector<2x192xf32> -> vector<2x192xf32>
    %386 = vector.broadcast %1 : vector<1x192xf32> to vector<2x192xf32>
    %387 = arith.addf %385, %386 : vector<2x192xf32>
    %388 = vector.extract_strided_slice %387 {offsets = [0, 0], sizes = [2, 96], strides = [1, 1]} : vector<2x192xf32> to vector<2x96xf32>
    %389 = vector.extract_strided_slice %377 {offsets = [0, 0], sizes = [2, 32], strides = [1, 1]} : vector<2x64xf32> to vector<2x32xf32>
    %390 = vector.extract_strided_slice %381 {offsets = [0, 0], sizes = [2, 32], strides = [1, 1]} : vector<2x96xf32> to vector<2x32xf32>
    %391 = vector.extract_strided_slice %388 {offsets = [0, 0], sizes = [2, 32], strides = [1, 1]} : vector<2x96xf32> to vector<2x32xf32>
    %392 = arith.addf %390, %391 : vector<2x32xf32>
    %393 = arith.negf %392 : vector<2x32xf32>
    %394 = math.exp %393 : vector<2x32xf32>
    %cst_88 = arith.constant 1.000000e+00 : f32
    %395 = vector.broadcast %cst_88 : f32 to vector<2x32xf32>
    %396 = arith.addf %395, %394 : vector<2x32xf32>
    %397 = arith.divf %395, %396 : vector<2x32xf32>
    %398 = vector.extract_strided_slice %381 {offsets = [0, 32], sizes = [2, 32], strides = [1, 1]} : vector<2x96xf32> to vector<2x32xf32>
    %399 = vector.extract_strided_slice %388 {offsets = [0, 32], sizes = [2, 32], strides = [1, 1]} : vector<2x96xf32> to vector<2x32xf32>
    %400 = arith.addf %398, %399 : vector<2x32xf32>
    %401 = arith.negf %400 : vector<2x32xf32>
    %402 = math.exp %401 : vector<2x32xf32>
    %cst_89 = arith.constant 1.000000e+00 : f32
    %403 = vector.broadcast %cst_89 : f32 to vector<2x32xf32>
    %404 = arith.addf %403, %402 : vector<2x32xf32>
    %405 = arith.divf %403, %404 : vector<2x32xf32>
    %406 = vector.extract_strided_slice %381 {offsets = [0, 64], sizes = [2, 32], strides = [1, 1]} : vector<2x96xf32> to vector<2x32xf32>
    %407 = vector.extract_strided_slice %388 {offsets = [0, 64], sizes = [2, 32], strides = [1, 1]} : vector<2x96xf32> to vector<2x32xf32>
    %408 = arith.mulf %397, %407 : vector<2x32xf32>
    %409 = arith.addf %406, %408 : vector<2x32xf32>
    %410 = math.tanh %409 : vector<2x32xf32>
    %cst_90 = arith.constant 1.000000e+00 : f32
    %411 = vector.broadcast %cst_90 : f32 to vector<2x32xf32>
    %412 = arith.subf %411, %405 : vector<2x32xf32>
    %413 = arith.mulf %412, %410 : vector<2x32xf32>
    %414 = arith.mulf %405, %389 : vector<2x32xf32>
    %415 = arith.addf %413, %414 : vector<2x32xf32>
    %416 = vector.extract_strided_slice %387 {offsets = [0, 96], sizes = [2, 96], strides = [1, 1]} : vector<2x192xf32> to vector<2x96xf32>
    %417 = vector.extract_strided_slice %377 {offsets = [0, 32], sizes = [2, 32], strides = [1, 1]} : vector<2x64xf32> to vector<2x32xf32>
    %418 = vector.extract_strided_slice %384 {offsets = [0, 0], sizes = [2, 32], strides = [1, 1]} : vector<2x96xf32> to vector<2x32xf32>
    %419 = vector.extract_strided_slice %416 {offsets = [0, 0], sizes = [2, 32], strides = [1, 1]} : vector<2x96xf32> to vector<2x32xf32>
    %420 = arith.addf %418, %419 : vector<2x32xf32>
    %421 = arith.negf %420 : vector<2x32xf32>
    %422 = math.exp %421 : vector<2x32xf32>
    %cst_91 = arith.constant 1.000000e+00 : f32
    %423 = vector.broadcast %cst_91 : f32 to vector<2x32xf32>
    %424 = arith.addf %423, %422 : vector<2x32xf32>
    %425 = arith.divf %423, %424 : vector<2x32xf32>
    %426 = vector.extract_strided_slice %384 {offsets = [0, 32], sizes = [2, 32], strides = [1, 1]} : vector<2x96xf32> to vector<2x32xf32>
    %427 = vector.extract_strided_slice %416 {offsets = [0, 32], sizes = [2, 32], strides = [1, 1]} : vector<2x96xf32> to vector<2x32xf32>
    %428 = arith.addf %426, %427 : vector<2x32xf32>
    %429 = arith.negf %428 : vector<2x32xf32>
    %430 = math.exp %429 : vector<2x32xf32>
    %cst_92 = arith.constant 1.000000e+00 : f32
    %431 = vector.broadcast %cst_92 : f32 to vector<2x32xf32>
    %432 = arith.addf %431, %430 : vector<2x32xf32>
    %433 = arith.divf %431, %432 : vector<2x32xf32>
    %434 = vector.extract_strided_slice %384 {offsets = [0, 64], sizes = [2, 32], strides = [1, 1]} : vector<2x96xf32> to vector<2x32xf32>
    %435 = vector.extract_strided_slice %416 {offsets = [0, 64], sizes = [2, 32], strides = [1, 1]} : vector<2x96xf32> to vector<2x32xf32>
    %436 = arith.mulf %425, %435 : vector<2x32xf32>
    %437 = arith.addf %434, %436 : vector<2x32xf32>
    %438 = math.tanh %437 : vector<2x32xf32>
    %cst_93 = arith.constant 1.000000e+00 : f32
    %439 = vector.broadcast %cst_93 : f32 to vector<2x32xf32>
    %440 = arith.subf %439, %433 : vector<2x32xf32>
    %441 = arith.mulf %440, %438 : vector<2x32xf32>
    %442 = arith.mulf %433, %417 : vector<2x32xf32>
    %443 = arith.addf %441, %442 : vector<2x32xf32>
    %444 = arith.index_cast %c5_i32 : i32 to index
    %c0_94 = arith.constant 0 : index
    %c0_95 = arith.constant 0 : index
    %445 = vector.load %arg5[%444, %c0_94, %c0_95] : memref<8x2x32xf32, #tpu.memory_space<vmem>>, vector<1x2x32xf32>
    %446 = vector.shape_cast %445 : vector<1x2x32xf32> to vector<2x32xf32>
    %447 = vector.shape_cast %415 : vector<2x32xf32> to vector<1x2x32xf32>
    tpu.vector_store %arg5[%444, %c0_94, %c0_95], %447 {strides = array<i32>} : memref<8x2x32xf32, #tpu.memory_space<vmem>>, vector<1x2x32xf32>,
    %448 = arith.index_cast %378 : i32 to index
    %c0_96 = arith.constant 0 : index
    %c0_97 = arith.constant 0 : index
    %449 = vector.load %arg6[%448, %c0_96, %c0_97] : memref<8x2x32xf32, #tpu.memory_space<vmem>>, vector<1x2x32xf32>
    %450 = vector.shape_cast %449 : vector<1x2x32xf32> to vector<2x32xf32>
    %451 = vector.shape_cast %443 : vector<2x32xf32> to vector<1x2x32xf32>
    tpu.vector_store %arg6[%448, %c0_96, %c0_97], %451 {strides = array<i32>} : memref<8x2x32xf32, #tpu.memory_space<vmem>>, vector<1x2x32xf32>,
    %452 = tpu.concatenate %415, %443 in 1 : vector<2x32xf32>, vector<2x32xf32> -> vector<2x64xf32>
    %c6_i32 = arith.constant 6 : i32
    %c7_i32_98 = arith.constant 7 : i32
    %453 = arith.subi %c7_i32_98, %c6_i32 : i32
    %454 = arith.index_cast %c6_i32 : i32 to index
    %c0_99 = arith.constant 0 : index
    %c0_100 = arith.constant 0 : index
    %455 = vector.load %arg1[%454, %c0_99, %c0_100] : memref<8x2x96xf32, #tpu.memory_space<vmem>>, vector<1x2x96xf32>
    %456 = vector.shape_cast %455 : vector<1x2x96xf32> to vector<2x96xf32>
    %457 = arith.index_cast %453 : i32 to index
    %c0_101 = arith.constant 0 : index
    %c0_102 = arith.constant 0 : index
    %458 = vector.load %arg2[%457, %c0_101, %c0_102] : memref<8x2x96xf32, #tpu.memory_space<vmem>>, vector<1x2x96xf32>
    %459 = vector.shape_cast %458 : vector<1x2x96xf32> to vector<2x96xf32>
    %cst_103 = arith.constant dense<0.000000e+00> : vector<2x192xf32>
    %460 = tpu.matmul %452, %0, %cst_103 {dimension_numbers = #tpu.dot_dimension_numbers<[1], [0], [0], [1], [0, 0, 1, 1], [], []>} : vector<2x64xf32>, vector<64x192xf32>, vector<2x192xf32> -> vector<2x192xf32>
    %461 = vector.broadcast %1 : vector<1x192xf32> to vector<2x192xf32>
    %462 = arith.addf %460, %461 : vector<2x192xf32>
    %463 = vector.extract_strided_slice %462 {offsets = [0, 0], sizes = [2, 96], strides = [1, 1]} : vector<2x192xf32> to vector<2x96xf32>
    %464 = vector.extract_strided_slice %452 {offsets = [0, 0], sizes = [2, 32], strides = [1, 1]} : vector<2x64xf32> to vector<2x32xf32>
    %465 = vector.extract_strided_slice %456 {offsets = [0, 0], sizes = [2, 32], strides = [1, 1]} : vector<2x96xf32> to vector<2x32xf32>
    %466 = vector.extract_strided_slice %463 {offsets = [0, 0], sizes = [2, 32], strides = [1, 1]} : vector<2x96xf32> to vector<2x32xf32>
    %467 = arith.addf %465, %466 : vector<2x32xf32>
    %468 = arith.negf %467 : vector<2x32xf32>
    %469 = math.exp %468 : vector<2x32xf32>
    %cst_104 = arith.constant 1.000000e+00 : f32
    %470 = vector.broadcast %cst_104 : f32 to vector<2x32xf32>
    %471 = arith.addf %470, %469 : vector<2x32xf32>
    %472 = arith.divf %470, %471 : vector<2x32xf32>
    %473 = vector.extract_strided_slice %456 {offsets = [0, 32], sizes = [2, 32], strides = [1, 1]} : vector<2x96xf32> to vector<2x32xf32>
    %474 = vector.extract_strided_slice %463 {offsets = [0, 32], sizes = [2, 32], strides = [1, 1]} : vector<2x96xf32> to vector<2x32xf32>
    %475 = arith.addf %473, %474 : vector<2x32xf32>
    %476 = arith.negf %475 : vector<2x32xf32>
    %477 = math.exp %476 : vector<2x32xf32>
    %cst_105 = arith.constant 1.000000e+00 : f32
    %478 = vector.broadcast %cst_105 : f32 to vector<2x32xf32>
    %479 = arith.addf %478, %477 : vector<2x32xf32>
    %480 = arith.divf %478, %479 : vector<2x32xf32>
    %481 = vector.extract_strided_slice %456 {offsets = [0, 64], sizes = [2, 32], strides = [1, 1]} : vector<2x96xf32> to vector<2x32xf32>
    %482 = vector.extract_strided_slice %463 {offsets = [0, 64], sizes = [2, 32], strides = [1, 1]} : vector<2x96xf32> to vector<2x32xf32>
    %483 = arith.mulf %472, %482 : vector<2x32xf32>
    %484 = arith.addf %481, %483 : vector<2x32xf32>
    %485 = math.tanh %484 : vector<2x32xf32>
    %cst_106 = arith.constant 1.000000e+00 : f32
    %486 = vector.broadcast %cst_106 : f32 to vector<2x32xf32>
    %487 = arith.subf %486, %480 : vector<2x32xf32>
    %488 = arith.mulf %487, %485 : vector<2x32xf32>
    %489 = arith.mulf %480, %464 : vector<2x32xf32>
    %490 = arith.addf %488, %489 : vector<2x32xf32>
    %491 = vector.extract_strided_slice %462 {offsets = [0, 96], sizes = [2, 96], strides = [1, 1]} : vector<2x192xf32> to vector<2x96xf32>
    %492 = vector.extract_strided_slice %452 {offsets = [0, 32], sizes = [2, 32], strides = [1, 1]} : vector<2x64xf32> to vector<2x32xf32>
    %493 = vector.extract_strided_slice %459 {offsets = [0, 0], sizes = [2, 32], strides = [1, 1]} : vector<2x96xf32> to vector<2x32xf32>
    %494 = vector.extract_strided_slice %491 {offsets = [0, 0], sizes = [2, 32], strides = [1, 1]} : vector<2x96xf32> to vector<2x32xf32>
    %495 = arith.addf %493, %494 : vector<2x32xf32>
    %496 = arith.negf %495 : vector<2x32xf32>
    %497 = math.exp %496 : vector<2x32xf32>
    %cst_107 = arith.constant 1.000000e+00 : f32
    %498 = vector.broadcast %cst_107 : f32 to vector<2x32xf32>
    %499 = arith.addf %498, %497 : vector<2x32xf32>
    %500 = arith.divf %498, %499 : vector<2x32xf32>
    %501 = vector.extract_strided_slice %459 {offsets = [0, 32], sizes = [2, 32], strides = [1, 1]} : vector<2x96xf32> to vector<2x32xf32>
    %502 = vector.extract_strided_slice %491 {offsets = [0, 32], sizes = [2, 32], strides = [1, 1]} : vector<2x96xf32> to vector<2x32xf32>
    %503 = arith.addf %501, %502 : vector<2x32xf32>
    %504 = arith.negf %503 : vector<2x32xf32>
    %505 = math.exp %504 : vector<2x32xf32>
    %cst_108 = arith.constant 1.000000e+00 : f32
    %506 = vector.broadcast %cst_108 : f32 to vector<2x32xf32>
    %507 = arith.addf %506, %505 : vector<2x32xf32>
    %508 = arith.divf %506, %507 : vector<2x32xf32>
    %509 = vector.extract_strided_slice %459 {offsets = [0, 64], sizes = [2, 32], strides = [1, 1]} : vector<2x96xf32> to vector<2x32xf32>
    %510 = vector.extract_strided_slice %491 {offsets = [0, 64], sizes = [2, 32], strides = [1, 1]} : vector<2x96xf32> to vector<2x32xf32>
    %511 = arith.mulf %500, %510 : vector<2x32xf32>
    %512 = arith.addf %509, %511 : vector<2x32xf32>
    %513 = math.tanh %512 : vector<2x32xf32>
    %cst_109 = arith.constant 1.000000e+00 : f32
    %514 = vector.broadcast %cst_109 : f32 to vector<2x32xf32>
    %515 = arith.subf %514, %508 : vector<2x32xf32>
    %516 = arith.mulf %515, %513 : vector<2x32xf32>
    %517 = arith.mulf %508, %492 : vector<2x32xf32>
    %518 = arith.addf %516, %517 : vector<2x32xf32>
    %519 = arith.index_cast %c6_i32 : i32 to index
    %c0_110 = arith.constant 0 : index
    %c0_111 = arith.constant 0 : index
    %520 = vector.load %arg5[%519, %c0_110, %c0_111] : memref<8x2x32xf32, #tpu.memory_space<vmem>>, vector<1x2x32xf32>
    %521 = vector.shape_cast %520 : vector<1x2x32xf32> to vector<2x32xf32>
    %522 = vector.shape_cast %490 : vector<2x32xf32> to vector<1x2x32xf32>
    tpu.vector_store %arg5[%519, %c0_110, %c0_111], %522 {strides = array<i32>} : memref<8x2x32xf32, #tpu.memory_space<vmem>>, vector<1x2x32xf32>,
    %523 = arith.index_cast %453 : i32 to index
    %c0_112 = arith.constant 0 : index
    %c0_113 = arith.constant 0 : index
    %524 = vector.load %arg6[%523, %c0_112, %c0_113] : memref<8x2x32xf32, #tpu.memory_space<vmem>>, vector<1x2x32xf32>
    %525 = vector.shape_cast %524 : vector<1x2x32xf32> to vector<2x32xf32>
    %526 = vector.shape_cast %518 : vector<2x32xf32> to vector<1x2x32xf32>
    tpu.vector_store %arg6[%523, %c0_112, %c0_113], %526 {strides = array<i32>} : memref<8x2x32xf32, #tpu.memory_space<vmem>>, vector<1x2x32xf32>,
    %527 = tpu.concatenate %490, %518 in 1 : vector<2x32xf32>, vector<2x32xf32> -> vector<2x64xf32>
    %c7_i32_114 = arith.constant 7 : i32
    %c7_i32_115 = arith.constant 7 : i32
    %528 = arith.subi %c7_i32_115, %c7_i32_114 : i32
    %529 = arith.index_cast %c7_i32_114 : i32 to index
    %c0_116 = arith.constant 0 : index
    %c0_117 = arith.constant 0 : index
    %530 = vector.load %arg1[%529, %c0_116, %c0_117] : memref<8x2x96xf32, #tpu.memory_space<vmem>>, vector<1x2x96xf32>
    %531 = vector.shape_cast %530 : vector<1x2x96xf32> to vector<2x96xf32>
    %532 = arith.index_cast %528 : i32 to index
    %c0_118 = arith.constant 0 : index
    %c0_119 = arith.constant 0 : index
    %533 = vector.load %arg2[%532, %c0_118, %c0_119] : memref<8x2x96xf32, #tpu.memory_space<vmem>>, vector<1x2x96xf32>
    %534 = vector.shape_cast %533 : vector<1x2x96xf32> to vector<2x96xf32>
    %cst_120 = arith.constant dense<0.000000e+00> : vector<2x192xf32>
    %535 = tpu.matmul %527, %0, %cst_120 {dimension_numbers = #tpu.dot_dimension_numbers<[1], [0], [0], [1], [0, 0, 1, 1], [], []>} : vector<2x64xf32>, vector<64x192xf32>, vector<2x192xf32> -> vector<2x192xf32>
    %536 = vector.broadcast %1 : vector<1x192xf32> to vector<2x192xf32>
    %537 = arith.addf %535, %536 : vector<2x192xf32>
    %538 = vector.extract_strided_slice %537 {offsets = [0, 0], sizes = [2, 96], strides = [1, 1]} : vector<2x192xf32> to vector<2x96xf32>
    %539 = vector.extract_strided_slice %527 {offsets = [0, 0], sizes = [2, 32], strides = [1, 1]} : vector<2x64xf32> to vector<2x32xf32>
    %540 = vector.extract_strided_slice %531 {offsets = [0, 0], sizes = [2, 32], strides = [1, 1]} : vector<2x96xf32> to vector<2x32xf32>
    %541 = vector.extract_strided_slice %538 {offsets = [0, 0], sizes = [2, 32], strides = [1, 1]} : vector<2x96xf32> to vector<2x32xf32>
    %542 = arith.addf %540, %541 : vector<2x32xf32>
    %543 = arith.negf %542 : vector<2x32xf32>
    %544 = math.exp %543 : vector<2x32xf32>
    %cst_121 = arith.constant 1.000000e+00 : f32
    %545 = vector.broadcast %cst_121 : f32 to vector<2x32xf32>
    %546 = arith.addf %545, %544 : vector<2x32xf32>
    %547 = arith.divf %545, %546 : vector<2x32xf32>
    %548 = vector.extract_strided_slice %531 {offsets = [0, 32], sizes = [2, 32], strides = [1, 1]} : vector<2x96xf32> to vector<2x32xf32>
    %549 = vector.extract_strided_slice %538 {offsets = [0, 32], sizes = [2, 32], strides = [1, 1]} : vector<2x96xf32> to vector<2x32xf32>
    %550 = arith.addf %548, %549 : vector<2x32xf32>
    %551 = arith.negf %550 : vector<2x32xf32>
    %552 = math.exp %551 : vector<2x32xf32>
    %cst_122 = arith.constant 1.000000e+00 : f32
    %553 = vector.broadcast %cst_122 : f32 to vector<2x32xf32>
    %554 = arith.addf %553, %552 : vector<2x32xf32>
    %555 = arith.divf %553, %554 : vector<2x32xf32>
    %556 = vector.extract_strided_slice %531 {offsets = [0, 64], sizes = [2, 32], strides = [1, 1]} : vector<2x96xf32> to vector<2x32xf32>
    %557 = vector.extract_strided_slice %538 {offsets = [0, 64], sizes = [2, 32], strides = [1, 1]} : vector<2x96xf32> to vector<2x32xf32>
    %558 = arith.mulf %547, %557 : vector<2x32xf32>
    %559 = arith.addf %556, %558 : vector<2x32xf32>
    %560 = math.tanh %559 : vector<2x32xf32>
    %cst_123 = arith.constant 1.000000e+00 : f32
    %561 = vector.broadcast %cst_123 : f32 to vector<2x32xf32>
    %562 = arith.subf %561, %555 : vector<2x32xf32>
    %563 = arith.mulf %562, %560 : vector<2x32xf32>
    %564 = arith.mulf %555, %539 : vector<2x32xf32>
    %565 = arith.addf %563, %564 : vector<2x32xf32>
    %566 = vector.extract_strided_slice %537 {offsets = [0, 96], sizes = [2, 96], strides = [1, 1]} : vector<2x192xf32> to vector<2x96xf32>
    %567 = vector.extract_strided_slice %527 {offsets = [0, 32], sizes = [2, 32], strides = [1, 1]} : vector<2x64xf32> to vector<2x32xf32>
    %568 = vector.extract_strided_slice %534 {offsets = [0, 0], sizes = [2, 32], strides = [1, 1]} : vector<2x96xf32> to vector<2x32xf32>
    %569 = vector.extract_strided_slice %566 {offsets = [0, 0], sizes = [2, 32], strides = [1, 1]} : vector<2x96xf32> to vector<2x32xf32>
    %570 = arith.addf %568, %569 : vector<2x32xf32>
    %571 = arith.negf %570 : vector<2x32xf32>
    %572 = math.exp %571 : vector<2x32xf32>
    %cst_124 = arith.constant 1.000000e+00 : f32
    %573 = vector.broadcast %cst_124 : f32 to vector<2x32xf32>
    %574 = arith.addf %573, %572 : vector<2x32xf32>
    %575 = arith.divf %573, %574 : vector<2x32xf32>
    %576 = vector.extract_strided_slice %534 {offsets = [0, 32], sizes = [2, 32], strides = [1, 1]} : vector<2x96xf32> to vector<2x32xf32>
    %577 = vector.extract_strided_slice %566 {offsets = [0, 32], sizes = [2, 32], strides = [1, 1]} : vector<2x96xf32> to vector<2x32xf32>
    %578 = arith.addf %576, %577 : vector<2x32xf32>
    %579 = arith.negf %578 : vector<2x32xf32>
    %580 = math.exp %579 : vector<2x32xf32>
    %cst_125 = arith.constant 1.000000e+00 : f32
    %581 = vector.broadcast %cst_125 : f32 to vector<2x32xf32>
    %582 = arith.addf %581, %580 : vector<2x32xf32>
    %583 = arith.divf %581, %582 : vector<2x32xf32>
    %584 = vector.extract_strided_slice %534 {offsets = [0, 64], sizes = [2, 32], strides = [1, 1]} : vector<2x96xf32> to vector<2x32xf32>
    %585 = vector.extract_strided_slice %566 {offsets = [0, 64], sizes = [2, 32], strides = [1, 1]} : vector<2x96xf32> to vector<2x32xf32>
    %586 = arith.mulf %575, %585 : vector<2x32xf32>
    %587 = arith.addf %584, %586 : vector<2x32xf32>
    %588 = math.tanh %587 : vector<2x32xf32>
    %cst_126 = arith.constant 1.000000e+00 : f32
    %589 = vector.broadcast %cst_126 : f32 to vector<2x32xf32>
    %590 = arith.subf %589, %583 : vector<2x32xf32>
    %591 = arith.mulf %590, %588 : vector<2x32xf32>
    %592 = arith.mulf %583, %567 : vector<2x32xf32>
    %593 = arith.addf %591, %592 : vector<2x32xf32>
    %594 = arith.index_cast %c7_i32_114 : i32 to index
    %c0_127 = arith.constant 0 : index
    %c0_128 = arith.constant 0 : index
    %595 = vector.load %arg5[%594, %c0_127, %c0_128] : memref<8x2x32xf32, #tpu.memory_space<vmem>>, vector<1x2x32xf32>
    %596 = vector.shape_cast %595 : vector<1x2x32xf32> to vector<2x32xf32>
    %597 = vector.shape_cast %565 : vector<2x32xf32> to vector<1x2x32xf32>
    tpu.vector_store %arg5[%594, %c0_127, %c0_128], %597 {strides = array<i32>} : memref<8x2x32xf32, #tpu.memory_space<vmem>>, vector<1x2x32xf32>,
    %598 = arith.index_cast %528 : i32 to index
    %c0_129 = arith.constant 0 : index
    %c0_130 = arith.constant 0 : index
    %599 = vector.load %arg6[%598, %c0_129, %c0_130] : memref<8x2x32xf32, #tpu.memory_space<vmem>>, vector<1x2x32xf32>
    %600 = vector.shape_cast %599 : vector<1x2x32xf32> to vector<2x32xf32>
    %601 = vector.shape_cast %593 : vector<2x32xf32> to vector<1x2x32xf32>
    tpu.vector_store %arg6[%598, %c0_129, %c0_130], %601 {strides = array<i32>} : memref<8x2x32xf32, #tpu.memory_space<vmem>>, vector<1x2x32xf32>,
    %602 = tpu.concatenate %565, %593 in 1 : vector<2x32xf32>, vector<2x32xf32> -> vector<2x64xf32>
    %c8_i32 = arith.constant 8 : i32
    return
  }
  func.func @transform_0(%arg0: i32) -> (i32, i32, i32) {
    %c0_i32 = arith.constant 0 : i32
    %c0_i32_0 = arith.constant 0 : i32
    %c0_i32_1 = arith.constant 0 : i32
    %c0_i32_2 = arith.constant 0 : i32
    return %c0_i32, %c0_i32_0, %c0_i32_1 : i32, i32, i32
  }
  func.func @transform_1(%arg0: i32) -> (i32, i32, i32) {
    %c0_i32 = arith.constant 0 : i32
    %c0_i32_0 = arith.constant 0 : i32
    %c0_i32_1 = arith.constant 0 : i32
    %c0_i32_2 = arith.constant 0 : i32
    return %c0_i32, %c0_i32_0, %c0_i32_1 : i32, i32, i32
  }
  func.func @transform_2(%arg0: i32) -> (i32, i32) {
    %c0_i32 = arith.constant 0 : i32
    %c0_i32_0 = arith.constant 0 : i32
    %c0_i32_1 = arith.constant 0 : i32
    return %c0_i32, %c0_i32_0 : i32, i32
  }
  func.func @transform_3(%arg0: i32) -> (i32, i32) {
    %c0_i32 = arith.constant 0 : i32
    %c0_i32_0 = arith.constant 0 : i32
    %c0_i32_1 = arith.constant 0 : i32
    return %c0_i32, %c0_i32_0 : i32, i32
  }
  func.func @transform_4(%arg0: i32) -> (i32, i32, i32) {
    %c0_i32 = arith.constant 0 : i32
    %c0_i32_0 = arith.constant 0 : i32
    %c0_i32_1 = arith.constant 0 : i32
    %c0_i32_2 = arith.constant 0 : i32
    return %c0_i32, %c0_i32_0, %c0_i32_1 : i32, i32, i32
  }
  func.func @transform_5(%arg0: i32) -> (i32, i32, i32) {
    %c0_i32 = arith.constant 0 : i32
    %c0_i32_0 = arith.constant 0 : i32
    %c0_i32_1 = arith.constant 0 : i32
    %c0_i32_2 = arith.constant 0 : i32
    return %c0_i32, %c0_i32_0, %c0_i32_1 : i32, i32, i32
  }
}

module attributes {stable_mosaic.version = 11 : i64} {
  func.func @_linear_kernel(%arg0: i32, %arg1: memref<16x64xf32, #tpu.memory_space<vmem>>, %arg2: memref<64x32xf32, #tpu.memory_space<vmem>>, %arg3: memref<1x32xf32, #tpu.memory_space<vmem>>, %arg4: memref<16x32xf32, #tpu.memory_space<vmem>>) attributes {dimension_semantics = [#tpu.dimension_semantics<arbitrary>], iteration_bounds = array<i64: 1>, scalar_prefetch = 0 : i64, scratch_operands = 0 : i64, tpu.core_type = #tpu.core_type<tc>, window_params = [{pipeline_mode = #tpu.pipeline_mode<synchronous>, transform_indices = @transform_0, window_bounds = array<i64: 16, 64>}, {pipeline_mode = #tpu.pipeline_mode<synchronous>, transform_indices = @transform_1, window_bounds = array<i64: 64, 32>}, {pipeline_mode = #tpu.pipeline_mode<synchronous>, transform_indices = @transform_2, window_bounds = array<i64: 1, 32>}, {pipeline_mode = #tpu.pipeline_mode<synchronous>, transform_indices = @transform_3, window_bounds = array<i64: 16, 32>}]} {
    %c0 = arith.constant 0 : index
    %c0_0 = arith.constant 0 : index
    %0 = vector.load %arg1[%c0, %c0_0] : memref<16x64xf32, #tpu.memory_space<vmem>>, vector<16x64xf32>
    %c0_1 = arith.constant 0 : index
    %c0_2 = arith.constant 0 : index
    %1 = vector.load %arg2[%c0_1, %c0_2] : memref<64x32xf32, #tpu.memory_space<vmem>>, vector<64x32xf32>
    %cst = arith.constant dense<0.000000e+00> : vector<16x32xf32>
    %2 = tpu.matmul %0, %1, %cst {dimension_numbers = #tpu.dot_dimension_numbers<[1], [0], [0], [1], [0, 0, 1, 1], [], []>} : vector<16x64xf32>, vector<64x32xf32>, vector<16x32xf32> -> vector<16x32xf32>
    %c0_3 = arith.constant 0 : index
    %c0_4 = arith.constant 0 : index
    %3 = vector.load %arg3[%c0_3, %c0_4] : memref<1x32xf32, #tpu.memory_space<vmem>>, vector<1x32xf32>
    %4 = vector.broadcast %3 : vector<1x32xf32> to vector<16x32xf32>
    %5 = arith.addf %2, %4 : vector<16x32xf32>
    %c0_5 = arith.constant 0 : index
    %c0_6 = arith.constant 0 : index
    %6 = vector.load %arg4[%c0_5, %c0_6] : memref<16x32xf32, #tpu.memory_space<vmem>>, vector<16x32xf32>
    tpu.vector_store %arg4[%c0_5, %c0_6], %5 {strides = array<i32>} : memref<16x32xf32, #tpu.memory_space<vmem>>, vector<16x32xf32>,
    return
  }
  func.func @transform_0(%arg0: i32) -> (i32, i32) {
    %c0_i32 = arith.constant 0 : i32
    %c0_i32_0 = arith.constant 0 : i32
    %c0_i32_1 = arith.constant 0 : i32
    return %c0_i32, %c0_i32_0 : i32, i32
  }
  func.func @transform_1(%arg0: i32) -> (i32, i32) {
    %c0_i32 = arith.constant 0 : i32
    %c0_i32_0 = arith.constant 0 : i32
    %c0_i32_1 = arith.constant 0 : i32
    return %c0_i32, %c0_i32_0 : i32, i32
  }
  func.func @transform_2(%arg0: i32) -> (i32, i32) {
    %c0_i32 = arith.constant 0 : i32
    %c0_i32_0 = arith.constant 0 : i32
    %c0_i32_1 = arith.constant 0 : i32
    return %c0_i32, %c0_i32_0 : i32, i32
  }
  func.func @transform_3(%arg0: i32) -> (i32, i32) {
    %c0_i32 = arith.constant 0 : i32
    %c0_i32_0 = arith.constant 0 : i32
    %c0_i32_1 = arith.constant 0 : i32
    return %c0_i32, %c0_i32_0 : i32, i32
  }
}

</mosaic_0001>

<llo_original>
// kernel: tacotron_encoder.7
$region0: #{tacotron_encoder.7}
  #allocation0 [shape = 'u32[]', space=smem, size = 0x4, offset = 0x4, fixed_abs, tag = 'smem constant byte address 0x4 - core index']
  #allocation1 [shape = 'u32[144,128]{1,0:T(1,128)}', space=vmem, size = 0x12000, scoped, tag = 'internal scratch']
  %s0 = inlined_call_operand.vmem [shape: f32[16,32], index: 0, kind: input, shape index: {}]
  %s1 = inlined_call_operand.vmem [shape: f32[2,32,64], index: 1, kind: input, shape index: {}]
  %s2 = inlined_call_operand.vmem [shape: f32[2,1,64], index: 2, kind: input, shape index: {}]
  %s3 = inlined_call_operand.vmem [shape: f32[32,192], index: 3, kind: input, shape index: {}]
  %s4 = inlined_call_operand.vmem [shape: f32[1,192], index: 4, kind: input, shape index: {}]
  %s5 = inlined_call_operand.vmem [shape: f32[16,192], index: 5, kind: output, shape index: {}]
  %s6 = sld [smem:[#allocation0]]
  $region30: #{tacotron_encoder.7} parent=0
    _
  %s8 = ssub.s32 1, %s6
  %s9 = scalar_select 0, %s8, %s6
  // Predicated region
  $region2: #{tacotron_encoder.7} parent=0 // pred_check
    _
  $region3: #{tacotron_encoder.7} parent=0 // pred_check_branch
    %11 = sbr.rel (0) target = $region5
  $region4: #{tacotron_encoder.7} parent=0 // pred_region
    _
  $region5: #{tacotron_encoder.7} parent=0 // pred_fallthru
    _
  // Predicated region
  $region6: #{tacotron_encoder.7} parent=0 // pred_check
    _
  $region7: #{tacotron_encoder.7} parent=0 // pred_check_branch
    %13 = sbr.rel (0) target = $region9
  $region8: #{tacotron_encoder.7} parent=0 // pred_region
    _
  $region9: #{tacotron_encoder.7} parent=0 // pred_fallthru
    _
  // Predicated region
  $region10: #{tacotron_encoder.7} parent=0 // pred_check
    _
  $region11: #{tacotron_encoder.7} parent=0 // pred_check_branch
    %15 = sbr.rel (0) target = $region13
  $region12: #{tacotron_encoder.7} parent=0 // pred_region
    _
  $region13: #{tacotron_encoder.7} parent=0 // pred_fallthru
    _
  // Predicated region
  $region14: #{tacotron_encoder.7} parent=0 // pred_check
    _
  $region15: #{tacotron_encoder.7} parent=0 // pred_check_branch
    %17 = sbr.rel (0) target = $region17
  $region16: #{tacotron_encoder.7} parent=0 // pred_region
    _
  $region17: #{tacotron_encoder.7} parent=0 // pred_fallthru
    _
  // Predicated region
  $region18: #{tacotron_encoder.7} parent=0 // pred_check
    _
  $region19: #{tacotron_encoder.7} parent=0 // pred_check_branch
    %19 = sbr.rel (0) target = $region21
  $region20: #{tacotron_encoder.7} parent=0 // pred_region
    _
  $region21: #{tacotron_encoder.7} parent=0 // pred_fallthru
    _
  %v20 = vld [vmem:[%s0] sm:$0xff]
  %v21 = vld [vmem:[%s0 + $0x8] sm:$0xff]
  %v22 = vld [vmem:[%s1] sm:$0xff]
  %v23 = vld [vmem:[%s1 + $0x8] sm:$0xff]
  %v24 = vld [vmem:[%s1 + $0x10] sm:$0xff]
  %v25 = vld [vmem:[%s1 + $0x18] sm:$0xff]
  %v26 = vld [vmem:[%s2] sm:$0x1]
  %v28 = vlaneseq
  %v29 = vshrl.u32 %v28, 7
  %v30 = vsub.s32 0, %v29
  %v31 = vrot.slane %v26, %v30
  %vm33 = vcmask 261120
  %v35 = vsel %vm33, %v20, 0
  %v38 = vsel %vm33, %v21, 0
  %40 = vmatprep.subr.mxu0 0.0
  %41 = vmatpush1.msra.mxu0 %v22
  %42 = vmatprep.subr.mxu0 0.0
  %43 = vmatpush1.msra.mxu0 %v23
  %44 = vmatprep.subr.mxu0 0.0
  %45 = vmatpush1.msra.mxu0 %v24
  %46 = vmatprep.subr.mxu0 0.0
  %47 = vmatpush1.msra.mxu0 %v25
  %48 = vmatprep.subr.mxu0 0.0
  %49 = vmatpush1.msra.mxu0 0.0
  %50 = vmatprep.subr.mxu0 0.0
  %51 = vmatpush1.msra.mxu0 0.0
  %52 = vmatprep.subr.mxu0 0.0
  %53 = vmatpush1.msra.mxu0 0.0
  %54 = vmatprep.subr.mxu0 0.0
  %55 = vmatpush1.msra.mxu0 0.0
  %56 = vmatprep.subr.mxu0 0.0
  %57 = vmatpush1.msra.mxu0 0.0
  %58 = vmatprep.subr.mxu0 0.0
  %59 = vmatpush1.msra.mxu0 0.0
  %60 = vmatprep.subr.mxu0 0.0
  %61 = vmatpush1.msra.mxu0 0.0
  %62 = vmatprep.subr.mxu0 0.0
  %63 = vmatpush1.msra.mxu0 0.0
  %64 = vmatprep.subr.mxu0 0.0
  %65 = vmatpush1.msra.mxu0 0.0
  %66 = vmatprep.subr.mxu0 0.0
  %67 = vmatpush1.msra.mxu0 0.0
  %68 = vmatprep.subr.mxu0 0.0
  %69 = vmatpush1.msra.mxu0 0.0
  %70 = vmatprep.subr.mxu0 0.0
  %71 = vmatpush1.msra.mxu0 0.0
  %72 = vmatprep.subr.mxu0 0.0
  %73 = vmatpush1.msra.mxu0 0.0
  %74 = vmatprep.subr.mxu0 0.0
  %75 = vmatpush1.msra.mxu0 0.0
  %76 = vmatprep.subr.mxu0 0.0
  %77 = vmatpush1.msra.mxu0 0.0
  %78 = vmatprep.subr.mxu0 0.0
  %79 = vmatpush1.msra.mxu0 0.0
  %80 = vmatprep.subr.mxu0 0.0
  %81 = vmatpush1.msra.mxu0 0.0
  %82 = vmatprep.subr.mxu0 0.0
  %83 = vmatpush1.msra.mxu0 0.0
  %84 = vmatprep.subr.mxu0 0.0
  %85 = vmatpush1.msra.mxu0 0.0
  %86 = vmatprep.subr.mxu0 0.0
  %87 = vmatpush1.msra.mxu0 0.0
  %88 = vmatprep.subr.mxu0 0.0
  %89 = vmatpush1.msra.mxu0 0.0
  %90 = vmatprep.subr.mxu0 0.0
  %91 = vmatpush1.msra.mxu0 0.0
  %92 = vmatprep.subr.mxu0 0.0
  %93 = vmatpush1.msra.mxu0 0.0
  %94 = vmatprep.subr.mxu0 0.0
  %95 = vmatpush1.msra.mxu0 0.0
  %96 = vmatprep.subr.mxu0 0.0
  %97 = vmatpush1.msra.mxu0 0.0
  %98 = vmatprep.subr.mxu0 0.0
  %99 = vmatpush1.msra.mxu0 0.0
  %100 = vmatprep.subr.mxu0 0.0
  %101 = vmatpush1.msra.mxu0 0.0
  %102 = vmatprep.subr.mxu0 0.0
  %103 = vmatpush1.msra.mxu0 0.0
  %104 = vmatprep.mubr.f32.mxu0 0.0
  %105 = vmatmul.mubr.f32.gmra.mrb[0].mxu0 %v35
  %v106 = vpop.f32.mrb[0].mxu0
  %v107 = vadd.f32 %v31, %v106
  %v108 = vpop.f32.mrb[0].mxu0
  %109 = vmatprep.mubr.f32.mxu0 0.0
  %110 = vmatmul.mubr.f32.gmra.mrb[0].mxu0 %v38
  %v111 = vpop.f32.mrb[0].mxu0
  %v112 = vadd.f32 %v31, %v111
  %v113 = vpop.f32.mrb[0].mxu0
  %114 = vdwg.mxu0
  %v115 = vxor.u32 %v107, 2147483648
  %v116 = vxor.u32 %v112, 2147483648
  %v117 = vmul.f32 %v115, 1.442695
  %v118 = vpow.pop %v117
  %v119 = vmul.f32 %v116, 1.442695
  %v120 = vpow.pop %v119
  %v121 = vadd.f32 %v118, 1.0
  %v122 = vadd.f32 %v120, 1.0
  %v123 = vrcp.pop %v121
  %v124 = vmul.f32 1.0, %v123
  %v125 = vrcp.pop %v122
  %v126 = vmul.f32 1.0, %v125
  %v127 = vmax.f32 %v107, 0.0
  %v128 = vmax.f32 %v112, 0.0
  %131 = vrot.lane.b32.xlu0 %v127, 32
  %v132 = vpop.permute.xlu0 %131
  %133 = vrot.lane.b32.xlu0 %v128, 32
  %v134 = vpop.permute.xlu0 %133
  %v137 = vmul.f32 %v124, %v132
  %v138 = vmul.f32 %v126, %v134
  %v139 = vsub.f32 1.0, %v124
  %v140 = vsub.f32 1.0, %v126
  %141 = vrot.lane.b32.xlu0 %v20, 32
  %v142 = vpop.permute.xlu0 %141
  %143 = vrot.lane.b32.xlu0 %v21, 32
  %v144 = vpop.permute.xlu0 %143
  %v147 = vmul.f32 %v139, %v142
  %v148 = vmul.f32 %v140, %v144
  %v149 = vadd.f32 %v137, %v147
  %v150 = vadd.f32 %v138, %v148
  %s151 = scalar_lea.vmem %s1, 32
  %v152 = vld [vmem:[%s151] sm:$0xff]
  %v153 = vld [vmem:[%s151 + $0x8] sm:$0xff]
  %v154 = vld [vmem:[%s151 + $0x10] sm:$0xff]
  %v155 = vld [vmem:[%s151 + $0x18] sm:$0xff]
  %s156 = scalar_lea.vmem %s2, 1
  %v157 = vld [vmem:[%s156] sm:$0x1]
  %v159 = vlaneseq
  %v160 = vshrl.u32 %v159, 7
  %v161 = vsub.s32 0, %v160
  %v162 = vrot.slane %v157, %v161
  %166 = vrot.lane.b32.xlu0 %v149, 96
  %v167 = vpop.permute.xlu0 %166
  %168 = vrot.lane.b32.xlu0 %v150, 96
  %v169 = vpop.permute.xlu0 %168
  %v170 = vsel %vm33, %v167, 0
  %v172 = vsel %vm33, %v169, 0
  %174 = vmatprep.subr.mxu0 0.0
  %175 = vmatpush1.msra.mxu0 %v152
  %176 = vmatprep.subr.mxu0 0.0
  %177 = vmatpush1.msra.mxu0 %v153
  %178 = vmatprep.subr.mxu0 0.0
  %179 = vmatpush1.msra.mxu0 %v154
  %180 = vmatprep.subr.mxu0 0.0
  %181 = vmatpush1.msra.mxu0 %v155
  %182 = vmatprep.subr.mxu0 0.0
  %183 = vmatpush1.msra.mxu0 0.0
  %184 = vmatprep.subr.mxu0 0.0
  %185 = vmatpush1.msra.mxu0 0.0
  %186 = vmatprep.subr.mxu0 0.0
  %187 = vmatpush1.msra.mxu0 0.0
  %188 = vmatprep.subr.mxu0 0.0
  %189 = vmatpush1.msra.mxu0 0.0
  %190 = vmatprep.subr.mxu0 0.0
  %191 = vmatpush1.msra.mxu0 0.0
  %192 = vmatprep.subr.mxu0 0.0
  %193 = vmatpush1.msra.mxu0 0.0
  %194 = vmatprep.subr.mxu0 0.0
  %195 = vmatpush1.msra.mxu0 0.0
  %196 = vmatprep.subr.mxu0 0.0
  %197 = vmatpush1.msra.mxu0 0.0
  %198 = vmatprep.subr.mxu0 0.0
  %199 = vmatpush1.msra.mxu0 0.0
  %200 = vmatprep.subr.mxu0 0.0
  %201 = vmatpush1.msra.mxu0 0.0
  %202 = vmatprep.subr.mxu0 0.0
  %203 = vmatpush1.msra.mxu0 0.0
  %204 = vmatprep.subr.mxu0 0.0
  %205 = vmatpush1.msra.mxu0 0.0
  %206 = vmatprep.subr.mxu0 0.0
  %207 = vmatpush1.msra.mxu0 0.0
  %208 = vmatprep.subr.mxu0 0.0
  %209 = vmatpush1.msra.mxu0 0.0
  %210 = vmatprep.subr.mxu0 0.0
  %211 = vmatpush1.msra.mxu0 0.0
  %212 = vmatprep.subr.mxu0 0.0
  %213 = vmatpush1.msra.mxu0 0.0
  %214 = vmatprep.subr.mxu0 0.0
  %215 = vmatpush1.msra.mxu0 0.0
  %216 = vmatprep.subr.mxu0 0.0
  %217 = vmatpush1.msra.mxu0 0.0
  %218 = vmatprep.subr.mxu0 0.0
  %219 = vmatpush1.msra.mxu0 0.0
  %220 = vmatprep.subr.mxu0 0.0
  %221 = vmatpush1.msra.mxu0 0.0
  %222 = vmatprep.subr.mxu0 0.0
  %223 = vmatpush1.msra.mxu0 0.0
  %224 = vmatprep.subr.mxu0 0.0
  %225 = vmatpush1.msra.mxu0 0.0
  %226 = vmatprep.subr.mxu0 0.0
  %227 = vmatpush1.msra.mxu0 0.0
  %228 = vmatprep.subr.mxu0 0.0
  %229 = vmatpush1.msra.mxu0 0.0
  %230 = vmatprep.subr.mxu0 0.0
  %231 = vmatpush1.msra.mxu0 0.0
  %232 = vmatprep.subr.mxu0 0.0
  %233 = vmatpush1.msra.mxu0 0.0
  %234 = vmatprep.subr.mxu0 0.0
  %235 = vmatpush1.msra.mxu0 0.0
  %236 = vmatprep.subr.mxu0 0.0
  %237 = vmatpush1.msra.mxu0 0.0
  %238 = vmatprep.mubr.f32.mxu0 0.0
  %239 = vmatmul.mubr.f32.gmra.mrb[0].mxu0 %v170
  %v240 = vpop.f32.mrb[0].mxu0
  %v241 = vadd.f32 %v162, %v240
  %v242 = vpop.f32.mrb[0].mxu0
  %243 = vmatprep.mubr.f32.mxu0 0.0
  %244 = vmatmul.mubr.f32.gmra.mrb[0].mxu0 %v172
  %v245 = vpop.f32.mrb[0].mxu0
  %v246 = vadd.f32 %v162, %v245
  %v247 = vpop.f32.mrb[0].mxu0
  %248 = vdwg.mxu0
  %v249 = vxor.u32 %v241, 2147483648
  %v250 = vxor.u32 %v246, 2147483648
  %v251 = vmul.f32 %v249, 1.442695
  %v252 = vpow.pop %v251
  %v253 = vmul.f32 %v250, 1.442695
  %v254 = vpow.pop %v253
  %v255 = vadd.f32 %v252, 1.0
  %v256 = vadd.f32 %v254, 1.0
  %v257 = vrcp.pop %v255
  %v258 = vmul.f32 1.0, %v257
  %v259 = vrcp.pop %v256
  %v260 = vmul.f32 1.0, %v259
  %v261 = vmax.f32 %v241, 0.0
  %v262 = vmax.f32 %v246, 0.0
  %265 = vrot.lane.b32.xlu0 %v261, 32
  %v266 = vpop.permute.xlu0 %265
  %267 = vrot.lane.b32.xlu0 %v262, 32
  %v268 = vpop.permute.xlu0 %267
  %v271 = vmul.f32 %v258, %v266
  %v272 = vmul.f32 %v260, %v268
  %v273 = vsub.f32 1.0, %v258
  %v274 = vsub.f32 1.0, %v260
  %v275 = vmul.f32 %v273, %v149
  %v276 = vmul.f32 %v274, %v150
  %v277 = vadd.f32 %v271, %v275
  %v278 = vadd.f32 %v272, %v276
  %v279 = vld [vmem:[%s3] sm:$0xff]
  %v280 = vld [vmem:[%s3 + $0x8] sm:$0xff]
  %v281 = vld [vmem:[%s3 + $0x10] sm:$0xff]
  %v282 = vld [vmem:[%s3 + $0x18] sm:$0xff]
  %v283 = vld [vmem:[%s3 + $0x20] sm:$0xff]
  %v284 = vld [vmem:[%s3 + $0x28] sm:$0xff]
  %v285 = vld [vmem:[%s3 + $0x30] sm:$0xff]
  %v286 = vld [vmem:[%s3 + $0x38] sm:$0xff]
  %v287 = vld [vmem:[%s4] sm:$0x3]
  %v289 = vlaneseq
  %v290 = vshrl.u32 %v289, 7
  %v291 = vsub.s32 0, %v290
  %v292 = vrot.slane %v287, %v291
  %v293 = vlaneseq
  %v294 = vshrl.u32 %v293, 7
  %v295 = vsub.s32 1, %v294
  %v296 = vrot.slane %v287, %v295
  %301 = vrot.lane.b32.xlu0 %v277, 96
  %v302 = vpop.permute.xlu0 %301
  %303 = vrot.lane.b32.xlu0 %v278, 96
  %v304 = vpop.permute.xlu0 %303
  %v305 = vsel %vm33, %v302, 0
  %v307 = vsel %vm33, %v304, 0
  %309 = vmatprep.subr.mxu0 %v280
  %310 = vmatpush1.msra.mxu0 %v279
  %311 = vmatprep.subr.mxu0 %v282
  %312 = vmatpush1.msra.mxu0 %v281
  %313 = vmatprep.subr.mxu0 %v284
  %314 = vmatpush1.msra.mxu0 %v283
  %315 = vmatprep.subr.mxu0 %v286
  %316 = vmatpush1.msra.mxu0 %v285
  %317 = vmatprep.subr.mxu0 0.0
  %318 = vmatpush1.msra.mxu0 0.0
  %319 = vmatprep.subr.mxu0 0.0
  %320 = vmatpush1.msra.mxu0 0.0
  %321 = vmatprep.subr.mxu0 0.0
  %322 = vmatpush1.msra.mxu0 0.0
  %323 = vmatprep.subr.mxu0 0.0
  %324 = vmatpush1.msra.mxu0 0.0
  %325 = vmatprep.subr.mxu0 0.0
  %326 = vmatpush1.msra.mxu0 0.0
  %327 = vmatprep.subr.mxu0 0.0
  %328 = vmatpush1.msra.mxu0 0.0
  %329 = vmatprep.subr.mxu0 0.0
  %330 = vmatpush1.msra.mxu0 0.0
  %331 = vmatprep.subr.mxu0 0.0
  %332 = vmatpush1.msra.mxu0 0.0
  %333 = vmatprep.subr.mxu0 0.0
  %334 = vmatpush1.msra.mxu0 0.0
  %335 = vmatprep.subr.mxu0 0.0
  %336 = vmatpush1.msra.mxu0 0.0
  %337 = vmatprep.subr.mxu0 0.0
  %338 = vmatpush1.msra.mxu0 0.0
  %339 = vmatprep.subr.mxu0 0.0
  %340 = vmatpush1.msra.mxu0 0.0
  %341 = vmatprep.subr.mxu0 0.0
  %342 = vmatpush1.msra.mxu0 0.0
  %343 = vmatprep.subr.mxu0 0.0
  %344 = vmatpush1.msra.mxu0 0.0
  %345 = vmatprep.subr.mxu0 0.0
  %346 = vmatpush1.msra.mxu0 0.0
  %347 = vmatprep.subr.mxu0 0.0
  %348 = vmatpush1.msra.mxu0 0.0
  %349 = vmatprep.subr.mxu0 0.0
  %350 = vmatpush1.msra.mxu0 0.0
  %351 = vmatprep.subr.mxu0 0.0
  %352 = vmatpush1.msra.mxu0 0.0
  %353 = vmatprep.subr.mxu0 0.0
  %354 = vmatpush1.msra.mxu0 0.0
  %355 = vmatprep.subr.mxu0 0.0
  %356 = vmatpush1.msra.mxu0 0.0
  %357 = vmatprep.subr.mxu0 0.0
  %358 = vmatpush1.msra.mxu0 0.0
  %359 = vmatprep.subr.mxu0 0.0
  %360 = vmatpush1.msra.mxu0 0.0
  %361 = vmatprep.subr.mxu0 0.0
  %362 = vmatpush1.msra.mxu0 0.0
  %363 = vmatprep.subr.mxu0 0.0
  %364 = vmatpush1.msra.mxu0 0.0
  %365 = vmatprep.subr.mxu0 0.0
  %366 = vmatpush1.msra.mxu0 0.0
  %367 = vmatprep.subr.mxu0 0.0
  %368 = vmatpush1.msra.mxu0 0.0
  %369 = vmatprep.subr.mxu0 0.0
  %370 = vmatpush1.msra.mxu0 0.0
  %371 = vmatprep.subr.mxu0 0.0
  %372 = vmatpush1.msra.mxu0 0.0
  %373 = vmatprep.mubr.f32.mxu0 0.0
  %374 = vmatmul.mubr.f32.gmra.mrb[0].mxu0 %v305
  %v375 = vpop.f32.mrb[0].mxu0
  %v376 = vadd.f32 %v292, %v375
  %v377 = vpop.f32.mrb[0].mxu0
  %v378 = vadd.f32 %v296, %v377
  %379 = vmatprep.mubr.f32.mxu0 0.0
  %380 = vmatmul.mubr.f32.gmra.mrb[0].mxu0 %v307
  %v381 = vpop.f32.mrb[0].mxu0
  %v382 = vadd.f32 %v292, %v381
  %v383 = vpop.f32.mrb[0].mxu0
  %v384 = vadd.f32 %v296, %v383
  %385 = vdwg.mxu0
  %386 = vst [vmem:[%s5] sm:$0xff] %v376
  %vm387 = vcmask 523264
  %388 = vst.msk [vmem:[%s5 + $0x8] sm:$0xff] %vm387, %v378
  %389 = vst [vmem:[%s5 + $0x10] sm:$0xff] %v382
  %390 = vst.msk [vmem:[%s5 + $0x18] sm:$0xff] %vm387, %v384
  // Predicated region
  $region22: #{tacotron_encoder.7} parent=0 // pred_check
    _
  $region23: #{tacotron_encoder.7} parent=0 // pred_check_branch
    %392 = sbr.rel (0) target = $region25
  $region24: #{tacotron_encoder.7} parent=0 // pred_region
    _
  $region25: #{tacotron_encoder.7} parent=0 // pred_fallthru
    _
  // Predicated region
  $region26: #{tacotron_encoder.7} parent=0 // pred_check
    _
  $region27: #{tacotron_encoder.7} parent=0 // pred_check_branch
    %394 = sbr.rel (0) target = $region29
  $region28: #{tacotron_encoder.7} parent=0 // pred_region
    _
  $region29: #{tacotron_encoder.7} parent=0 // pred_fallthru
    _

// kernel: tacotron_encoder.5
$region0: #{tacotron_encoder.5}
  #allocation0 [shape = 'u32[]', space=smem, size = 0x4, offset = 0x4, fixed_abs, tag = 'smem constant byte address 0x4 - core index']
  #allocation1 [shape = 'u32[144,128]{1,0:T(1,128)}', space=vmem, size = 0x12000, scoped, tag = 'internal scratch']
  %s0 = inlined_call_operand.vmem [shape: f32[16,32], index: 0, kind: input, shape index: {}]
  %s1 = inlined_call_operand.vmem [shape: f32[32,32], index: 1, kind: input, shape index: {}]
  %s2 = inlined_call_operand.vmem [shape: f32[1,32], index: 2, kind: input, shape index: {}]
  %s3 = inlined_call_operand.vmem [shape: f32[32,32], index: 3, kind: input, shape index: {}]
  %s4 = inlined_call_operand.vmem [shape: f32[1,32], index: 4, kind: input, shape index: {}]
  %s5 = inlined_call_operand.vmem [shape: f32[16,32], index: 5, kind: output, shape index: {}]
  %s6 = sld [smem:[#allocation0]]
  $region30: #{tacotron_encoder.5} parent=0
    _
  %s8 = ssub.s32 1, %s6
  %s9 = scalar_select 0, %s8, %s6
  // Predicated region
  $region2: #{tacotron_encoder.5} parent=0 // pred_check
    _
  $region3: #{tacotron_encoder.5} parent=0 // pred_check_branch
    %11 = sbr.rel (0) target = $region5
  $region4: #{tacotron_encoder.5} parent=0 // pred_region
    _
  $region5: #{tacotron_encoder.5} parent=0 // pred_fallthru
    _
  // Predicated region
  $region6: #{tacotron_encoder.5} parent=0 // pred_check
    _
  $region7: #{tacotron_encoder.5} parent=0 // pred_check_branch
    %13 = sbr.rel (0) target = $region9
  $region8: #{tacotron_encoder.5} parent=0 // pred_region
    _
  $region9: #{tacotron_encoder.5} parent=0 // pred_fallthru
    _
  // Predicated region
  $region10: #{tacotron_encoder.5} parent=0 // pred_check
    _
  $region11: #{tacotron_encoder.5} parent=0 // pred_check_branch
    %15 = sbr.rel (0) target = $region13
  $region12: #{tacotron_encoder.5} parent=0 // pred_region
    _
  $region13: #{tacotron_encoder.5} parent=0 // pred_fallthru
    _
  // Predicated region
  $region14: #{tacotron_encoder.5} parent=0 // pred_check
    _
  $region15: #{tacotron_encoder.5} parent=0 // pred_check_branch
    %17 = sbr.rel (0) target = $region17
  $region16: #{tacotron_encoder.5} parent=0 // pred_region
    _
  $region17: #{tacotron_encoder.5} parent=0 // pred_fallthru
    _
  // Predicated region
  $region18: #{tacotron_encoder.5} parent=0 // pred_check
    _
  $region19: #{tacotron_encoder.5} parent=0 // pred_check_branch
    %19 = sbr.rel (0) target = $region21
  $region20: #{tacotron_encoder.5} parent=0 // pred_region
    _
  $region21: #{tacotron_encoder.5} parent=0 // pred_fallthru
    _
  %v20 = vld [vmem:[%s0] sm:$0xff]
  %v21 = vld [vmem:[%s0 + $0x8] sm:$0xff]
  %v22 = vld [vmem:[%s1] sm:$0xff]
  %v23 = vld [vmem:[%s1 + $0x8] sm:$0xff]
  %v24 = vld [vmem:[%s1 + $0x10] sm:$0xff]
  %v25 = vld [vmem:[%s1 + $0x18] sm:$0xff]
  %v26 = vld [vmem:[%s2] sm:$0x1]
  %v28 = vlaneseq
  %v29 = vshrl.u32 %v28, 7
  %v30 = vsub.s32 0, %v29
  %v31 = vrot.slane %v26, %v30
  %vm33 = vcmask 261120
  %v35 = vsel %vm33, %v20, 0
  %v38 = vsel %vm33, %v21, 0
  %40 = vmatprep.subr.mxu0 0.0
  %41 = vmatpush1.msra.mxu0 %v22
  %42 = vmatprep.subr.mxu0 0.0
  %43 = vmatpush1.msra.mxu0 %v23
  %44 = vmatprep.subr.mxu0 0.0
  %45 = vmatpush1.msra.mxu0 %v24
  %46 = vmatprep.subr.mxu0 0.0
  %47 = vmatpush1.msra.mxu0 %v25
  %48 = vmatprep.subr.mxu0 0.0
  %49 = vmatpush1.msra.mxu0 0.0
  %50 = vmatprep.subr.mxu0 0.0
  %51 = vmatpush1.msra.mxu0 0.0
  %52 = vmatprep.subr.mxu0 0.0
  %53 = vmatpush1.msra.mxu0 0.0
  %54 = vmatprep.subr.mxu0 0.0
  %55 = vmatpush1.msra.mxu0 0.0
  %56 = vmatprep.subr.mxu0 0.0
  %57 = vmatpush1.msra.mxu0 0.0
  %58 = vmatprep.subr.mxu0 0.0
  %59 = vmatpush1.msra.mxu0 0.0
  %60 = vmatprep.subr.mxu0 0.0
  %61 = vmatpush1.msra.mxu0 0.0
  %62 = vmatprep.subr.mxu0 0.0
  %63 = vmatpush1.msra.mxu0 0.0
  %64 = vmatprep.subr.mxu0 0.0
  %65 = vmatpush1.msra.mxu0 0.0
  %66 = vmatprep.subr.mxu0 0.0
  %67 = vmatpush1.msra.mxu0 0.0
  %68 = vmatprep.subr.mxu0 0.0
  %69 = vmatpush1.msra.mxu0 0.0
  %70 = vmatprep.subr.mxu0 0.0
  %71 = vmatpush1.msra.mxu0 0.0
  %72 = vmatprep.subr.mxu0 0.0
  %73 = vmatpush1.msra.mxu0 0.0
  %74 = vmatprep.subr.mxu0 0.0
  %75 = vmatpush1.msra.mxu0 0.0
  %76 = vmatprep.subr.mxu0 0.0
  %77 = vmatpush1.msra.mxu0 0.0
  %78 = vmatprep.subr.mxu0 0.0
  %79 = vmatpush1.msra.mxu0 0.0
  %80 = vmatprep.subr.mxu0 0.0
  %81 = vmatpush1.msra.mxu0 0.0
  %82 = vmatprep.subr.mxu0 0.0
  %83 = vmatpush1.msra.mxu0 0.0
  %84 = vmatprep.subr.mxu0 0.0
  %85 = vmatpush1.msra.mxu0 0.0
  %86 = vmatprep.subr.mxu0 0.0
  %87 = vmatpush1.msra.mxu0 0.0
  %88 = vmatprep.subr.mxu0 0.0
  %89 = vmatpush1.msra.mxu0 0.0
  %90 = vmatprep.subr.mxu0 0.0
  %91 = vmatpush1.msra.mxu0 0.0
  %92 = vmatprep.subr.mxu0 0.0
  %93 = vmatpush1.msra.mxu0 0.0
  %94 = vmatprep.subr.mxu0 0.0
  %95 = vmatpush1.msra.mxu0 0.0
  %96 = vmatprep.subr.mxu0 0.0
  %97 = vmatpush1.msra.mxu0 0.0
  %98 = vmatprep.subr.mxu0 0.0
  %99 = vmatpush1.msra.mxu0 0.0
  %100 = vmatprep.subr.mxu0 0.0
  %101 = vmatpush1.msra.mxu0 0.0
  %102 = vmatprep.subr.mxu0 0.0
  %103 = vmatpush1.msra.mxu0 0.0
  %104 = vmatprep.mubr.f32.mxu0 0.0
  %105 = vmatmul.mubr.f32.gmra.mrb[0].mxu0 %v35
  %v106 = vpop.f32.mrb[0].mxu0
  %v107 = vadd.f32 %v31, %v106
  %v108 = vpop.f32.mrb[0].mxu0
  %109 = vmatprep.mubr.f32.mxu0 0.0
  %110 = vmatmul.mubr.f32.gmra.mrb[0].mxu0 %v38
  %v111 = vpop.f32.mrb[0].mxu0
  %v112 = vadd.f32 %v31, %v111
  %v113 = vpop.f32.mrb[0].mxu0
  %114 = vdwg.mxu0
  %v115 = vmax.f32 %v107, 0.0
  %v116 = vmax.f32 %v112, 0.0
  %v117 = vld [vmem:[%s3] sm:$0xff]
  %v118 = vld [vmem:[%s3 + $0x8] sm:$0xff]
  %v119 = vld [vmem:[%s3 + $0x10] sm:$0xff]
  %v120 = vld [vmem:[%s3 + $0x18] sm:$0xff]
  %v121 = vld [vmem:[%s4] sm:$0x1]
  %v123 = vlaneseq
  %v124 = vshrl.u32 %v123, 7
  %v125 = vsub.s32 0, %v124
  %v126 = vrot.slane %v121, %v125
  %v129 = vsel %vm33, %v115, 0
  %v132 = vsel %vm33, %v116, 0
  %134 = vmatprep.subr.mxu0 0.0
  %135 = vmatpush1.msra.mxu0 %v117
  %136 = vmatprep.subr.mxu0 0.0
  %137 = vmatpush1.msra.mxu0 %v118
  %138 = vmatprep.subr.mxu0 0.0
  %139 = vmatpush1.msra.mxu0 %v119
  %140 = vmatprep.subr.mxu0 0.0
  %141 = vmatpush1.msra.mxu0 %v120
  %142 = vmatprep.subr.mxu0 0.0
  %143 = vmatpush1.msra.mxu0 0.0
  %144 = vmatprep.subr.mxu0 0.0
  %145 = vmatpush1.msra.mxu0 0.0
  %146 = vmatprep.subr.mxu0 0.0
  %147 = vmatpush1.msra.mxu0 0.0
  %148 = vmatprep.subr.mxu0 0.0
  %149 = vmatpush1.msra.mxu0 0.0
  %150 = vmatprep.subr.mxu0 0.0
  %151 = vmatpush1.msra.mxu0 0.0
  %152 = vmatprep.subr.mxu0 0.0
  %153 = vmatpush1.msra.mxu0 0.0
  %154 = vmatprep.subr.mxu0 0.0
  %155 = vmatpush1.msra.mxu0 0.0
  %156 = vmatprep.subr.mxu0 0.0
  %157 = vmatpush1.msra.mxu0 0.0
  %158 = vmatprep.subr.mxu0 0.0
  %159 = vmatpush1.msra.mxu0 0.0
  %160 = vmatprep.subr.mxu0 0.0
  %161 = vmatpush1.msra.mxu0 0.0
  %162 = vmatprep.subr.mxu0 0.0
  %163 = vmatpush1.msra.mxu0 0.0
  %164 = vmatprep.subr.mxu0 0.0
  %165 = vmatpush1.msra.mxu0 0.0
  %166 = vmatprep.subr.mxu0 0.0
  %167 = vmatpush1.msra.mxu0 0.0
  %168 = vmatprep.subr.mxu0 0.0
  %169 = vmatpush1.msra.mxu0 0.0
  %170 = vmatprep.subr.mxu0 0.0
  %171 = vmatpush1.msra.mxu0 0.0
  %172 = vmatprep.subr.mxu0 0.0
  %173 = vmatpush1.msra.mxu0 0.0
  %174 = vmatprep.subr.mxu0 0.0
  %175 = vmatpush1.msra.mxu0 0.0
  %176 = vmatprep.subr.mxu0 0.0
  %177 = vmatpush1.msra.mxu0 0.0
  %178 = vmatprep.subr.mxu0 0.0
  %179 = vmatpush1.msra.mxu0 0.0
  %180 = vmatprep.subr.mxu0 0.0
  %181 = vmatpush1.msra.mxu0 0.0
  %182 = vmatprep.subr.mxu0 0.0
  %183 = vmatpush1.msra.mxu0 0.0
  %184 = vmatprep.subr.mxu0 0.0
  %185 = vmatpush1.msra.mxu0 0.0
  %186 = vmatprep.subr.mxu0 0.0
  %187 = vmatpush1.msra.mxu0 0.0
  %188 = vmatprep.subr.mxu0 0.0
  %189 = vmatpush1.msra.mxu0 0.0
  %190 = vmatprep.subr.mxu0 0.0
  %191 = vmatpush1.msra.mxu0 0.0
  %192 = vmatprep.subr.mxu0 0.0
  %193 = vmatpush1.msra.mxu0 0.0
  %194 = vmatprep.subr.mxu0 0.0
  %195 = vmatpush1.msra.mxu0 0.0
  %196 = vmatprep.subr.mxu0 0.0
  %197 = vmatpush1.msra.mxu0 0.0
  %198 = vmatprep.mubr.f32.mxu0 0.0
  %199 = vmatmul.mubr.f32.gmra.mrb[0].mxu0 %v129
  %v200 = vpop.f32.mrb[0].mxu0
  %v201 = vadd.f32 %v126, %v200
  %v202 = vpop.f32.mrb[0].mxu0
  %203 = vmatprep.mubr.f32.mxu0 0.0
  %204 = vmatmul.mubr.f32.gmra.mrb[0].mxu0 %v132
  %v205 = vpop.f32.mrb[0].mxu0
  %v206 = vadd.f32 %v126, %v205
  %v207 = vpop.f32.mrb[0].mxu0
  %208 = vdwg.mxu0
  %v209 = vmax.f32 %v201, 0.0
  %v210 = vmax.f32 %v206, 0.0
  %211 = vst.msk [vmem:[%s5] sm:$0xff] %vm33, %v209
  %212 = vst.msk [vmem:[%s5 + $0x8] sm:$0xff] %vm33, %v210
  // Predicated region
  $region22: #{tacotron_encoder.5} parent=0 // pred_check
    _
  $region23: #{tacotron_encoder.5} parent=0 // pred_check_branch
    %214 = sbr.rel (0) target = $region25
  $region24: #{tacotron_encoder.5} parent=0 // pred_region
    _
  $region25: #{tacotron_encoder.5} parent=0 // pred_fallthru
    _
  // Predicated region
  $region26: #{tacotron_encoder.5} parent=0 // pred_check
    _
  $region27: #{tacotron_encoder.5} parent=0 // pred_check_branch
    %216 = sbr.rel (0) target = $region29
  $region28: #{tacotron_encoder.5} parent=0 // pred_region
    _
  $region29: #{tacotron_encoder.5} parent=0 // pred_fallthru
    _

// kernel: tacotron_encoder.6
$region0: #{tacotron_encoder.6}
  #allocation0 [shape = 'u32[]', space=smem, size = 0x4, offset = 0x4, fixed_abs, tag = 'smem constant byte address 0x4 - core index']
  #allocation1 [shape = 'u32[144,128]{1,0:T(1,128)}', space=vmem, size = 0x12000, scoped, tag = 'internal scratch']
  #allocation2 [shape = 'f32[10,128]{1,0:T(8,128)}', space=vmem, size = 0x2000, scoped, tag = 'scratch operand']
  #allocation3 [shape = 'f32[10,32]{1,0:T(8,128)}', space=vmem, size = 0x2000, scoped, tag = 'scratch operand']
  %s0 = inlined_call_operand.vmem [shape: f32[2,12,32], index: 0, kind: input, shape index: {}]
  %s1 = inlined_call_operand.vmem [shape: f32[128,128], index: 1, kind: input, shape index: {}]
  %s2 = inlined_call_operand.vmem [shape: f32[1,128], index: 2, kind: input, shape index: {}]
  %s3 = inlined_call_operand.vmem [shape: f32[1,128], index: 3, kind: input, shape index: {}]
  %s4 = inlined_call_operand.vmem [shape: f32[384,32], index: 4, kind: input, shape index: {}]
  %s5 = inlined_call_operand.vmem [shape: f32[1,32], index: 5, kind: input, shape index: {}]
  %s6 = inlined_call_operand.vmem [shape: f32[1,32], index: 6, kind: input, shape index: {}]
  %s7 = inlined_call_operand.vmem [shape: f32[96,32], index: 7, kind: input, shape index: {}]
  %s8 = inlined_call_operand.vmem [shape: f32[1,32], index: 8, kind: input, shape index: {}]
  %s9 = inlined_call_operand.vmem [shape: f32[2,8,32], index: 9, kind: output, shape index: {}]
  %s10 = sld [smem:[#allocation0]]
  $region69: #{tacotron_encoder.6} parent=0
    _
  %s12 = ssub.s32 1, %s10
  %s13 = scalar_select 0, %s12, %s10
  loop: start=0, step=1, limit=4
  $region2: #{tacotron_encoder.6} parent=0 // loop_pre_header
    _
  $region3: #{tacotron_encoder.6} parent=0 // loop_header
    %s15 = sphi 0, %s19
    %p16 = scmp.ge.s32.totalorder %s15, 4
    %s25 = sphi 0, %s27
    %s28 = sphi 0, %s25
    %s29 = sphi 0, %s28
    %s45 = sphi 0, %s29
    %s49 = sphi 0, %s49
    %s51 = sphi 0, %s49
    %s52 = sphi 0, %s51
    %s66 = sphi 0, %s52
    %s70 = sphi 0, %s70
    %s72 = sphi 0, %s70
    %s73 = sphi 0, %s72
    %s87 = sphi 0, %s73
    %s91 = sphi 0, %s91
    %s93 = sphi 0, %s91
    %s94 = sphi 0, %s93
    %s108 = sphi 0, %s94
    %s112 = sphi 0, %s112
    %s114 = sphi 0, %s112
    %s115 = sphi 0, %s114
    %s129 = sphi 0, %s115
    %s133 = sphi 0, %s133
    %s135 = sphi 0, %s133
    %s136 = sphi 0, %s135
    %s150 = sphi 0, %s136
    %s154 = sphi 0, %s154
    %s156 = sphi 0, %s154
    %s157 = sphi 0, %s156
    %s171 = sphi 0, %s157
    %s175 = sphi 0, %s175
    %s177 = sphi 0, %s175
    %s178 = sphi 0, %s177
    %s192 = sphi 0, %s178
    %s196 = sphi 0, %s196
    %s198 = sphi 0, %s196
    %s199 = sphi 0, %s198
    %s213 = sphi 0, %s199
    %s219 = sphi 0, %s221
    %s222 = sphi 0, %s219
    %s223 = sphi 0, %s222
    %s239 = sphi 0, %s223
  $region4: #{tacotron_encoder.6} parent=0 // loop_header_branch
    %18 = sbr.rel (%p16) target = $region8
  $region5: #{tacotron_encoder.6} parent=0 // loop_body
    %s20 = ssub.s32 %s15, 1
    %s21 = ssub.s32 %s15, 2
    %s22 = sadd.s32 %s15, 1
    %s23 = ssub.s32 %s15, %s22
    %p24 = scmp.eq.s32.totalorder %s23, 0
    %s26 = sadd.s32 %s25, 1
    %s27 = scalar_select %p24, %s25, %s26
    %p30 = pneg %p24
    %p31 = scmp.eq.s32.totalorder %s15, 1
    %p32 = por %p30, %p31
    %p33 = scmp.ne.s32.totalorder %s25, %s28
    %p34 = scmp.eq.s32.totalorder %s15, 0
    %p35 = por %p33, %p34
    %p36 = scmp.ne.s32.totalorder %s25, %s28
    %p37 = scmp.eq.s32.totalorder %s20, 1
    %p38 = por %p36, %p37
    %p39 = scmp.ne.s32.totalorder %s28, %s29
    %p40 = scmp.eq.s32.totalorder %s20, 0
    %p41 = por %p39, %p40
    %p42 = scmp.ne.s32.totalorder %s28, %s29
    %p43 = scmp.eq.s32.totalorder %s21, 1
    %p44 = por %p42, %p43
    %p46 = scmp.ne.s32.totalorder %s29, %s45
    %p47 = scmp.eq.s32.totalorder %s21, 0
    %p48 = por %p46, %p47
    %s50 = sadd.s32 %s49, 1
    %p53 = scmp.eq.s32.totalorder %s15, 1
    %p54 = scmp.ne.s32.totalorder %s49, %s51
    %p55 = scmp.eq.s32.totalorder %s15, 0
    %p56 = por %p54, %p55
    %p57 = scmp.ne.s32.totalorder %s49, %s51
    %p58 = scmp.eq.s32.totalorder %s20, 1
    %p59 = por %p57, %p58
    %p60 = scmp.ne.s32.totalorder %s51, %s52
    %p61 = scmp.eq.s32.totalorder %s20, 0
    %p62 = por %p60, %p61
    %p63 = scmp.ne.s32.totalorder %s51, %s52
    %p64 = scmp.eq.s32.totalorder %s21, 1
    %p65 = por %p63, %p64
    %p67 = scmp.ne.s32.totalorder %s52, %s66
    %p68 = scmp.eq.s32.totalorder %s21, 0
    %p69 = por %p67, %p68
    %s71 = sadd.s32 %s70, 1
    %p74 = scmp.eq.s32.totalorder %s15, 1
    %p75 = scmp.ne.s32.totalorder %s70, %s72
    %p76 = scmp.eq.s32.totalorder %s15, 0
    %p77 = por %p75, %p76
    %p78 = scmp.ne.s32.totalorder %s70, %s72
    %p79 = scmp.eq.s32.totalorder %s20, 1
    %p80 = por %p78, %p79
    %p81 = scmp.ne.s32.totalorder %s72, %s73
    %p82 = scmp.eq.s32.totalorder %s20, 0
    %p83 = por %p81, %p82
    %p84 = scmp.ne.s32.totalorder %s72, %s73
    %p85 = scmp.eq.s32.totalorder %s21, 1
    %p86 = por %p84, %p85
    %p88 = scmp.ne.s32.totalorder %s73, %s87
    %p89 = scmp.eq.s32.totalorder %s21, 0
    %p90 = por %p88, %p89
    %s92 = sadd.s32 %s91, 1
    %p95 = scmp.eq.s32.totalorder %s15, 1
    %p96 = scmp.ne.s32.totalorder %s91, %s93
    %p97 = scmp.eq.s32.totalorder %s15, 0
    %p98 = por %p96, %p97
    %p99 = scmp.ne.s32.totalorder %s91, %s93
    %p100 = scmp.eq.s32.totalorder %s20, 1
    %p101 = por %p99, %p100
    %p102 = scmp.ne.s32.totalorder %s93, %s94
    %p103 = scmp.eq.s32.totalorder %s20, 0
    %p104 = por %p102, %p103
    %p105 = scmp.ne.s32.totalorder %s93, %s94
    %p106 = scmp.eq.s32.totalorder %s21, 1
    %p107 = por %p105, %p106
    %p109 = scmp.ne.s32.totalorder %s94, %s108
    %p110 = scmp.eq.s32.totalorder %s21, 0
    %p111 = por %p109, %p110
    %s113 = sadd.s32 %s112, 1
    %p116 = scmp.eq.s32.totalorder %s15, 1
    %p117 = scmp.ne.s32.totalorder %s112, %s114
    %p118 = scmp.eq.s32.totalorder %s15, 0
    %p119 = por %p117, %p118
    %p120 = scmp.ne.s32.totalorder %s112, %s114
    %p121 = scmp.eq.s32.totalorder %s20, 1
    %p122 = por %p120, %p121
    %p123 = scmp.ne.s32.totalorder %s114, %s115
    %p124 = scmp.eq.s32.totalorder %s20, 0
    %p125 = por %p123, %p124
    %p126 = scmp.ne.s32.totalorder %s114, %s115
    %p127 = scmp.eq.s32.totalorder %s21, 1
    %p128 = por %p126, %p127
    %p130 = scmp.ne.s32.totalorder %s115, %s129
    %p131 = scmp.eq.s32.totalorder %s21, 0
    %p132 = por %p130, %p131
    %s134 = sadd.s32 %s133, 1
    %p137 = scmp.eq.s32.totalorder %s15, 1
    %p138 = scmp.ne.s32.totalorder %s133, %s135
    %p139 = scmp.eq.s32.totalorder %s15, 0
    %p140 = por %p138, %p139
    %p141 = scmp.ne.s32.totalorder %s133, %s135
    %p142 = scmp.eq.s32.totalorder %s20, 1
    %p143 = por %p141, %p142
    %p144 = scmp.ne.s32.totalorder %s135, %s136
    %p145 = scmp.eq.s32.totalorder %s20, 0
    %p146 = por %p144, %p145
    %p147 = scmp.ne.s32.totalorder %s135, %s136
    %p148 = scmp.eq.s32.totalorder %s21, 1
    %p149 = por %p147, %p148
    %p151 = scmp.ne.s32.totalorder %s136, %s150
    %p152 = scmp.eq.s32.totalorder %s21, 0
    %p153 = por %p151, %p152
    %s155 = sadd.s32 %s154, 1
    %p158 = scmp.eq.s32.totalorder %s15, 1
    %p159 = scmp.ne.s32.totalorder %s154, %s156
    %p160 = scmp.eq.s32.totalorder %s15, 0
    %p161 = por %p159, %p160
    %p162 = scmp.ne.s32.totalorder %s154, %s156
    %p163 = scmp.eq.s32.totalorder %s20, 1
    %p164 = por %p162, %p163
    %p165 = scmp.ne.s32.totalorder %s156, %s157
    %p166 = scmp.eq.s32.totalorder %s20, 0
    %p167 = por %p165, %p166
    %p168 = scmp.ne.s32.totalorder %s156, %s157
    %p169 = scmp.eq.s32.totalorder %s21, 1
    %p170 = por %p168, %p169
    %p172 = scmp.ne.s32.totalorder %s157, %s171
    %p173 = scmp.eq.s32.totalorder %s21, 0
    %p174 = por %p172, %p173
    %s176 = sadd.s32 %s175, 1
    %p179 = scmp.eq.s32.totalorder %s15, 1
    %p180 = scmp.ne.s32.totalorder %s175, %s177
    %p181 = scmp.eq.s32.totalorder %s15, 0
    %p182 = por %p180, %p181
    %p183 = scmp.ne.s32.totalorder %s175, %s177
    %p184 = scmp.eq.s32.totalorder %s20, 1
    %p185 = por %p183, %p184
    %p186 = scmp.ne.s32.totalorder %s177, %s178
    %p187 = scmp.eq.s32.totalorder %s20, 0
    %p188 = por %p186, %p187
    %p189 = scmp.ne.s32.totalorder %s177, %s178
    %p190 = scmp.eq.s32.totalorder %s21, 1
    %p191 = por %p189, %p190
    %p193 = scmp.ne.s32.totalorder %s178, %s192
    %p194 = scmp.eq.s32.totalorder %s21, 0
    %p195 = por %p193, %p194
    %s197 = sadd.s32 %s196, 1
    %p200 = scmp.eq.s32.totalorder %s15, 1
    %p201 = scmp.ne.s32.totalorder %s196, %s198
    %p202 = scmp.eq.s32.totalorder %s15, 0
    %p203 = por %p201, %p202
    %p204 = scmp.ne.s32.totalorder %s196, %s198
    %p205 = scmp.eq.s32.totalorder %s20, 1
    %p206 = por %p204, %p205
    %p207 = scmp.ne.s32.totalorder %s198, %s199
    %p208 = scmp.eq.s32.totalorder %s20, 0
    %p209 = por %p207, %p208
    %p210 = scmp.ne.s32.totalorder %s198, %s199
    %p211 = scmp.eq.s32.totalorder %s21, 1
    %p212 = por %p210, %p211
    %p214 = scmp.ne.s32.totalorder %s199, %s213
    %p215 = scmp.eq.s32.totalorder %s21, 0
    %p216 = por %p214, %p215
    %s217 = ssub.s32 %s15, %s22
    %p218 = scmp.eq.s32.totalorder %s217, 0
    %s220 = sadd.s32 %s219, 1
    %s221 = scalar_select %p218, %s219, %s220
    %p224 = pneg %p218
    %p225 = scmp.eq.s32.totalorder %s15, 1
    %p226 = por %p224, %p225
    %p227 = scmp.ne.s32.totalorder %s219, %s222
    %p228 = scmp.eq.s32.totalorder %s15, 0
    %p229 = por %p227, %p228
    %p230 = scmp.ne.s32.totalorder %s219, %s222
    %p231 = scmp.eq.s32.totalorder %s20, 1
    %p232 = por %p230, %p231
    %p233 = scmp.ne.s32.totalorder %s222, %s223
    %p234 = scmp.eq.s32.totalorder %s20, 0
    %p235 = por %p233, %p234
    %p236 = scmp.ne.s32.totalorder %s222, %s223
    %p237 = scmp.eq.s32.totalorder %s21, 1
    %p238 = por %p236, %p237
    %p240 = scmp.ne.s32.totalorder %s223, %s239
    %p241 = scmp.eq.s32.totalorder %s21, 0
    %p242 = por %p240, %p241
    %p243 = scmp.le.s32.totalorder 1, %s15
    %p244 = scmp.lt.s32.totalorder %s15, 3
    %p245 = pnand %p243, %p244
    %p246 = pneg %p245
    // Predicated region
    $region9: #{tacotron_encoder.6} parent=5 // pred_check
      _
    $region10: #{tacotron_encoder.6} parent=5 // pred_check_branch
      %248 = sbr.rel (%p245) target = $region12
    $region11: #{tacotron_encoder.6} parent=5 // pred_region
      %s249 = ssub.s32 %s15, 1
      // Predicated region
      $region13: #{tacotron_encoder.6} parent=11 // pred_check
        %p250 = pneg %p62
      $region14: #{tacotron_encoder.6} parent=11 // pred_check_branch
        %252 = sbr.rel (%p250) target = $region16
      $region15: #{tacotron_encoder.6} parent=11 // pred_region
        _
      $region16: #{tacotron_encoder.6} parent=11 // pred_fallthru
        _
      // Predicated region
      $region17: #{tacotron_encoder.6} parent=11 // pred_check
        %p253 = pneg %p83
      $region18: #{tacotron_encoder.6} parent=11 // pred_check_branch
        %255 = sbr.rel (%p253) target = $region20
      $region19: #{tacotron_encoder.6} parent=11 // pred_region
        _
      $region20: #{tacotron_encoder.6} parent=11 // pred_fallthru
        _
      // Predicated region
      $region21: #{tacotron_encoder.6} parent=11 // pred_check
        %p256 = pneg %p104
      $region22: #{tacotron_encoder.6} parent=11 // pred_check_branch
        %258 = sbr.rel (%p256) target = $region24
      $region23: #{tacotron_encoder.6} parent=11 // pred_region
        _
      $region24: #{tacotron_encoder.6} parent=11 // pred_fallthru
        _
      // Predicated region
      $region25: #{tacotron_encoder.6} parent=11 // pred_check
        %p259 = pneg %p125
      $region26: #{tacotron_encoder.6} parent=11 // pred_check_branch
        %261 = sbr.rel (%p259) target = $region28
      $region27: #{tacotron_encoder.6} parent=11 // pred_region
        _
      $region28: #{tacotron_encoder.6} parent=11 // pred_fallthru
        _
      // Predicated region
      $region29: #{tacotron_encoder.6} parent=11 // pred_check
        %p262 = pneg %p146
      $region30: #{tacotron_encoder.6} parent=11 // pred_check_branch
        %264 = sbr.rel (%p262) target = $region32
      $region31: #{tacotron_encoder.6} parent=11 // pred_region
        _
      $region32: #{tacotron_encoder.6} parent=11 // pred_fallthru
        _
      // Predicated region
      $region33: #{tacotron_encoder.6} parent=11 // pred_check
        %p265 = pneg %p167
      $region34: #{tacotron_encoder.6} parent=11 // pred_check_branch
        %267 = sbr.rel (%p265) target = $region36
      $region35: #{tacotron_encoder.6} parent=11 // pred_region
        _
      $region36: #{tacotron_encoder.6} parent=11 // pred_fallthru
        _
      // Predicated region
      $region37: #{tacotron_encoder.6} parent=11 // pred_check
        %p268 = pneg %p188
      $region38: #{tacotron_encoder.6} parent=11 // pred_check_branch
        %270 = sbr.rel (%p268) target = $region40
      $region39: #{tacotron_encoder.6} parent=11 // pred_region
        _
      $region40: #{tacotron_encoder.6} parent=11 // pred_fallthru
        _
      // Predicated region
      $region41: #{tacotron_encoder.6} parent=11 // pred_check
        %p271 = pneg %p209
      $region42: #{tacotron_encoder.6} parent=11 // pred_check_branch
        %273 = sbr.rel (%p271) target = $region44
      $region43: #{tacotron_encoder.6} parent=11 // pred_region
        _
      $region44: #{tacotron_encoder.6} parent=11 // pred_fallthru
        _
    $region12: #{tacotron_encoder.6} parent=5 // pred_fallthru
      _
    %p274 = scmp.lt.s32.totalorder %s15, 2
    // Predicated region
    $region45: #{tacotron_encoder.6} parent=5 // pred_check
      %p275 = pneg %p274
    $region46: #{tacotron_encoder.6} parent=5 // pred_check_branch
      %277 = sbr.rel (%p275) target = $region48
    $region47: #{tacotron_encoder.6} parent=5 // pred_region
      // Predicated region
      $region49: #{tacotron_encoder.6} parent=47 // pred_check
        %p278 = pneg %p35
      $region50: #{tacotron_encoder.6} parent=47 // pred_check_branch
        %280 = sbr.rel (%p278) target = $region52
      $region51: #{tacotron_encoder.6} parent=47 // pred_region
        %p281 = scmp.lt.s32.totalorder %s15, 1
        %s282 = scalar_select %p281, %s15, 1
        %s283 = smul.addr %s282, 2
        %s284 = smul.addr %s283, 8
        %s285 = scalar_lea.vmem %s0, %s284
      $region52: #{tacotron_encoder.6} parent=47 // pred_fallthru
        _
    $region48: #{tacotron_encoder.6} parent=5 // pred_fallthru
      _
    %p286 = scmp.le.s32.totalorder 1, %s15
    %p287 = scmp.lt.s32.totalorder %s15, 3
    %p288 = pnand %p286, %p287
    %p289 = pneg %p288
    // Predicated region
    $region53: #{tacotron_encoder.6} parent=5 // pred_check
      _
    $region54: #{tacotron_encoder.6} parent=5 // pred_check_branch
      %291 = sbr.rel (%p288) target = $region56
    $region55: #{tacotron_encoder.6} parent=5 // pred_region
      %s292 = ssub.s32 %s15, 1
      %p293 = scmp.lt.s32.totalorder %s20, 1
      %s294 = scalar_select %p293, %s20, 1
      %s295 = smul.addr %s294, 2
      %s296 = smul.addr %s295, 8
      %s297 = scalar_lea.vmem %s0, %s296
      %p298 = pneg %p41
      %p299 = pneg %p38
      %p300 = pneg %p62
      %p301 = pneg %p59
      %p302 = pneg %p83
      %p303 = pneg %p80
      %p304 = pneg %p104
      %p305 = pneg %p101
      %p306 = pneg %p125
      %p307 = pneg %p122
      %p308 = pneg %p146
      %p309 = pneg %p143
      %p310 = pneg %p167
      %p311 = pneg %p164
      %p312 = pneg %p188
      %p313 = pneg %p185
      %p314 = pneg %p209
      %p315 = pneg %p206
      %p316 = pneg %p235
      %p317 = pneg %p232
      %p318 = scmp.lt.s32.totalorder %s20, 1
      %s319 = scalar_select %p318, %s20, 1
      %s320 = smul.addr %s319, 8
      %s321 = scalar_lea.vmem %s9, %s320
      %p322 = scmp.lt.s32.totalorder %s20, 1
      %s323 = scalar_select %p322, %s20, 1
      %s324 = smul.addr %s323, 2
      %s325 = smul.addr %s324, 8
      %s326 = scalar_lea.vmem %s0, %s325
      %p327 = scmp.lt.s32.totalorder %s20, 1
      %s328 = scalar_select %p327, %s20, 1
      %s329 = smul.addr %s328, 8
      %s330 = scalar_lea.vmem %s9, %s329
      %v331 = vld [vmem:[%s326] sm:$0xff]
      %v332 = vld [vmem:[%s326 + $0x1] sm:$0xff]
      %v333 = vld [vmem:[%s326 + $0x2] sm:$0xff]
      %v334 = vld [vmem:[%s326 + $0x3] sm:$0xff]
      %336 = vrot.lane.b32.xlu0 %v332, 32
      %v337 = vpop.permute.xlu0 %336
      %340 = vrot.lane.b32.xlu0 %v333, 64
      %v341 = vpop.permute.xlu0 %340
      %344 = vrot.lane.b32.xlu0 %v334, 96
      %v345 = vpop.permute.xlu0 %344
      %vm347 = vcmask 261120
      %v348 = vsel %vm347, %v331, %v337
      %vm349 = vcmask 523264
      %v350 = vsel %vm349, %v348, %v341
      %vm351 = vcmask 785408
      %v352 = vsel %vm351, %v350, %v345
      %v353 = vld [vmem:[%s1] sm:$0xff]
      %v354 = vld [vmem:[%s1 + $0x8] sm:$0xff]
      %v355 = vld [vmem:[%s1 + $0x10] sm:$0xff]
      %v356 = vld [vmem:[%s1 + $0x18] sm:$0xff]
      %v357 = vld [vmem:[%s1 + $0x20] sm:$0xff]
      %v358 = vld [vmem:[%s1 + $0x28] sm:$0xff]
      %v359 = vld [vmem:[%s1 + $0x30] sm:$0xff]
      %v360 = vld [vmem:[%s1 + $0x38] sm:$0xff]
      %v361 = vld [vmem:[%s1 + $0x40] sm:$0xff]
      %v362 = vld [vmem:[%s1 + $0x48] sm:$0xff]
      %v363 = vld [vmem:[%s1 + $0x50] sm:$0xff]
      %v364 = vld [vmem:[%s1 + $0x58] sm:$0xff]
      %v365 = vld [vmem:[%s1 + $0x60] sm:$0xff]
      %v366 = vld [vmem:[%s1 + $0x68] sm:$0xff]
      %v367 = vld [vmem:[%s1 + $0x70] sm:$0xff]
      %v368 = vld [vmem:[%s1 + $0x78] sm:$0xff]
      %369 = vmatprep.subr.mxu0 0.0
      %370 = vmatpush1.msra.mxu0 %v353
      %371 = vmatprep.subr.mxu0 0.0
      %372 = vmatpush1.msra.mxu0 %v354
      %373 = vmatprep.subr.mxu0 0.0
      %374 = vmatpush1.msra.mxu0 %v355
      %375 = vmatprep.subr.mxu0 0.0
      %376 = vmatpush1.msra.mxu0 %v356
      %377 = vmatprep.subr.mxu0 0.0
      %378 = vmatpush1.msra.mxu0 %v357
      %379 = vmatprep.subr.mxu0 0.0
      %380 = vmatpush1.msra.mxu0 %v358
      %381 = vmatprep.subr.mxu0 0.0
      %382 = vmatpush1.msra.mxu0 %v359
      %383 = vmatprep.subr.mxu0 0.0
      %384 = vmatpush1.msra.mxu0 %v360
      %385 = vmatprep.subr.mxu0 0.0
      %386 = vmatpush1.msra.mxu0 %v361
      %387 = vmatprep.subr.mxu0 0.0
      %388 = vmatpush1.msra.mxu0 %v362
      %389 = vmatprep.subr.mxu0 0.0
      %390 = vmatpush1.msra.mxu0 %v363
      %391 = vmatprep.subr.mxu0 0.0
      %392 = vmatpush1.msra.mxu0 %v364
      %393 = vmatprep.subr.mxu0 0.0
      %394 = vmatpush1.msra.mxu0 %v365
      %395 = vmatprep.subr.mxu0 0.0
      %396 = vmatpush1.msra.mxu0 %v366
      %397 = vmatprep.subr.mxu0 0.0
      %398 = vmatpush1.msra.mxu0 %v367
      %399 = vmatprep.subr.mxu0 0.0
      %400 = vmatpush1.msra.mxu0 %v368
      %401 = vmatprep.subr.mxu0 0.0
      %402 = vmatpush1.msra.mxu0 0.0
      %403 = vmatprep.subr.mxu0 0.0
      %404 = vmatpush1.msra.mxu0 0.0
      %405 = vmatprep.subr.mxu0 0.0
      %406 = vmatpush1.msra.mxu0 0.0
      %407 = vmatprep.subr.mxu0 0.0
      %408 = vmatpush1.msra.mxu0 0.0
      %409 = vmatprep.subr.mxu0 0.0
      %410 = vmatpush1.msra.mxu0 0.0
      %411 = vmatprep.subr.mxu0 0.0
      %412 = vmatpush1.msra.mxu0 0.0
      %413 = vmatprep.subr.mxu0 0.0
      %414 = vmatpush1.msra.mxu0 0.0
      %415 = vmatprep.subr.mxu0 0.0
      %416 = vmatpush1.msra.mxu0 0.0
      %417 = vmatprep.subr.mxu0 0.0
      %418 = vmatpush1.msra.mxu0 0.0
      %419 = vmatprep.subr.mxu0 0.0
      %420 = vmatpush1.msra.mxu0 0.0
      %421 = vmatprep.subr.mxu0 0.0
      %422 = vmatpush1.msra.mxu0 0.0
      %423 = vmatprep.subr.mxu0 0.0
      %424 = vmatpush1.msra.mxu0 0.0
      %425 = vmatprep.subr.mxu0 0.0
      %426 = vmatpush1.msra.mxu0 0.0
      %427 = vmatprep.subr.mxu0 0.0
      %428 = vmatpush1.msra.mxu0 0.0
      %429 = vmatprep.subr.mxu0 0.0
      %430 = vmatpush1.msra.mxu0 0.0
      %431 = vmatprep.subr.mxu0 0.0
      %432 = vmatpush1.msra.mxu0 0.0
      %433 = vmatprep.mubr.f32.mxu0 0.0
      %434 = vmatmul.mubr.f32.gmra.mrb[0].mxu0 %v352
      %v435 = vpop.f32.mrb[0].mxu0
      %v436 = vadd.f32 0.0, %v435
      %v437 = vpop.f32.mrb[0].mxu0
      %438 = vdwg.mxu0
      %v439 = vmax.f32 %v436, 0.0
      %v440 = vld [vmem:[%s2] sm:$0x1]
      %v442 = vlaneseq
      %v443 = vshrl.u32 %v442, 7
      %v444 = vsub.s32 0, %v443
      %v445 = vrot.slane %v440, %v444
      %v447 = vmul.f32 %v439, %v445
      %v448 = vld [vmem:[%s3] sm:$0x1]
      %v450 = vlaneseq
      %v451 = vshrl.u32 %v450, 7
      %v452 = vsub.s32 0, %v451
      %v453 = vrot.slane %v448, %v452
      %v455 = vadd.f32 %v447, %v453
      %456 = vst [vmem:[#allocation2 + $0x1] sm:$0xff] %v455
      %457 = vst [vmem:[#allocation2] sm:$0x1] -inf
      %458 = vst [vmem:[#allocation2 + $0x9] sm:$0x1] 0.0
      %v459 = vld [vmem:[#allocation2] sm:$0xff]
      %v460 = vmax.f32 %v455, %v459
      %461 = vst [vmem:[#allocation2 + $0x1] sm:$0xff] %v460
      %462 = vst [vmem:[#allocation2] sm:$0x1] 0.0
      %v463 = vld [vmem:[#allocation2] sm:$0xff]
      %v464 = vld [vmem:[#allocation2 + $0x1] sm:$0xff]
      %v465 = vld [vmem:[#allocation2 + $0x2] sm:$0xff]
      %v466 = vld [vmem:[%s4] sm:$0xff]
      %v467 = vld [vmem:[%s4 + $0x8] sm:$0xff]
      %v468 = vld [vmem:[%s4 + $0x10] sm:$0xff]
      %v469 = vld [vmem:[%s4 + $0x18] sm:$0xff]
      %v470 = vld [vmem:[%s4 + $0x20] sm:$0xff]
      %v471 = vld [vmem:[%s4 + $0x28] sm:$0xff]
      %v472 = vld [vmem:[%s4 + $0x30] sm:$0xff]
      %v473 = vld [vmem:[%s4 + $0x38] sm:$0xff]
      %v474 = vld [vmem:[%s4 + $0x40] sm:$0xff]
      %v475 = vld [vmem:[%s4 + $0x48] sm:$0xff]
      %v476 = vld [vmem:[%s4 + $0x50] sm:$0xff]
      %v477 = vld [vmem:[%s4 + $0x58] sm:$0xff]
      %v478 = vld [vmem:[%s4 + $0x60] sm:$0xff]
      %v479 = vld [vmem:[%s4 + $0x68] sm:$0xff]
      %v480 = vld [vmem:[%s4 + $0x70] sm:$0xff]
      %v481 = vld [vmem:[%s4 + $0x78] sm:$0xff]
      %v482 = vld [vmem:[%s4 + $0x80] sm:$0xff]
      %v483 = vld [vmem:[%s4 + $0x88] sm:$0xff]
      %v484 = vld [vmem:[%s4 + $0x90] sm:$0xff]
      %v485 = vld [vmem:[%s4 + $0x98] sm:$0xff]
      %v486 = vld [vmem:[%s4 + $0xa0] sm:$0xff]
      %v487 = vld [vmem:[%s4 + $0xa8] sm:$0xff]
      %v488 = vld [vmem:[%s4 + $0xb0] sm:$0xff]
      %v489 = vld [vmem:[%s4 + $0xb8] sm:$0xff]
      %v490 = vld [vmem:[%s4 + $0xc0] sm:$0xff]
      %v491 = vld [vmem:[%s4 + $0xc8] sm:$0xff]
      %v492 = vld [vmem:[%s4 + $0xd0] sm:$0xff]
      %v493 = vld [vmem:[%s4 + $0xd8] sm:$0xff]
      %v494 = vld [vmem:[%s4 + $0xe0] sm:$0xff]
      %v495 = vld [vmem:[%s4 + $0xe8] sm:$0xff]
      %v496 = vld [vmem:[%s4 + $0xf0] sm:$0xff]
      %v497 = vld [vmem:[%s4 + $0xf8] sm:$0xff]
      %v498 = vld [vmem:[%s4 + $0x100] sm:$0xff]
      %v499 = vld [vmem:[%s4 + $0x108] sm:$0xff]
      %v500 = vld [vmem:[%s4 + $0x110] sm:$0xff]
      %v501 = vld [vmem:[%s4 + $0x118] sm:$0xff]
      %v502 = vld [vmem:[%s4 + $0x120] sm:$0xff]
      %v503 = vld [vmem:[%s4 + $0x128] sm:$0xff]
      %v504 = vld [vmem:[%s4 + $0x130] sm:$0xff]
      %v505 = vld [vmem:[%s4 + $0x138] sm:$0xff]
      %v506 = vld [vmem:[%s4 + $0x140] sm:$0xff]
      %v507 = vld [vmem:[%s4 + $0x148] sm:$0xff]
      %v508 = vld [vmem:[%s4 + $0x150] sm:$0xff]
      %v509 = vld [vmem:[%s4 + $0x158] sm:$0xff]
      %v510 = vld [vmem:[%s4 + $0x160] sm:$0xff]
      %v511 = vld [vmem:[%s4 + $0x168] sm:$0xff]
      %v512 = vld [vmem:[%s4 + $0x170] sm:$0xff]
      %v513 = vld [vmem:[%s4 + $0x178] sm:$0xff]
      %514 = vmatprep.subr.mxu0 0.0
      %515 = vmatpush1.msra.mxu0 %v466
      %516 = vmatprep.subr.mxu0 0.0
      %517 = vmatpush1.msra.mxu0 %v467
      %518 = vmatprep.subr.mxu0 0.0
      %519 = vmatpush1.msra.mxu0 %v468
      %520 = vmatprep.subr.mxu0 0.0
      %521 = vmatpush1.msra.mxu0 %v469
      %522 = vmatprep.subr.mxu0 0.0
      %523 = vmatpush1.msra.mxu0 %v470
      %524 = vmatprep.subr.mxu0 0.0
      %525 = vmatpush1.msra.mxu0 %v471
      %526 = vmatprep.subr.mxu0 0.0
      %527 = vmatpush1.msra.mxu0 %v472
      %528 = vmatprep.subr.mxu0 0.0
      %529 = vmatpush1.msra.mxu0 %v473
      %530 = vmatprep.subr.mxu0 0.0
      %531 = vmatpush1.msra.mxu0 %v474
      %532 = vmatprep.subr.mxu0 0.0
      %533 = vmatpush1.msra.mxu0 %v475
      %534 = vmatprep.subr.mxu0 0.0
      %535 = vmatpush1.msra.mxu0 %v476
      %536 = vmatprep.subr.mxu0 0.0
      %537 = vmatpush1.msra.mxu0 %v477
      %538 = vmatprep.subr.mxu0 0.0
      %539 = vmatpush1.msra.mxu0 %v478
      %540 = vmatprep.subr.mxu0 0.0
      %541 = vmatpush1.msra.mxu0 %v479
      %542 = vmatprep.subr.mxu0 0.0
      %543 = vmatpush1.msra.mxu0 %v480
      %544 = vmatprep.subr.mxu0 0.0
      %545 = vmatpush1.msra.mxu0 %v481
      %546 = vmatprep.subr.mxu0 0.0
      %547 = vmatpush1.msra.mxu0 %v482
      %548 = vmatprep.subr.mxu0 0.0
      %549 = vmatpush1.msra.mxu0 %v483
      %550 = vmatprep.subr.mxu0 0.0
      %551 = vmatpush1.msra.mxu0 %v484
      %552 = vmatprep.subr.mxu0 0.0
      %553 = vmatpush1.msra.mxu0 %v485
      %554 = vmatprep.subr.mxu0 0.0
      %555 = vmatpush1.msra.mxu0 %v486
      %556 = vmatprep.subr.mxu0 0.0
      %557 = vmatpush1.msra.mxu0 %v487
      %558 = vmatprep.subr.mxu0 0.0
      %559 = vmatpush1.msra.mxu0 %v488
      %560 = vmatprep.subr.mxu0 0.0
      %561 = vmatpush1.msra.mxu0 %v489
      %562 = vmatprep.subr.mxu0 0.0
      %563 = vmatpush1.msra.mxu0 %v490
      %564 = vmatprep.subr.mxu0 0.0
      %565 = vmatpush1.msra.mxu0 %v491
      %566 = vmatprep.subr.mxu0 0.0
      %567 = vmatpush1.msra.mxu0 %v492
      %568 = vmatprep.subr.mxu0 0.0
      %569 = vmatpush1.msra.mxu0 %v493
      %570 = vmatprep.subr.mxu0 0.0
      %571 = vmatpush1.msra.mxu0 %v494
      %572 = vmatprep.subr.mxu0 0.0
      %573 = vmatpush1.msra.mxu0 %v495
      %574 = vmatprep.subr.mxu0 0.0
      %575 = vmatpush1.msra.mxu0 %v496
      %576 = vmatprep.subr.mxu0 0.0
      %577 = vmatpush1.msra.mxu0 %v497
      %578 = vmatprep.mubr.f32.mxu0 %v464
      %579 = vmatmul.mubr.f32.gmra.mrb[0].mxu0 %v463
      %v580 = vpop.f32.mrb[0].mxu0
      %v581 = vadd.f32 0.0, %v580
      %v582 = vpop.f32.mrb[0].mxu0
      %583 = vdwg.mxu0
      %584 = vmatprep.subr.mxu0 0.0
      %585 = vmatpush1.msra.mxu0 %v498
      %586 = vmatprep.subr.mxu0 0.0
      %587 = vmatpush1.msra.mxu0 %v499
      %588 = vmatprep.subr.mxu0 0.0
      %589 = vmatpush1.msra.mxu0 %v500
      %590 = vmatprep.subr.mxu0 0.0
      %591 = vmatpush1.msra.mxu0 %v501
      %592 = vmatprep.subr.mxu0 0.0
      %593 = vmatpush1.msra.mxu0 %v502
      %594 = vmatprep.subr.mxu0 0.0
      %595 = vmatpush1.msra.mxu0 %v503
      %596 = vmatprep.subr.mxu0 0.0
      %597 = vmatpush1.msra.mxu0 %v504
      %598 = vmatprep.subr.mxu0 0.0
      %599 = vmatpush1.msra.mxu0 %v505
      %600 = vmatprep.subr.mxu0 0.0
      %601 = vmatpush1.msra.mxu0 %v506
      %602 = vmatprep.subr.mxu0 0.0
      %603 = vmatpush1.msra.mxu0 %v507
      %604 = vmatprep.subr.mxu0 0.0
      %605 = vmatpush1.msra.mxu0 %v508
      %606 = vmatprep.subr.mxu0 0.0
      %607 = vmatpush1.msra.mxu0 %v509
      %608 = vmatprep.subr.mxu0 0.0
      %609 = vmatpush1.msra.mxu0 %v510
      %610 = vmatprep.subr.mxu0 0.0
      %611 = vmatpush1.msra.mxu0 %v511
      %612 = vmatprep.subr.mxu0 0.0
      %613 = vmatpush1.msra.mxu0 %v512
      %614 = vmatprep.subr.mxu0 0.0
      %615 = vmatpush1.msra.mxu0 %v513
      %616 = vmatprep.subr.mxu0 0.0
      %617 = vmatpush1.msra.mxu0 0.0
      %618 = vmatprep.subr.mxu0 0.0
      %619 = vmatpush1.msra.mxu0 0.0
      %620 = vmatprep.subr.mxu0 0.0
      %621 = vmatpush1.msra.mxu0 0.0
      %622 = vmatprep.subr.mxu0 0.0
      %623 = vmatpush1.msra.mxu0 0.0
      %624 = vmatprep.subr.mxu0 0.0
      %625 = vmatpush1.msra.mxu0 0.0
      %626 = vmatprep.subr.mxu0 0.0
      %627 = vmatpush1.msra.mxu0 0.0
      %628 = vmatprep.subr.mxu0 0.0
      %629 = vmatpush1.msra.mxu0 0.0
      %630 = vmatprep.subr.mxu0 0.0
      %631 = vmatpush1.msra.mxu0 0.0
      %632 = vmatprep.subr.mxu0 0.0
      %633 = vmatpush1.msra.mxu0 0.0
      %634 = vmatprep.subr.mxu0 0.0
      %635 = vmatpush1.msra.mxu0 0.0
      %636 = vmatprep.subr.mxu0 0.0
      %637 = vmatpush1.msra.mxu0 0.0
      %638 = vmatprep.subr.mxu0 0.0
      %639 = vmatpush1.msra.mxu0 0.0
      %640 = vmatprep.subr.mxu0 0.0
      %641 = vmatpush1.msra.mxu0 0.0
      %642 = vmatprep.subr.mxu0 0.0
      %643 = vmatpush1.msra.mxu0 0.0
      %644 = vmatprep.subr.mxu0 0.0
      %645 = vmatpush1.msra.mxu0 0.0
      %646 = vmatprep.subr.mxu0 0.0
      %647 = vmatpush1.msra.mxu0 0.0
      %648 = vmatprep.mubr.f32.mxu0 0.0
      %649 = vmatmul.mubr.f32.gmra.mrb[0].mxu0 %v465
      %v650 = vpop.f32.mrb[0].mxu0
      %v651 = vadd.f32 %v581, %v650
      %v652 = vpop.f32.mrb[0].mxu0
      %653 = vdwg.mxu0
      %v654 = vmax.f32 %v651, 0.0
      %v655 = vld [vmem:[%s5] sm:$0x1]
      %v657 = vlaneseq
      %v658 = vshrl.u32 %v657, 7
      %v659 = vsub.s32 0, %v658
      %v660 = vrot.slane %v655, %v659
      %v662 = vmul.f32 %v654, %v660
      %v663 = vld [vmem:[%s6] sm:$0x1]
      %v665 = vlaneseq
      %v666 = vshrl.u32 %v665, 7
      %v667 = vsub.s32 0, %v666
      %v668 = vrot.slane %v663, %v667
      %v670 = vadd.f32 %v662, %v668
      %vm671 = vcmask 253952
      %672 = vst.msk [vmem:[#allocation3] sm:$0x1] %vm671, 0.0
      %673 = vst.msk [vmem:[#allocation3 + $0x9] sm:$0x1] %vm671, 0.0
      %674 = vst.msk [vmem:[#allocation3 + $0x1] sm:$0xff] %vm347, %v670
      %v675 = vld [vmem:[#allocation3] sm:$0xff]
      %v676 = vld [vmem:[#allocation3 + $0x1] sm:$0xff]
      %v677 = vld [vmem:[#allocation3 + $0x2] sm:$0xff]
      %679 = vrot.lane.b32.xlu0 %v676, 32
      %v680 = vpop.permute.xlu0 %679
      %683 = vrot.lane.b32.xlu0 %v677, 64
      %v684 = vpop.permute.xlu0 %683
      %v686 = vsel %vm347, %v675, %v680
      %v687 = vsel %vm349, %v686, %v684
      %v688 = vld [vmem:[%s7] sm:$0xff]
      %v689 = vld [vmem:[%s7 + $0x8] sm:$0xff]
      %v690 = vld [vmem:[%s7 + $0x10] sm:$0xff]
      %v691 = vld [vmem:[%s7 + $0x18] sm:$0xff]
      %v692 = vld [vmem:[%s7 + $0x20] sm:$0xff]
      %v693 = vld [vmem:[%s7 + $0x28] sm:$0xff]
      %v694 = vld [vmem:[%s7 + $0x30] sm:$0xff]
      %v695 = vld [vmem:[%s7 + $0x38] sm:$0xff]
      %v696 = vld [vmem:[%s7 + $0x40] sm:$0xff]
      %v697 = vld [vmem:[%s7 + $0x48] sm:$0xff]
      %v698 = vld [vmem:[%s7 + $0x50] sm:$0xff]
      %v699 = vld [vmem:[%s7 + $0x58] sm:$0xff]
      %v700 = vld [vmem:[%s8] sm:$0x1]
      %v702 = vlaneseq
      %v703 = vshrl.u32 %v702, 7
      %v704 = vsub.s32 0, %v703
      %v705 = vrot.slane %v700, %v704
      %v708 = vsel %vm351, %v687, 0
      %710 = vmatprep.subr.mxu0 0.0
      %711 = vmatpush1.msra.mxu0 %v688
      %712 = vmatprep.subr.mxu0 0.0
      %713 = vmatpush1.msra.mxu0 %v689
      %714 = vmatprep.subr.mxu0 0.0
      %715 = vmatpush1.msra.mxu0 %v690
      %716 = vmatprep.subr.mxu0 0.0
      %717 = vmatpush1.msra.mxu0 %v691
      %718 = vmatprep.subr.mxu0 0.0
      %719 = vmatpush1.msra.mxu0 %v692
      %720 = vmatprep.subr.mxu0 0.0
      %721 = vmatpush1.msra.mxu0 %v693
      %722 = vmatprep.subr.mxu0 0.0
      %723 = vmatpush1.msra.mxu0 %v694
      %724 = vmatprep.subr.mxu0 0.0
      %725 = vmatpush1.msra.mxu0 %v695
      %726 = vmatprep.subr.mxu0 0.0
      %727 = vmatpush1.msra.mxu0 %v696
      %728 = vmatprep.subr.mxu0 0.0
      %729 = vmatpush1.msra.mxu0 %v697
      %730 = vmatprep.subr.mxu0 0.0
      %731 = vmatpush1.msra.mxu0 %v698
      %732 = vmatprep.subr.mxu0 0.0
      %733 = vmatpush1.msra.mxu0 %v699
      %734 = vmatprep.subr.mxu0 0.0
      %735 = vmatpush1.msra.mxu0 0.0
      %736 = vmatprep.subr.mxu0 0.0
      %737 = vmatpush1.msra.mxu0 0.0
      %738 = vmatprep.subr.mxu0 0.0
      %739 = vmatpush1.msra.mxu0 0.0
      %740 = vmatprep.subr.mxu0 0.0
      %741 = vmatpush1.msra.mxu0 0.0
      %742 = vmatprep.subr.mxu0 0.0
      %743 = vmatpush1.msra.mxu0 0.0
      %744 = vmatprep.subr.mxu0 0.0
      %745 = vmatpush1.msra.mxu0 0.0
      %746 = vmatprep.subr.mxu0 0.0
      %747 = vmatpush1.msra.mxu0 0.0
      %748 = vmatprep.subr.mxu0 0.0
      %749 = vmatpush1.msra.mxu0 0.0
      %750 = vmatprep.subr.mxu0 0.0
      %751 = vmatpush1.msra.mxu0 0.0
      %752 = vmatprep.subr.mxu0 0.0
      %753 = vmatpush1.msra.mxu0 0.0
      %754 = vmatprep.subr.mxu0 0.0
      %755 = vmatpush1.msra.mxu0 0.0
      %756 = vmatprep.subr.mxu0 0.0
      %757 = vmatpush1.msra.mxu0 0.0
      %758 = vmatprep.subr.mxu0 0.0
      %759 = vmatpush1.msra.mxu0 0.0
      %760 = vmatprep.subr.mxu0 0.0
      %761 = vmatpush1.msra.mxu0 0.0
      %762 = vmatprep.subr.mxu0 0.0
      %763 = vmatpush1.msra.mxu0 0.0
      %764 = vmatprep.subr.mxu0 0.0
      %765 = vmatpush1.msra.mxu0 0.0
      %766 = vmatprep.subr.mxu0 0.0
      %767 = vmatpush1.msra.mxu0 0.0
      %768 = vmatprep.subr.mxu0 0.0
      %769 = vmatpush1.msra.mxu0 0.0
      %770 = vmatprep.subr.mxu0 0.0
      %771 = vmatpush1.msra.mxu0 0.0
      %772 = vmatprep.subr.mxu0 0.0
      %773 = vmatpush1.msra.mxu0 0.0
      %774 = vmatprep.mubr.f32.mxu0 0.0
      %775 = vmatmul.mubr.f32.gmra.mrb[0].mxu0 %v708
      %v776 = vpop.f32.mrb[0].mxu0
      %v777 = vadd.f32 %v705, %v776
      %v778 = vpop.f32.mrb[0].mxu0
      %779 = vdwg.mxu0
      %v780 = vld [vmem:[%s326 + $0x2] sm:$0xff]
      %v781 = vadd.f32 %v777, %v780
      %782 = vst.msk [vmem:[%s330] sm:$0xff] %vm347, %v781
      %p783 = scmp.lt.s32.totalorder %s20, 1
      %s784 = scalar_select %p783, %s20, 1
      %s785 = smul.addr %s784, 8
      %s786 = scalar_lea.vmem %s9, %s785
      // Predicated region
      $region57: #{tacotron_encoder.6} parent=55 // pred_check
        %p787 = pneg %p232
      $region58: #{tacotron_encoder.6} parent=55 // pred_check_branch
        %789 = sbr.rel (%p787) target = $region60
      $region59: #{tacotron_encoder.6} parent=55 // pred_region
        _
      $region60: #{tacotron_encoder.6} parent=55 // pred_fallthru
        _
    $region56: #{tacotron_encoder.6} parent=5 // pred_fallthru
      _
    %p790 = scmp.le.s32.totalorder 2, %s15
    // Predicated region
    $region61: #{tacotron_encoder.6} parent=5 // pred_check
      %p791 = pneg %p790
    $region62: #{tacotron_encoder.6} parent=5 // pred_check_branch
      %793 = sbr.rel (%p791) target = $region64
    $region63: #{tacotron_encoder.6} parent=5 // pred_region
      %s794 = ssub.s32 %s15, 2
      // Predicated region
      $region65: #{tacotron_encoder.6} parent=63 // pred_check
        %p795 = pneg %p238
      $region66: #{tacotron_encoder.6} parent=63 // pred_check_branch
        %797 = sbr.rel (%p795) target = $region68
      $region67: #{tacotron_encoder.6} parent=63 // pred_region
        %p798 = scmp.lt.s32.totalorder %s21, 1
        %s799 = scalar_select %p798, %s21, 1
        %s800 = smul.addr %s799, 8
        %s801 = scalar_lea.vmem %s9, %s800
      $region68: #{tacotron_encoder.6} parent=63 // pred_fallthru
        _
    $region64: #{tacotron_encoder.6} parent=5 // pred_fallthru
      _
  $region6: #{tacotron_encoder.6} parent=0 // loop_footer
    %s19 = sadd.s32 1, %s15
  $region7: #{tacotron_encoder.6} parent=0 // loop_footer_branch
    %14 = sbr.rel target = $region3
  $region8: #{tacotron_encoder.6} parent=0 // loop_exit
    _

// kernel: tacotron_encoder.9
$region0: #{tacotron_encoder.9}
  #allocation0 [shape = 'u32[]', space=smem, size = 0x4, offset = 0x4, fixed_abs, tag = 'smem constant byte address 0x4 - core index']
  #allocation1 [shape = 'u32[144,128]{1,0:T(1,128)}', space=vmem, size = 0x12000, scoped, tag = 'internal scratch']
  %s0 = inlined_call_operand.vmem [shape: f32[16,64], index: 0, kind: input, shape index: {}]
  %s1 = inlined_call_operand.vmem [shape: f32[64,32], index: 1, kind: input, shape index: {}]
  %s2 = inlined_call_operand.vmem [shape: f32[1,32], index: 2, kind: input, shape index: {}]
  %s3 = inlined_call_operand.hbm [shape: f32[16,32], index: 3, kind: output, shape index: {}]
  %s4 = sld [smem:[#allocation0]]
  $region22: #{tacotron_encoder.9} parent=0
    _
  %s6 = ssub.s32 1, %s4
  %s7 = scalar_select 0, %s6, %s4
  $region1: #{tacotron_encoder.9} parent=0
    #allocation2 [shape = 'u8[8192]{0}', space=vmem, size = 0x2000, scoped, tag = 'output window, operand 0, single buffered']
    #allocation3 [shape = 's32[1]{0}', space=sflag, size = 0x4, scoped, tag = 'scoped memory for tacotron_encoder.9']
    %8 = vsyncpa [#allocation3], 0
    // Predicated region
    $region2: #{tacotron_encoder.9} parent=1 // pred_check
      _
    $region3: #{tacotron_encoder.9} parent=1 // pred_check_branch
      %10 = sbr.rel (0) target = $region5
    $region4: #{tacotron_encoder.9} parent=1 // pred_region
      _
    $region5: #{tacotron_encoder.9} parent=1 // pred_fallthru
      _
    // Predicated region
    $region6: #{tacotron_encoder.9} parent=1 // pred_check
      _
    $region7: #{tacotron_encoder.9} parent=1 // pred_check_branch
      %12 = sbr.rel (0) target = $region9
    $region8: #{tacotron_encoder.9} parent=1 // pred_region
      _
    $region9: #{tacotron_encoder.9} parent=1 // pred_fallthru
      _
    // Predicated region
    $region10: #{tacotron_encoder.9} parent=1 // pred_check
      _
    $region11: #{tacotron_encoder.9} parent=1 // pred_check_branch
      %14 = sbr.rel (0) target = $region13
    $region12: #{tacotron_encoder.9} parent=1 // pred_region
      _
    $region13: #{tacotron_encoder.9} parent=1 // pred_fallthru
      _
    %v15 = vld [vmem:[%s0] sm:$0xff]
    %v16 = vld [vmem:[%s0 + $0x8] sm:$0xff]
    %v17 = vld [vmem:[%s1] sm:$0xff]
    %v18 = vld [vmem:[%s1 + $0x8] sm:$0xff]
    %v19 = vld [vmem:[%s1 + $0x10] sm:$0xff]
    %v20 = vld [vmem:[%s1 + $0x18] sm:$0xff]
    %v21 = vld [vmem:[%s1 + $0x20] sm:$0xff]
    %v22 = vld [vmem:[%s1 + $0x28] sm:$0xff]
    %v23 = vld [vmem:[%s1 + $0x30] sm:$0xff]
    %v24 = vld [vmem:[%s1 + $0x38] sm:$0xff]
    %v25 = vld [vmem:[%s2] sm:$0x1]
    %v27 = vlaneseq
    %v28 = vshrl.u32 %v27, 7
    %v29 = vsub.s32 0, %v28
    %v30 = vrot.slane %v25, %v29
    %vm32 = vcmask 523264
    %v34 = vsel %vm32, %v15, 0
    %v37 = vsel %vm32, %v16, 0
    %39 = vmatprep.subr.mxu0 0.0
    %40 = vmatpush1.msra.mxu0 %v17
    %41 = vmatprep.subr.mxu0 0.0
    %42 = vmatpush1.msra.mxu0 %v18
    %43 = vmatprep.subr.mxu0 0.0
    %44 = vmatpush1.msra.mxu0 %v19
    %45 = vmatprep.subr.mxu0 0.0
    %46 = vmatpush1.msra.mxu0 %v20
    %47 = vmatprep.subr.mxu0 0.0
    %48 = vmatpush1.msra.mxu0 %v21
    %49 = vmatprep.subr.mxu0 0.0
    %50 = vmatpush1.msra.mxu0 %v22
    %51 = vmatprep.subr.mxu0 0.0
    %52 = vmatpush1.msra.mxu0 %v23
    %53 = vmatprep.subr.mxu0 0.0
    %54 = vmatpush1.msra.mxu0 %v24
    %55 = vmatprep.subr.mxu0 0.0
    %56 = vmatpush1.msra.mxu0 0.0
    %57 = vmatprep.subr.mxu0 0.0
    %58 = vmatpush1.msra.mxu0 0.0
    %59 = vmatprep.subr.mxu0 0.0
    %60 = vmatpush1.msra.mxu0 0.0
    %61 = vmatprep.subr.mxu0 0.0
    %62 = vmatpush1.msra.mxu0 0.0
    %63 = vmatprep.subr.mxu0 0.0
    %64 = vmatpush1.msra.mxu0 0.0
    %65 = vmatprep.subr.mxu0 0.0
    %66 = vmatpush1.msra.mxu0 0.0
    %67 = vmatprep.subr.mxu0 0.0
    %68 = vmatpush1.msra.mxu0 0.0
    %69 = vmatprep.subr.mxu0 0.0
    %70 = vmatpush1.msra.mxu0 0.0
    %71 = vmatprep.subr.mxu0 0.0
    %72 = vmatpush1.msra.mxu0 0.0
    %73 = vmatprep.subr.mxu0 0.0
    %74 = vmatpush1.msra.mxu0 0.0
    %75 = vmatprep.subr.mxu0 0.0
    %76 = vmatpush1.msra.mxu0 0.0
    %77 = vmatprep.subr.mxu0 0.0
    %78 = vmatpush1.msra.mxu0 0.0
    %79 = vmatprep.subr.mxu0 0.0
    %80 = vmatpush1.msra.mxu0 0.0
    %81 = vmatprep.subr.mxu0 0.0
    %82 = vmatpush1.msra.mxu0 0.0
    %83 = vmatprep.subr.mxu0 0.0
    %84 = vmatpush1.msra.mxu0 0.0
    %85 = vmatprep.subr.mxu0 0.0
    %86 = vmatpush1.msra.mxu0 0.0
    %87 = vmatprep.subr.mxu0 0.0
    %88 = vmatpush1.msra.mxu0 0.0
    %89 = vmatprep.subr.mxu0 0.0
    %90 = vmatpush1.msra.mxu0 0.0
    %91 = vmatprep.subr.mxu0 0.0
    %92 = vmatpush1.msra.mxu0 0.0
    %93 = vmatprep.subr.mxu0 0.0
    %94 = vmatpush1.msra.mxu0 0.0
    %95 = vmatprep.subr.mxu0 0.0
    %96 = vmatpush1.msra.mxu0 0.0
    %97 = vmatprep.subr.mxu0 0.0
    %98 = vmatpush1.msra.mxu0 0.0
    %99 = vmatprep.subr.mxu0 0.0
    %100 = vmatpush1.msra.mxu0 0.0
    %101 = vmatprep.subr.mxu0 0.0
    %102 = vmatpush1.msra.mxu0 0.0
    %103 = vmatprep.mubr.f32.mxu0 0.0
    %104 = vmatmul.mubr.f32.gmra.mrb[0].mxu0 %v34
    %v105 = vpop.f32.mrb[0].mxu0
    %v106 = vadd.f32 %v30, %v105
    %v107 = vpop.f32.mrb[0].mxu0
    %108 = vmatprep.mubr.f32.mxu0 0.0
    %109 = vmatmul.mubr.f32.gmra.mrb[0].mxu0 %v37
    %v110 = vpop.f32.mrb[0].mxu0
    %v111 = vadd.f32 %v30, %v110
    %v112 = vpop.f32.mrb[0].mxu0
    %113 = vdwg.mxu0
    %vm114 = vcmask 261120
    %115 = vst.msk [vmem:[#allocation2] sm:$0xff] %vm114, %v106
    %116 = vst.msk [vmem:[#allocation2 + $0x8] sm:$0xff] %vm114, %v111
    // Predicated region
    $region14: #{tacotron_encoder.9} parent=1 // pred_check
      _
    $region15: #{tacotron_encoder.9} parent=1 // pred_check_branch
      %118 = sbr.rel (0) target = $region17
    $region16: #{tacotron_encoder.9} parent=1 // pred_region
      %s120 = ssub.s32 256, 256
      %121 = vsyncadd [#allocation3], %s120
      %s122 = sshll.u32 [#allocation2], 4
      %s123 = int_to_ptr.vmem [resolvable:$true] %s122
      %128 = dma.vmem_to_hbm [thread:$0]  %s123, 256, %s3, [#allocation3], 128, 128, 8
    $region17: #{tacotron_encoder.9} parent=1 // pred_fallthru
      _
    // Predicated region
    $region18: #{tacotron_encoder.9} parent=1 // pred_check
      _
    $region19: #{tacotron_encoder.9} parent=1 // pred_check_branch
      %130 = sbr.rel (0) target = $region21
    $region20: #{tacotron_encoder.9} parent=1 // pred_region
      %131 = dma.done [#allocation3], 256
    $region21: #{tacotron_encoder.9} parent=1 // pred_fallthru
      _
    %132 = vsyncpa [#allocation3], 1

// kernel: tacotron_encoder.8
$region0: #{tacotron_encoder.8}
  #allocation0 [shape = 'u32[]', space=smem, size = 0x4, offset = 0x4, fixed_abs, tag = 'smem constant byte address 0x4 - core index']
  #allocation1 [shape = 'u32[144,128]{1,0:T(1,128)}', space=vmem, size = 0x12000, scoped, tag = 'internal scratch']
  %s0 = inlined_call_operand.vmem [shape: f32[8,2,96], index: 0, kind: input, shape index: {}]
  %s1 = inlined_call_operand.vmem [shape: f32[8,2,96], index: 1, kind: input, shape index: {}]
  %s2 = inlined_call_operand.vmem [shape: f32[64,192], index: 2, kind: input, shape index: {}]
  %s3 = inlined_call_operand.vmem [shape: f32[1,192], index: 3, kind: input, shape index: {}]
  %s4 = inlined_call_operand.vmem [shape: f32[8,2,32], index: 4, kind: output, shape index: {0}]
  %s5 = inlined_call_operand.vmem [shape: f32[8,2,32], index: 5, kind: output, shape index: {1}]
  %6 = xla_tuple %s4, %s5
  %s7 = sld [smem:[#allocation0]]
  $region34: #{tacotron_encoder.8} parent=0
    _
  %s9 = ssub.s32 1, %s7
  %s10 = scalar_select 0, %s9, %s7
  // Predicated region
  $region2: #{tacotron_encoder.8} parent=0 // pred_check
    _
  $region3: #{tacotron_encoder.8} parent=0 // pred_check_branch
    %12 = sbr.rel (0) target = $region5
  $region4: #{tacotron_encoder.8} parent=0 // pred_region
    _
  $region5: #{tacotron_encoder.8} parent=0 // pred_fallthru
    _
  // Predicated region
  $region6: #{tacotron_encoder.8} parent=0 // pred_check
    _
  $region7: #{tacotron_encoder.8} parent=0 // pred_check_branch
    %14 = sbr.rel (0) target = $region9
  $region8: #{tacotron_encoder.8} parent=0 // pred_region
    _
  $region9: #{tacotron_encoder.8} parent=0 // pred_fallthru
    _
  // Predicated region
  $region10: #{tacotron_encoder.8} parent=0 // pred_check
    _
  $region11: #{tacotron_encoder.8} parent=0 // pred_check_branch
    %16 = sbr.rel (0) target = $region13
  $region12: #{tacotron_encoder.8} parent=0 // pred_region
    _
  $region13: #{tacotron_encoder.8} parent=0 // pred_fallthru
    _
  // Predicated region
  $region14: #{tacotron_encoder.8} parent=0 // pred_check
    _
  $region15: #{tacotron_encoder.8} parent=0 // pred_check_branch
    %18 = sbr.rel (0) target = $region17
  $region16: #{tacotron_encoder.8} parent=0 // pred_region
    _
  $region17: #{tacotron_encoder.8} parent=0 // pred_fallthru
    _
  %v19 = vld [vmem:[%s2] sm:$0xff]
  %v20 = vld [vmem:[%s2 + $0x8] sm:$0xff]
  %v21 = vld [vmem:[%s2 + $0x10] sm:$0xff]
  %v22 = vld [vmem:[%s2 + $0x18] sm:$0xff]
  %v23 = vld [vmem:[%s2 + $0x20] sm:$0xff]
  %v24 = vld [vmem:[%s2 + $0x28] sm:$0xff]
  %v25 = vld [vmem:[%s2 + $0x30] sm:$0xff]
  %v26 = vld [vmem:[%s2 + $0x38] sm:$0xff]
  %v27 = vld [vmem:[%s2 + $0x40] sm:$0xff]
  %v28 = vld [vmem:[%s2 + $0x48] sm:$0xff]
  %v29 = vld [vmem:[%s2 + $0x50] sm:$0xff]
  %v30 = vld [vmem:[%s2 + $0x58] sm:$0xff]
  %v31 = vld [vmem:[%s2 + $0x60] sm:$0xff]
  %v32 = vld [vmem:[%s2 + $0x68] sm:$0xff]
  %v33 = vld [vmem:[%s2 + $0x70] sm:$0xff]
  %v34 = vld [vmem:[%s2 + $0x78] sm:$0xff]
  %v35 = vld [vmem:[%s3] sm:$0x3]
  %v36 = vld [vmem:[%s0] sm:$0x3]
  %s37 = scalar_lea.vmem %s1, 14
  %v38 = vld [vmem:[%s37] sm:$0x3]
  %v40 = vlaneseq
  %v41 = vshrl.u32 %v40, 7
  %v42 = vsub.s32 0, %v41
  %v43 = vrot.slane %v35, %v42
  %v44 = vlaneseq
  %v45 = vshrl.u32 %v44, 7
  %v46 = vsub.s32 1, %v45
  %v47 = vrot.slane %v35, %v46
  %vm50 = vcmask 523264
  %v52 = vsel %vm50, 0.0, 0
  %54 = vmatprep.subr.mxu0 %v20
  %55 = vmatpush1.msra.mxu0 %v19
  %56 = vmatprep.subr.mxu0 %v22
  %57 = vmatpush1.msra.mxu0 %v21
  %58 = vmatprep.subr.mxu0 %v24
  %59 = vmatpush1.msra.mxu0 %v23
  %60 = vmatprep.subr.mxu0 %v26
  %61 = vmatpush1.msra.mxu0 %v25
  %62 = vmatprep.subr.mxu0 %v28
  %63 = vmatpush1.msra.mxu0 %v27
  %64 = vmatprep.subr.mxu0 %v30
  %65 = vmatpush1.msra.mxu0 %v29
  %66 = vmatprep.subr.mxu0 %v32
  %67 = vmatpush1.msra.mxu0 %v31
  %68 = vmatprep.subr.mxu0 %v34
  %69 = vmatpush1.msra.mxu0 %v33
  %70 = vmatprep.subr.mxu0 0.0
  %71 = vmatpush1.msra.mxu0 0.0
  %72 = vmatprep.subr.mxu0 0.0
  %73 = vmatpush1.msra.mxu0 0.0
  %74 = vmatprep.subr.mxu0 0.0
  %75 = vmatpush1.msra.mxu0 0.0
  %76 = vmatprep.subr.mxu0 0.0
  %77 = vmatpush1.msra.mxu0 0.0
  %78 = vmatprep.subr.mxu0 0.0
  %79 = vmatpush1.msra.mxu0 0.0
  %80 = vmatprep.subr.mxu0 0.0
  %81 = vmatpush1.msra.mxu0 0.0
  %82 = vmatprep.subr.mxu0 0.0
  %83 = vmatpush1.msra.mxu0 0.0
  %84 = vmatprep.subr.mxu0 0.0
  %85 = vmatpush1.msra.mxu0 0.0
  %86 = vmatprep.subr.mxu0 0.0
  %87 = vmatpush1.msra.mxu0 0.0
  %88 = vmatprep.subr.mxu0 0.0
  %89 = vmatpush1.msra.mxu0 0.0
  %90 = vmatprep.subr.mxu0 0.0
  %91 = vmatpush1.msra.mxu0 0.0
  %92 = vmatprep.subr.mxu0 0.0
  %93 = vmatpush1.msra.mxu0 0.0
  %94 = vmatprep.subr.mxu0 0.0
  %95 = vmatpush1.msra.mxu0 0.0
  %96 = vmatprep.subr.mxu0 0.0
  %97 = vmatpush1.msra.mxu0 0.0
  %98 = vmatprep.subr.mxu0 0.0
  %99 = vmatpush1.msra.mxu0 0.0
  %100 = vmatprep.subr.mxu0 0.0
  %101 = vmatpush1.msra.mxu0 0.0
  %102 = vmatprep.subr.mxu0 0.0
  %103 = vmatpush1.msra.mxu0 0.0
  %104 = vmatprep.subr.mxu0 0.0
  %105 = vmatpush1.msra.mxu0 0.0
  %106 = vmatprep.subr.mxu0 0.0
  %107 = vmatpush1.msra.mxu0 0.0
  %108 = vmatprep.subr.mxu0 0.0
  %109 = vmatpush1.msra.mxu0 0.0
  %110 = vmatprep.subr.mxu0 0.0
  %111 = vmatpush1.msra.mxu0 0.0
  %112 = vmatprep.subr.mxu0 0.0
  %113 = vmatpush1.msra.mxu0 0.0
  %114 = vmatprep.subr.mxu0 0.0
  %115 = vmatpush1.msra.mxu0 0.0
  %116 = vmatprep.subr.mxu0 0.0
  %117 = vmatpush1.msra.mxu0 0.0
  %118 = vmatprep.mubr.f32.mxu0 0.0
  %119 = vmatmul.mubr.f32.gmra.mrb[0].mxu0 %v52
  %v120 = vpop.f32.mrb[0].mxu0
  %v121 = vadd.f32 %v43, %v120
  %v122 = vpop.f32.mrb[0].mxu0
  %v123 = vadd.f32 %v47, %v122
  %124 = vdwg.mxu0
  %v125 = vadd.f32 %v36, %v121
  %v126 = vxor.u32 %v125, 2147483648
  %v127 = vmul.f32 %v126, 1.442695
  %v128 = vpow.pop %v127
  %v129 = vadd.f32 %v128, 1.0
  %v130 = vrcp.pop %v129
  %v131 = vmul.f32 1.0, %v130
  %133 = vrot.lane.b32.xlu0 %v121, 64
  %v134 = vpop.permute.xlu0 %133
  %v136 = vmul.f32 %v131, %v134
  %138 = vrot.lane.b32.xlu0 %v136, 64
  %v139 = vpop.permute.xlu0 %138
  %v141 = vadd.f32 %v36, %v139
  %v142 = vtanh.pop %v141
  %v143 = vsub.f32 1.0, %v131
  %145 = vrot.lane.b32.xlu0 %v142, 96
  %v146 = vpop.permute.xlu0 %145
  %v148 = vmul.f32 %v143, %v146
  %v149 = vmul.f32 %v131, 0.0
  %v150 = vadd.f32 %v148, %v149
  %151 = vrot.lane.b32.xlu0 %v121, 32
  %v152 = vpop.permute.xlu0 %151
  %v154 = vadd.f32 %v38, %v152
  %v155 = vxor.u32 %v154, 2147483648
  %v156 = vmul.f32 %v155, 1.442695
  %v157 = vpow.pop %v156
  %v158 = vadd.f32 %v157, 1.0
  %v159 = vrcp.pop %v158
  %v160 = vmul.f32 1.0, %v159
  %162 = vrot.lane.b32.xlu0 %v123, 32
  %v163 = vpop.permute.xlu0 %162
  %v165 = vadd.f32 %v38, %v163
  %v166 = vxor.u32 %v165, 2147483648
  %v167 = vmul.f32 %v166, 1.442695
  %v168 = vpow.pop %v167
  %v169 = vadd.f32 %v168, 1.0
  %v170 = vrcp.pop %v169
  %v171 = vmul.f32 1.0, %v170
  %172 = vrot.lane.b32.xlu0 %v123, 96
  %v173 = vpop.permute.xlu0 %172
  %v175 = vmul.f32 %v160, %v173
  %177 = vrot.lane.b32.xlu0 %v175, 64
  %v178 = vpop.permute.xlu0 %177
  %v180 = vadd.f32 %v38, %v178
  %v181 = vtanh.pop %v180
  %v182 = vsub.f32 1.0, %v171
  %184 = vrot.lane.b32.xlu0 %v181, 96
  %v185 = vpop.permute.xlu0 %184
  %v187 = vmul.f32 %v182, %v185
  %v188 = vmul.f32 %v171, 0.0
  %v189 = vadd.f32 %v187, %v188
  %191 = vrot.lane.b32.xlu0 %v150, 96
  %v192 = vpop.permute.xlu0 %191
  %vm194 = vcmask 254976
  %195 = vst.msk [vmem:[%s4] sm:$0x3] %vm194, %v192
  %197 = vrot.lane.b32.xlu0 %v189, 96
  %v198 = vpop.permute.xlu0 %197
  %s200 = scalar_lea.vmem %s5, 14
  %201 = vst.msk [vmem:[%s200] sm:$0x3] %vm194, %v198
  %vm202 = vcmask 261120
  %v203 = vsel %vm202, %v192, %v189
  %s204 = scalar_lea.vmem %s0, 2
  %v205 = vld [vmem:[%s204] sm:$0x3]
  %s206 = scalar_lea.vmem %s1, 12
  %v207 = vld [vmem:[%s206] sm:$0x3]
  %v209 = vsel %vm50, %v203, 0
  %211 = vmatprep.subr.mxu0 %v20
  %212 = vmatpush1.msra.mxu0 %v19
  %213 = vmatprep.subr.mxu0 %v22
  %214 = vmatpush1.msra.mxu0 %v21
  %215 = vmatprep.subr.mxu0 %v24
  %216 = vmatpush1.msra.mxu0 %v23
  %217 = vmatprep.subr.mxu0 %v26
  %218 = vmatpush1.msra.mxu0 %v25
  %219 = vmatprep.subr.mxu0 %v28
  %220 = vmatpush1.msra.mxu0 %v27
  %221 = vmatprep.subr.mxu0 %v30
  %222 = vmatpush1.msra.mxu0 %v29
  %223 = vmatprep.subr.mxu0 %v32
  %224 = vmatpush1.msra.mxu0 %v31
  %225 = vmatprep.subr.mxu0 %v34
  %226 = vmatpush1.msra.mxu0 %v33
  %227 = vmatprep.subr.mxu0 0.0
  %228 = vmatpush1.msra.mxu0 0.0
  %229 = vmatprep.subr.mxu0 0.0
  %230 = vmatpush1.msra.mxu0 0.0
  %231 = vmatprep.subr.mxu0 0.0
  %232 = vmatpush1.msra.mxu0 0.0
  %233 = vmatprep.subr.mxu0 0.0
  %234 = vmatpush1.msra.mxu0 0.0
  %235 = vmatprep.subr.mxu0 0.0
  %236 = vmatpush1.msra.mxu0 0.0
  %237 = vmatprep.subr.mxu0 0.0
  %238 = vmatpush1.msra.mxu0 0.0
  %239 = vmatprep.subr.mxu0 0.0
  %240 = vmatpush1.msra.mxu0 0.0
  %241 = vmatprep.subr.mxu0 0.0
  %242 = vmatpush1.msra.mxu0 0.0
  %243 = vmatprep.subr.mxu0 0.0
  %244 = vmatpush1.msra.mxu0 0.0
  %245 = vmatprep.subr.mxu0 0.0
  %246 = vmatpush1.msra.mxu0 0.0
  %247 = vmatprep.subr.mxu0 0.0
  %248 = vmatpush1.msra.mxu0 0.0
  %249 = vmatprep.subr.mxu0 0.0
  %250 = vmatpush1.msra.mxu0 0.0
  %251 = vmatprep.subr.mxu0 0.0
  %252 = vmatpush1.msra.mxu0 0.0
  %253 = vmatprep.subr.mxu0 0.0
  %254 = vmatpush1.msra.mxu0 0.0
  %255 = vmatprep.subr.mxu0 0.0
  %256 = vmatpush1.msra.mxu0 0.0
  %257 = vmatprep.subr.mxu0 0.0
  %258 = vmatpush1.msra.mxu0 0.0
  %259 = vmatprep.subr.mxu0 0.0
  %260 = vmatpush1.msra.mxu0 0.0
  %261 = vmatprep.subr.mxu0 0.0
  %262 = vmatpush1.msra.mxu0 0.0
  %263 = vmatprep.subr.mxu0 0.0
  %264 = vmatpush1.msra.mxu0 0.0
  %265 = vmatprep.subr.mxu0 0.0
  %266 = vmatpush1.msra.mxu0 0.0
  %267 = vmatprep.subr.mxu0 0.0
  %268 = vmatpush1.msra.mxu0 0.0
  %269 = vmatprep.subr.mxu0 0.0
  %270 = vmatpush1.msra.mxu0 0.0
  %271 = vmatprep.subr.mxu0 0.0
  %272 = vmatpush1.msra.mxu0 0.0
  %273 = vmatprep.subr.mxu0 0.0
  %274 = vmatpush1.msra.mxu0 0.0
  %275 = vmatprep.mubr.f32.mxu0 0.0
  %276 = vmatmul.mubr.f32.gmra.mrb[0].mxu0 %v209
  %v277 = vpop.f32.mrb[0].mxu0
  %v278 = vadd.f32 %v43, %v277
  %v279 = vpop.f32.mrb[0].mxu0
  %v280 = vadd.f32 %v47, %v279
  %281 = vdwg.mxu0
  %v282 = vadd.f32 %v205, %v278
  %v283 = vxor.u32 %v282, 2147483648
  %v284 = vmul.f32 %v283, 1.442695
  %v285 = vpow.pop %v284
  %v286 = vadd.f32 %v285, 1.0
  %v287 = vrcp.pop %v286
  %v288 = vmul.f32 1.0, %v287
  %290 = vrot.lane.b32.xlu0 %v278, 64
  %v291 = vpop.permute.xlu0 %290
  %v293 = vmul.f32 %v288, %v291
  %295 = vrot.lane.b32.xlu0 %v293, 64
  %v296 = vpop.permute.xlu0 %295
  %v298 = vadd.f32 %v205, %v296
  %v299 = vtanh.pop %v298
  %v300 = vsub.f32 1.0, %v288
  %302 = vrot.lane.b32.xlu0 %v299, 96
  %v303 = vpop.permute.xlu0 %302
  %v305 = vmul.f32 %v300, %v303
  %306 = vrot.lane.b32.xlu0 %v203, 32
  %v307 = vpop.permute.xlu0 %306
  %v309 = vmul.f32 %v288, %v307
  %v310 = vadd.f32 %v305, %v309
  %311 = vrot.lane.b32.xlu0 %v278, 32
  %v312 = vpop.permute.xlu0 %311
  %v314 = vadd.f32 %v207, %v312
  %v315 = vxor.u32 %v314, 2147483648
  %v316 = vmul.f32 %v315, 1.442695
  %v317 = vpow.pop %v316
  %v318 = vadd.f32 %v317, 1.0
  %v319 = vrcp.pop %v318
  %v320 = vmul.f32 1.0, %v319
  %322 = vrot.lane.b32.xlu0 %v280, 32
  %v323 = vpop.permute.xlu0 %322
  %v325 = vadd.f32 %v207, %v323
  %v326 = vxor.u32 %v325, 2147483648
  %v327 = vmul.f32 %v326, 1.442695
  %v328 = vpow.pop %v327
  %v329 = vadd.f32 %v328, 1.0
  %v330 = vrcp.pop %v329
  %v331 = vmul.f32 1.0, %v330
  %332 = vrot.lane.b32.xlu0 %v280, 96
  %v333 = vpop.permute.xlu0 %332
  %v335 = vmul.f32 %v320, %v333
  %337 = vrot.lane.b32.xlu0 %v335, 64
  %v338 = vpop.permute.xlu0 %337
  %v340 = vadd.f32 %v207, %v338
  %v341 = vtanh.pop %v340
  %v342 = vsub.f32 1.0, %v331
  %344 = vrot.lane.b32.xlu0 %v341, 96
  %v345 = vpop.permute.xlu0 %344
  %v347 = vmul.f32 %v342, %v345
  %v348 = vmul.f32 %v331, %v203
  %v349 = vadd.f32 %v347, %v348
  %351 = vrot.lane.b32.xlu0 %v310, 96
  %v352 = vpop.permute.xlu0 %351
  %s354 = scalar_lea.vmem %s4, 2
  %355 = vst.msk [vmem:[%s354] sm:$0x3] %vm194, %v352
  %357 = vrot.lane.b32.xlu0 %v349, 96
  %v358 = vpop.permute.xlu0 %357
  %s360 = scalar_lea.vmem %s5, 12
  %361 = vst.msk [vmem:[%s360] sm:$0x3] %vm194, %v358
  %v362 = vsel %vm202, %v352, %v349
  %s363 = scalar_lea.vmem %s0, 4
  %v364 = vld [vmem:[%s363] sm:$0x3]
  %s365 = scalar_lea.vmem %s1, 10
  %v366 = vld [vmem:[%s365] sm:$0x3]
  %v368 = vsel %vm50, %v362, 0
  %370 = vmatprep.subr.mxu0 %v20
  %371 = vmatpush1.msra.mxu0 %v19
  %372 = vmatprep.subr.mxu0 %v22
  %373 = vmatpush1.msra.mxu0 %v21
  %374 = vmatprep.subr.mxu0 %v24
  %375 = vmatpush1.msra.mxu0 %v23
  %376 = vmatprep.subr.mxu0 %v26
  %377 = vmatpush1.msra.mxu0 %v25
  %378 = vmatprep.subr.mxu0 %v28
  %379 = vmatpush1.msra.mxu0 %v27
  %380 = vmatprep.subr.mxu0 %v30
  %381 = vmatpush1.msra.mxu0 %v29
  %382 = vmatprep.subr.mxu0 %v32
  %383 = vmatpush1.msra.mxu0 %v31
  %384 = vmatprep.subr.mxu0 %v34
  %385 = vmatpush1.msra.mxu0 %v33
  %386 = vmatprep.subr.mxu0 0.0
  %387 = vmatpush1.msra.mxu0 0.0
  %388 = vmatprep.subr.mxu0 0.0
  %389 = vmatpush1.msra.mxu0 0.0
  %390 = vmatprep.subr.mxu0 0.0
  %391 = vmatpush1.msra.mxu0 0.0
  %392 = vmatprep.subr.mxu0 0.0
  %393 = vmatpush1.msra.mxu0 0.0
  %394 = vmatprep.subr.mxu0 0.0
  %395 = vmatpush1.msra.mxu0 0.0
  %396 = vmatprep.subr.mxu0 0.0
  %397 = vmatpush1.msra.mxu0 0.0
  %398 = vmatprep.subr.mxu0 0.0
  %399 = vmatpush1.msra.mxu0 0.0
  %400 = vmatprep.subr.mxu0 0.0
  %401 = vmatpush1.msra.mxu0 0.0
  %402 = vmatprep.subr.mxu0 0.0
  %403 = vmatpush1.msra.mxu0 0.0
  %404 = vmatprep.subr.mxu0 0.0
  %405 = vmatpush1.msra.mxu0 0.0
  %406 = vmatprep.subr.mxu0 0.0
  %407 = vmatpush1.msra.mxu0 0.0
  %408 = vmatprep.subr.mxu0 0.0
  %409 = vmatpush1.msra.mxu0 0.0
  %410 = vmatprep.subr.mxu0 0.0
  %411 = vmatpush1.msra.mxu0 0.0
  %412 = vmatprep.subr.mxu0 0.0
  %413 = vmatpush1.msra.mxu0 0.0
  %414 = vmatprep.subr.mxu0 0.0
  %415 = vmatpush1.msra.mxu0 0.0
  %416 = vmatprep.subr.mxu0 0.0
  %417 = vmatpush1.msra.mxu0 0.0
  %418 = vmatprep.subr.mxu0 0.0
  %419 = vmatpush1.msra.mxu0 0.0
  %420 = vmatprep.subr.mxu0 0.0
  %421 = vmatpush1.msra.mxu0 0.0
  %422 = vmatprep.subr.mxu0 0.0
  %423 = vmatpush1.msra.mxu0 0.0
  %424 = vmatprep.subr.mxu0 0.0
  %425 = vmatpush1.msra.mxu0 0.0
  %426 = vmatprep.subr.mxu0 0.0
  %427 = vmatpush1.msra.mxu0 0.0
  %428 = vmatprep.subr.mxu0 0.0
  %429 = vmatpush1.msra.mxu0 0.0
  %430 = vmatprep.subr.mxu0 0.0
  %431 = vmatpush1.msra.mxu0 0.0
  %432 = vmatprep.subr.mxu0 0.0
  %433 = vmatpush1.msra.mxu0 0.0
  %434 = vmatprep.mubr.f32.mxu0 0.0
  %435 = vmatmul.mubr.f32.gmra.mrb[0].mxu0 %v368
  %v436 = vpop.f32.mrb[0].mxu0
  %v437 = vadd.f32 %v43, %v436
  %v438 = vpop.f32.mrb[0].mxu0
  %v439 = vadd.f32 %v47, %v438
  %440 = vdwg.mxu0
  %v441 = vadd.f32 %v364, %v437
  %v442 = vxor.u32 %v441, 2147483648
  %v443 = vmul.f32 %v442, 1.442695
  %v444 = vpow.pop %v443
  %v445 = vadd.f32 %v444, 1.0
  %v446 = vrcp.pop %v445
  %v447 = vmul.f32 1.0, %v446
  %449 = vrot.lane.b32.xlu0 %v437, 64
  %v450 = vpop.permute.xlu0 %449
  %v452 = vmul.f32 %v447, %v450
  %454 = vrot.lane.b32.xlu0 %v452, 64
  %v455 = vpop.permute.xlu0 %454
  %v457 = vadd.f32 %v364, %v455
  %v458 = vtanh.pop %v457
  %v459 = vsub.f32 1.0, %v447
  %461 = vrot.lane.b32.xlu0 %v458, 96
  %v462 = vpop.permute.xlu0 %461
  %v464 = vmul.f32 %v459, %v462
  %465 = vrot.lane.b32.xlu0 %v362, 32
  %v466 = vpop.permute.xlu0 %465
  %v468 = vmul.f32 %v447, %v466
  %v469 = vadd.f32 %v464, %v468
  %470 = vrot.lane.b32.xlu0 %v437, 32
  %v471 = vpop.permute.xlu0 %470
  %v473 = vadd.f32 %v366, %v471
  %v474 = vxor.u32 %v473, 2147483648
  %v475 = vmul.f32 %v474, 1.442695
  %v476 = vpow.pop %v475
  %v477 = vadd.f32 %v476, 1.0
  %v478 = vrcp.pop %v477
  %v479 = vmul.f32 1.0, %v478
  %481 = vrot.lane.b32.xlu0 %v439, 32
  %v482 = vpop.permute.xlu0 %481
  %v484 = vadd.f32 %v366, %v482
  %v485 = vxor.u32 %v484, 2147483648
  %v486 = vmul.f32 %v485, 1.442695
  %v487 = vpow.pop %v486
  %v488 = vadd.f32 %v487, 1.0
  %v489 = vrcp.pop %v488
  %v490 = vmul.f32 1.0, %v489
  %491 = vrot.lane.b32.xlu0 %v439, 96
  %v492 = vpop.permute.xlu0 %491
  %v494 = vmul.f32 %v479, %v492
  %496 = vrot.lane.b32.xlu0 %v494, 64
  %v497 = vpop.permute.xlu0 %496
  %v499 = vadd.f32 %v366, %v497
  %v500 = vtanh.pop %v499
  %v501 = vsub.f32 1.0, %v490
  %503 = vrot.lane.b32.xlu0 %v500, 96
  %v504 = vpop.permute.xlu0 %503
  %v506 = vmul.f32 %v501, %v504
  %v507 = vmul.f32 %v490, %v362
  %v508 = vadd.f32 %v506, %v507
  %510 = vrot.lane.b32.xlu0 %v469, 96
  %v511 = vpop.permute.xlu0 %510
  %s513 = scalar_lea.vmem %s4, 4
  %514 = vst.msk [vmem:[%s513] sm:$0x3] %vm194, %v511
  %516 = vrot.lane.b32.xlu0 %v508, 96
  %v517 = vpop.permute.xlu0 %516
  %s519 = scalar_lea.vmem %s5, 10
  %520 = vst.msk [vmem:[%s519] sm:$0x3] %vm194, %v517
  %v521 = vsel %vm202, %v511, %v508
  %s522 = scalar_lea.vmem %s0, 6
  %v523 = vld [vmem:[%s522] sm:$0x3]
  %s524 = scalar_lea.vmem %s1, 8
  %v525 = vld [vmem:[%s524] sm:$0x3]
  %v527 = vsel %vm50, %v521, 0
  %529 = vmatprep.subr.mxu0 %v20
  %530 = vmatpush1.msra.mxu0 %v19
  %531 = vmatprep.subr.mxu0 %v22
  %532 = vmatpush1.msra.mxu0 %v21
  %533 = vmatprep.subr.mxu0 %v24
  %534 = vmatpush1.msra.mxu0 %v23
  %535 = vmatprep.subr.mxu0 %v26
  %536 = vmatpush1.msra.mxu0 %v25
  %537 = vmatprep.subr.mxu0 %v28
  %538 = vmatpush1.msra.mxu0 %v27
  %539 = vmatprep.subr.mxu0 %v30
  %540 = vmatpush1.msra.mxu0 %v29
  %541 = vmatprep.subr.mxu0 %v32
  %542 = vmatpush1.msra.mxu0 %v31
  %543 = vmatprep.subr.mxu0 %v34
  %544 = vmatpush1.msra.mxu0 %v33
  %545 = vmatprep.subr.mxu0 0.0
  %546 = vmatpush1.msra.mxu0 0.0
  %547 = vmatprep.subr.mxu0 0.0
  %548 = vmatpush1.msra.mxu0 0.0
  %549 = vmatprep.subr.mxu0 0.0
  %550 = vmatpush1.msra.mxu0 0.0
  %551 = vmatprep.subr.mxu0 0.0
  %552 = vmatpush1.msra.mxu0 0.0
  %553 = vmatprep.subr.mxu0 0.0
  %554 = vmatpush1.msra.mxu0 0.0
  %555 = vmatprep.subr.mxu0 0.0
  %556 = vmatpush1.msra.mxu0 0.0
  %557 = vmatprep.subr.mxu0 0.0
  %558 = vmatpush1.msra.mxu0 0.0
  %559 = vmatprep.subr.mxu0 0.0
  %560 = vmatpush1.msra.mxu0 0.0
  %561 = vmatprep.subr.mxu0 0.0
  %562 = vmatpush1.msra.mxu0 0.0
  %563 = vmatprep.subr.mxu0 0.0
  %564 = vmatpush1.msra.mxu0 0.0
  %565 = vmatprep.subr.mxu0 0.0
  %566 = vmatpush1.msra.mxu0 0.0
  %567 = vmatprep.subr.mxu0 0.0
  %568 = vmatpush1.msra.mxu0 0.0
  %569 = vmatprep.subr.mxu0 0.0
  %570 = vmatpush1.msra.mxu0 0.0
  %571 = vmatprep.subr.mxu0 0.0
  %572 = vmatpush1.msra.mxu0 0.0
  %573 = vmatprep.subr.mxu0 0.0
  %574 = vmatpush1.msra.mxu0 0.0
  %575 = vmatprep.subr.mxu0 0.0
  %576 = vmatpush1.msra.mxu0 0.0
  %577 = vmatprep.subr.mxu0 0.0
  %578 = vmatpush1.msra.mxu0 0.0
  %579 = vmatprep.subr.mxu0 0.0
  %580 = vmatpush1.msra.mxu0 0.0
  %581 = vmatprep.subr.mxu0 0.0
  %582 = vmatpush1.msra.mxu0 0.0
  %583 = vmatprep.subr.mxu0 0.0
  %584 = vmatpush1.msra.mxu0 0.0
  %585 = vmatprep.subr.mxu0 0.0
  %586 = vmatpush1.msra.mxu0 0.0
  %587 = vmatprep.subr.mxu0 0.0
  %588 = vmatpush1.msra.mxu0 0.0
  %589 = vmatprep.subr.mxu0 0.0
  %590 = vmatpush1.msra.mxu0 0.0
  %591 = vmatprep.subr.mxu0 0.0
  %592 = vmatpush1.msra.mxu0 0.0
  %593 = vmatprep.mubr.f32.mxu0 0.0
  %594 = vmatmul.mubr.f32.gmra.mrb[0].mxu0 %v527
  %v595 = vpop.f32.mrb[0].mxu0
  %v596 = vadd.f32 %v43, %v595
  %v597 = vpop.f32.mrb[0].mxu0
  %v598 = vadd.f32 %v47, %v597
  %599 = vdwg.mxu0
  %v600 = vadd.f32 %v523, %v596
  %v601 = vxor.u32 %v600, 2147483648
  %v602 = vmul.f32 %v601, 1.442695
  %v603 = vpow.pop %v602
  %v604 = vadd.f32 %v603, 1.0
  %v605 = vrcp.pop %v604
  %v606 = vmul.f32 1.0, %v605
  %608 = vrot.lane.b32.xlu0 %v596, 64
  %v609 = vpop.permute.xlu0 %608
  %v611 = vmul.f32 %v606, %v609
  %613 = vrot.lane.b32.xlu0 %v611, 64
  %v614 = vpop.permute.xlu0 %613
  %v616 = vadd.f32 %v523, %v614
  %v617 = vtanh.pop %v616
  %v618 = vsub.f32 1.0, %v606
  %620 = vrot.lane.b32.xlu0 %v617, 96
  %v621 = vpop.permute.xlu0 %620
  %v623 = vmul.f32 %v618, %v621
  %624 = vrot.lane.b32.xlu0 %v521, 32
  %v625 = vpop.permute.xlu0 %624
  %v627 = vmul.f32 %v606, %v625
  %v628 = vadd.f32 %v623, %v627
  %629 = vrot.lane.b32.xlu0 %v596, 32
  %v630 = vpop.permute.xlu0 %629
  %v632 = vadd.f32 %v525, %v630
  %v633 = vxor.u32 %v632, 2147483648
  %v634 = vmul.f32 %v633, 1.442695
  %v635 = vpow.pop %v634
  %v636 = vadd.f32 %v635, 1.0
  %v637 = vrcp.pop %v636
  %v638 = vmul.f32 1.0, %v637
  %640 = vrot.lane.b32.xlu0 %v598, 32
  %v641 = vpop.permute.xlu0 %640
  %v643 = vadd.f32 %v525, %v641
  %v644 = vxor.u32 %v643, 2147483648
  %v645 = vmul.f32 %v644, 1.442695
  %v646 = vpow.pop %v645
  %v647 = vadd.f32 %v646, 1.0
  %v648 = vrcp.pop %v647
  %v649 = vmul.f32 1.0, %v648
  %650 = vrot.lane.b32.xlu0 %v598, 96
  %v651 = vpop.permute.xlu0 %650
  %v653 = vmul.f32 %v638, %v651
  %655 = vrot.lane.b32.xlu0 %v653, 64
  %v656 = vpop.permute.xlu0 %655
  %v658 = vadd.f32 %v525, %v656
  %v659 = vtanh.pop %v658
  %v660 = vsub.f32 1.0, %v649
  %662 = vrot.lane.b32.xlu0 %v659, 96
  %v663 = vpop.permute.xlu0 %662
  %v665 = vmul.f32 %v660, %v663
  %v666 = vmul.f32 %v649, %v521
  %v667 = vadd.f32 %v665, %v666
  %669 = vrot.lane.b32.xlu0 %v628, 96
  %v670 = vpop.permute.xlu0 %669
  %s672 = scalar_lea.vmem %s4, 6
  %673 = vst.msk [vmem:[%s672] sm:$0x3] %vm194, %v670
  %675 = vrot.lane.b32.xlu0 %v667, 96
  %v676 = vpop.permute.xlu0 %675
  %s678 = scalar_lea.vmem %s5, 8
  %679 = vst.msk [vmem:[%s678] sm:$0x3] %vm194, %v676
  %v680 = vsel %vm202, %v670, %v667
  %s681 = scalar_lea.vmem %s0, 8
  %v682 = vld [vmem:[%s681] sm:$0x3]
  %s683 = scalar_lea.vmem %s1, 6
  %v684 = vld [vmem:[%s683] sm:$0x3]
  %v686 = vsel %vm50, %v680, 0
  %688 = vmatprep.subr.mxu0 %v20
  %689 = vmatpush1.msra.mxu0 %v19
  %690 = vmatprep.subr.mxu0 %v22
  %691 = vmatpush1.msra.mxu0 %v21
  %692 = vmatprep.subr.mxu0 %v24
  %693 = vmatpush1.msra.mxu0 %v23
  %694 = vmatprep.subr.mxu0 %v26
  %695 = vmatpush1.msra.mxu0 %v25
  %696 = vmatprep.subr.mxu0 %v28
  %697 = vmatpush1.msra.mxu0 %v27
  %698 = vmatprep.subr.mxu0 %v30
  %699 = vmatpush1.msra.mxu0 %v29
  %700 = vmatprep.subr.mxu0 %v32
  %701 = vmatpush1.msra.mxu0 %v31
  %702 = vmatprep.subr.mxu0 %v34
  %703 = vmatpush1.msra.mxu0 %v33
  %704 = vmatprep.subr.mxu0 0.0
  %705 = vmatpush1.msra.mxu0 0.0
  %706 = vmatprep.subr.mxu0 0.0
  %707 = vmatpush1.msra.mxu0 0.0
  %708 = vmatprep.subr.mxu0 0.0
  %709 = vmatpush1.msra.mxu0 0.0
  %710 = vmatprep.subr.mxu0 0.0
  %711 = vmatpush1.msra.mxu0 0.0
  %712 = vmatprep.subr.mxu0 0.0
  %713 = vmatpush1.msra.mxu0 0.0
  %714 = vmatprep.subr.mxu0 0.0
  %715 = vmatpush1.msra.mxu0 0.0
  %716 = vmatprep.subr.mxu0 0.0
  %717 = vmatpush1.msra.mxu0 0.0
  %718 = vmatprep.subr.mxu0 0.0
  %719 = vmatpush1.msra.mxu0 0.0
  %720 = vmatprep.subr.mxu0 0.0
  %721 = vmatpush1.msra.mxu0 0.0
  %722 = vmatprep.subr.mxu0 0.0
  %723 = vmatpush1.msra.mxu0 0.0
  %724 = vmatprep.subr.mxu0 0.0
  %725 = vmatpush1.msra.mxu0 0.0
  %726 = vmatprep.subr.mxu0 0.0
  %727 = vmatpush1.msra.mxu0 0.0
  %728 = vmatprep.subr.mxu0 0.0
  %729 = vmatpush1.msra.mxu0 0.0
  %730 = vmatprep.subr.mxu0 0.0
  %731 = vmatpush1.msra.mxu0 0.0
  %732 = vmatprep.subr.mxu0 0.0
  %733 = vmatpush1.msra.mxu0 0.0
  %734 = vmatprep.subr.mxu0 0.0
  %735 = vmatpush1.msra.mxu0 0.0
  %736 = vmatprep.subr.mxu0 0.0
  %737 = vmatpush1.msra.mxu0 0.0
  %738 = vmatprep.subr.mxu0 0.0
  %739 = vmatpush1.msra.mxu0 0.0
  %740 = vmatprep.subr.mxu0 0.0
  %741 = vmatpush1.msra.mxu0 0.0
  %742 = vmatprep.subr.mxu0 0.0
  %743 = vmatpush1.msra.mxu0 0.0
  %744 = vmatprep.subr.mxu0 0.0
  %745 = vmatpush1.msra.mxu0 0.0
  %746 = vmatprep.subr.mxu0 0.0
  %747 = vmatpush1.msra.mxu0 0.0
  %748 = vmatprep.subr.mxu0 0.0
  %749 = vmatpush1.msra.mxu0 0.0
  %750 = vmatprep.subr.mxu0 0.0
  %751 = vmatpush1.msra.mxu0 0.0
  %752 = vmatprep.mubr.f32.mxu0 0.0
  %753 = vmatmul.mubr.f32.gmra.mrb[0].mxu0 %v686
  %v754 = vpop.f32.mrb[0].mxu0
  %v755 = vadd.f32 %v43, %v754
  %v756 = vpop.f32.mrb[0].mxu0
  %v757 = vadd.f32 %v47, %v756
  %758 = vdwg.mxu0
  %v759 = vadd.f32 %v682, %v755
  %v760 = vxor.u32 %v759, 2147483648
  %v761 = vmul.f32 %v760, 1.442695
  %v762 = vpow.pop %v761
  %v763 = vadd.f32 %v762, 1.0
  %v764 = vrcp.pop %v763
  %v765 = vmul.f32 1.0, %v764
  %767 = vrot.lane.b32.xlu0 %v755, 64
  %v768 = vpop.permute.xlu0 %767
  %v770 = vmul.f32 %v765, %v768
  %772 = vrot.lane.b32.xlu0 %v770, 64
  %v773 = vpop.permute.xlu0 %772
  %v775 = vadd.f32 %v682, %v773
  %v776 = vtanh.pop %v775
  %v777 = vsub.f32 1.0, %v765
  %779 = vrot.lane.b32.xlu0 %v776, 96
  %v780 = vpop.permute.xlu0 %779
  %v782 = vmul.f32 %v777, %v780
  %783 = vrot.lane.b32.xlu0 %v680, 32
  %v784 = vpop.permute.xlu0 %783
  %v786 = vmul.f32 %v765, %v784
  %v787 = vadd.f32 %v782, %v786
  %788 = vrot.lane.b32.xlu0 %v755, 32
  %v789 = vpop.permute.xlu0 %788
  %v791 = vadd.f32 %v684, %v789
  %v792 = vxor.u32 %v791, 2147483648
  %v793 = vmul.f32 %v792, 1.442695
  %v794 = vpow.pop %v793
  %v795 = vadd.f32 %v794, 1.0
  %v796 = vrcp.pop %v795
  %v797 = vmul.f32 1.0, %v796
  %799 = vrot.lane.b32.xlu0 %v757, 32
  %v800 = vpop.permute.xlu0 %799
  %v802 = vadd.f32 %v684, %v800
  %v803 = vxor.u32 %v802, 2147483648
  %v804 = vmul.f32 %v803, 1.442695
  %v805 = vpow.pop %v804
  %v806 = vadd.f32 %v805, 1.0
  %v807 = vrcp.pop %v806
  %v808 = vmul.f32 1.0, %v807
  %809 = vrot.lane.b32.xlu0 %v757, 96
  %v810 = vpop.permute.xlu0 %809
  %v812 = vmul.f32 %v797, %v810
  %814 = vrot.lane.b32.xlu0 %v812, 64
  %v815 = vpop.permute.xlu0 %814
  %v817 = vadd.f32 %v684, %v815
  %v818 = vtanh.pop %v817
  %v819 = vsub.f32 1.0, %v808
  %821 = vrot.lane.b32.xlu0 %v818, 96
  %v822 = vpop.permute.xlu0 %821
  %v824 = vmul.f32 %v819, %v822
  %v825 = vmul.f32 %v808, %v680
  %v826 = vadd.f32 %v824, %v825
  %828 = vrot.lane.b32.xlu0 %v787, 96
  %v829 = vpop.permute.xlu0 %828
  %s831 = scalar_lea.vmem %s4, 8
  %832 = vst.msk [vmem:[%s831] sm:$0x3] %vm194, %v829
  %834 = vrot.lane.b32.xlu0 %v826, 96
  %v835 = vpop.permute.xlu0 %834
  %s837 = scalar_lea.vmem %s5, 6
  %838 = vst.msk [vmem:[%s837] sm:$0x3] %vm194, %v835
  %v839 = vsel %vm202, %v829, %v826
  %s840 = scalar_lea.vmem %s0, 10
  %v841 = vld [vmem:[%s840] sm:$0x3]
  %s842 = scalar_lea.vmem %s1, 4
  %v843 = vld [vmem:[%s842] sm:$0x3]
  %v845 = vsel %vm50, %v839, 0
  %847 = vmatprep.subr.mxu0 %v20
  %848 = vmatpush1.msra.mxu0 %v19
  %849 = vmatprep.subr.mxu0 %v22
  %850 = vmatpush1.msra.mxu0 %v21
  %851 = vmatprep.subr.mxu0 %v24
  %852 = vmatpush1.msra.mxu0 %v23
  %853 = vmatprep.subr.mxu0 %v26
  %854 = vmatpush1.msra.mxu0 %v25
  %855 = vmatprep.subr.mxu0 %v28
  %856 = vmatpush1.msra.mxu0 %v27
  %857 = vmatprep.subr.mxu0 %v30
  %858 = vmatpush1.msra.mxu0 %v29
  %859 = vmatprep.subr.mxu0 %v32
  %860 = vmatpush1.msra.mxu0 %v31
  %861 = vmatprep.subr.mxu0 %v34
  %862 = vmatpush1.msra.mxu0 %v33
  %863 = vmatprep.subr.mxu0 0.0
  %864 = vmatpush1.msra.mxu0 0.0
  %865 = vmatprep.subr.mxu0 0.0
  %866 = vmatpush1.msra.mxu0 0.0
  %867 = vmatprep.subr.mxu0 0.0
  %868 = vmatpush1.msra.mxu0 0.0
  %869 = vmatprep.subr.mxu0 0.0
  %870 = vmatpush1.msra.mxu0 0.0
  %871 = vmatprep.subr.mxu0 0.0
  %872 = vmatpush1.msra.mxu0 0.0
  %873 = vmatprep.subr.mxu0 0.0
  %874 = vmatpush1.msra.mxu0 0.0
  %875 = vmatprep.subr.mxu0 0.0
  %876 = vmatpush1.msra.mxu0 0.0
  %877 = vmatprep.subr.mxu0 0.0
  %878 = vmatpush1.msra.mxu0 0.0
  %879 = vmatprep.subr.mxu0 0.0
  %880 = vmatpush1.msra.mxu0 0.0
  %881 = vmatprep.subr.mxu0 0.0
  %882 = vmatpush1.msra.mxu0 0.0
  %883 = vmatprep.subr.mxu0 0.0
  %884 = vmatpush1.msra.mxu0 0.0
  %885 = vmatprep.subr.mxu0 0.0
  %886 = vmatpush1.msra.mxu0 0.0
  %887 = vmatprep.subr.mxu0 0.0
  %888 = vmatpush1.msra.mxu0 0.0
  %889 = vmatprep.subr.mxu0 0.0
  %890 = vmatpush1.msra.mxu0 0.0
  %891 = vmatprep.subr.mxu0 0.0
  %892 = vmatpush1.msra.mxu0 0.0
  %893 = vmatprep.subr.mxu0 0.0
  %894 = vmatpush1.msra.mxu0 0.0
  %895 = vmatprep.subr.mxu0 0.0
  %896 = vmatpush1.msra.mxu0 0.0
  %897 = vmatprep.subr.mxu0 0.0
  %898 = vmatpush1.msra.mxu0 0.0
  %899 = vmatprep.subr.mxu0 0.0
  %900 = vmatpush1.msra.mxu0 0.0
  %901 = vmatprep.subr.mxu0 0.0
  %902 = vmatpush1.msra.mxu0 0.0
  %903 = vmatprep.subr.mxu0 0.0
  %904 = vmatpush1.msra.mxu0 0.0
  %905 = vmatprep.subr.mxu0 0.0
  %906 = vmatpush1.msra.mxu0 0.0
  %907 = vmatprep.subr.mxu0 0.0
  %908 = vmatpush1.msra.mxu0 0.0
  %909 = vmatprep.subr.mxu0 0.0
  %910 = vmatpush1.msra.mxu0 0.0
  %911 = vmatprep.mubr.f32.mxu0 0.0
  %912 = vmatmul.mubr.f32.gmra.mrb[0].mxu0 %v845
  %v913 = vpop.f32.mrb[0].mxu0
  %v914 = vadd.f32 %v43, %v913
  %v915 = vpop.f32.mrb[0].mxu0
  %v916 = vadd.f32 %v47, %v915
  %917 = vdwg.mxu0
  %v918 = vadd.f32 %v841, %v914
  %v919 = vxor.u32 %v918, 2147483648
  %v920 = vmul.f32 %v919, 1.442695
  %v921 = vpow.pop %v920
  %v922 = vadd.f32 %v921, 1.0
  %v923 = vrcp.pop %v922
  %v924 = vmul.f32 1.0, %v923
  %926 = vrot.lane.b32.xlu0 %v914, 64
  %v927 = vpop.permute.xlu0 %926
  %v929 = vmul.f32 %v924, %v927
  %931 = vrot.lane.b32.xlu0 %v929, 64
  %v932 = vpop.permute.xlu0 %931
  %v934 = vadd.f32 %v841, %v932
  %v935 = vtanh.pop %v934
  %v936 = vsub.f32 1.0, %v924
  %938 = vrot.lane.b32.xlu0 %v935, 96
  %v939 = vpop.permute.xlu0 %938
  %v941 = vmul.f32 %v936, %v939
  %942 = vrot.lane.b32.xlu0 %v839, 32
  %v943 = vpop.permute.xlu0 %942
  %v945 = vmul.f32 %v924, %v943
  %v946 = vadd.f32 %v941, %v945
  %947 = vrot.lane.b32.xlu0 %v914, 32
  %v948 = vpop.permute.xlu0 %947
  %v950 = vadd.f32 %v843, %v948
  %v951 = vxor.u32 %v950, 2147483648
  %v952 = vmul.f32 %v951, 1.442695
  %v953 = vpow.pop %v952
  %v954 = vadd.f32 %v953, 1.0
  %v955 = vrcp.pop %v954
  %v956 = vmul.f32 1.0, %v955
  %958 = vrot.lane.b32.xlu0 %v916, 32
  %v959 = vpop.permute.xlu0 %958
  %v961 = vadd.f32 %v843, %v959
  %v962 = vxor.u32 %v961, 2147483648
  %v963 = vmul.f32 %v962, 1.442695
  %v964 = vpow.pop %v963
  %v965 = vadd.f32 %v964, 1.0
  %v966 = vrcp.pop %v965
  %v967 = vmul.f32 1.0, %v966
  %968 = vrot.lane.b32.xlu0 %v916, 96
  %v969 = vpop.permute.xlu0 %968
  %v971 = vmul.f32 %v956, %v969
  %973 = vrot.lane.b32.xlu0 %v971, 64
  %v974 = vpop.permute.xlu0 %973
  %v976 = vadd.f32 %v843, %v974
  %v977 = vtanh.pop %v976
  %v978 = vsub.f32 1.0, %v967
  %980 = vrot.lane.b32.xlu0 %v977, 96
  %v981 = vpop.permute.xlu0 %980
  %v983 = vmul.f32 %v978, %v981
  %v984 = vmul.f32 %v967, %v839
  %v985 = vadd.f32 %v983, %v984
  %987 = vrot.lane.b32.xlu0 %v946, 96
  %v988 = vpop.permute.xlu0 %987
  %s990 = scalar_lea.vmem %s4, 10
  %991 = vst.msk [vmem:[%s990] sm:$0x3] %vm194, %v988
  %993 = vrot.lane.b32.xlu0 %v985, 96
  %v994 = vpop.permute.xlu0 %993
  %s996 = scalar_lea.vmem %s5, 4
  %997 = vst.msk [vmem:[%s996] sm:$0x3] %vm194, %v994
  %v998 = vsel %vm202, %v988, %v985
  %s999 = scalar_lea.vmem %s0, 12
  %v1000 = vld [vmem:[%s999] sm:$0x3]
  %s1001 = scalar_lea.vmem %s1, 2
  %v1002 = vld [vmem:[%s1001] sm:$0x3]
  %v1004 = vsel %vm50, %v998, 0
  %1006 = vmatprep.subr.mxu0 %v20
  %1007 = vmatpush1.msra.mxu0 %v19
  %1008 = vmatprep.subr.mxu0 %v22
  %1009 = vmatpush1.msra.mxu0 %v21
  %1010 = vmatprep.subr.mxu0 %v24
  %1011 = vmatpush1.msra.mxu0 %v23
  %1012 = vmatprep.subr.mxu0 %v26
  %1013 = vmatpush1.msra.mxu0 %v25
  %1014 = vmatprep.subr.mxu0 %v28
  %1015 = vmatpush1.msra.mxu0 %v27
  %1016 = vmatprep.subr.mxu0 %v30
  %1017 = vmatpush1.msra.mxu0 %v29
  %1018 = vmatprep.subr.mxu0 %v32
  %1019 = vmatpush1.msra.mxu0 %v31
  %1020 = vmatprep.subr.mxu0 %v34
  %1021 = vmatpush1.msra.mxu0 %v33
  %1022 = vmatprep.subr.mxu0 0.0
  %1023 = vmatpush1.msra.mxu0 0.0
  %1024 = vmatprep.subr.mxu0 0.0
  %1025 = vmatpush1.msra.mxu0 0.0
  %1026 = vmatprep.subr.mxu0 0.0
  %1027 = vmatpush1.msra.mxu0 0.0
  %1028 = vmatprep.subr.mxu0 0.0
  %1029 = vmatpush1.msra.mxu0 0.0
  %1030 = vmatprep.subr.mxu0 0.0
  %1031 = vmatpush1.msra.mxu0 0.0
  %1032 = vmatprep.subr.mxu0 0.0
  %1033 = vmatpush1.msra.mxu0 0.0
  %1034 = vmatprep.subr.mxu0 0.0
  %1035 = vmatpush1.msra.mxu0 0.0
  %1036 = vmatprep.subr.mxu0 0.0
  %1037 = vmatpush1.msra.mxu0 0.0
  %1038 = vmatprep.subr.mxu0 0.0
  %1039 = vmatpush1.msra.mxu0 0.0
  %1040 = vmatprep.subr.mxu0 0.0
  %1041 = vmatpush1.msra.mxu0 0.0
  %1042 = vmatprep.subr.mxu0 0.0
  %1043 = vmatpush1.msra.mxu0 0.0
  %1044 = vmatprep.subr.mxu0 0.0
  %1045 = vmatpush1.msra.mxu0 0.0
  %1046 = vmatprep.subr.mxu0 0.0
  %1047 = vmatpush1.msra.mxu0 0.0
  %1048 = vmatprep.subr.mxu0 0.0
  %1049 = vmatpush1.msra.mxu0 0.0
  %1050 = vmatprep.subr.mxu0 0.0
  %1051 = vmatpush1.msra.mxu0 0.0
  %1052 = vmatprep.subr.mxu0 0.0
  %1053 = vmatpush1.msra.mxu0 0.0
  %1054 = vmatprep.subr.mxu0 0.0
  %1055 = vmatpush1.msra.mxu0 0.0
  %1056 = vmatprep.subr.mxu0 0.0
  %1057 = vmatpush1.msra.mxu0 0.0
  %1058 = vmatprep.subr.mxu0 0.0
  %1059 = vmatpush1.msra.mxu0 0.0
  %1060 = vmatprep.subr.mxu0 0.0
  %1061 = vmatpush1.msra.mxu0 0.0
  %1062 = vmatprep.subr.mxu0 0.0
  %1063 = vmatpush1.msra.mxu0 0.0
  %1064 = vmatprep.subr.mxu0 0.0
  %1065 = vmatpush1.msra.mxu0 0.0
  %1066 = vmatprep.subr.mxu0 0.0
  %1067 = vmatpush1.msra.mxu0 0.0
  %1068 = vmatprep.subr.mxu0 0.0
  %1069 = vmatpush1.msra.mxu0 0.0
  %1070 = vmatprep.mubr.f32.mxu0 0.0
  %1071 = vmatmul.mubr.f32.gmra.mrb[0].mxu0 %v1004
  %v1072 = vpop.f32.mrb[0].mxu0
  %v1073 = vadd.f32 %v43, %v1072
  %v1074 = vpop.f32.mrb[0].mxu0
  %v1075 = vadd.f32 %v47, %v1074
  %1076 = vdwg.mxu0
  %v1077 = vadd.f32 %v1000, %v1073
  %v1078 = vxor.u32 %v1077, 2147483648
  %v1079 = vmul.f32 %v1078, 1.442695
  %v1080 = vpow.pop %v1079
  %v1081 = vadd.f32 %v1080, 1.0
  %v1082 = vrcp.pop %v1081
  %v1083 = vmul.f32 1.0, %v1082
  %1085 = vrot.lane.b32.xlu0 %v1073, 64
  %v1086 = vpop.permute.xlu0 %1085
  %v1088 = vmul.f32 %v1083, %v1086
  %1090 = vrot.lane.b32.xlu0 %v1088, 64
  %v1091 = vpop.permute.xlu0 %1090
  %v1093 = vadd.f32 %v1000, %v1091
  %v1094 = vtanh.pop %v1093
  %v1095 = vsub.f32 1.0, %v1083
  %1097 = vrot.lane.b32.xlu0 %v1094, 96
  %v1098 = vpop.permute.xlu0 %1097
  %v1100 = vmul.f32 %v1095, %v1098
  %1101 = vrot.lane.b32.xlu0 %v998, 32
  %v1102 = vpop.permute.xlu0 %1101
  %v1104 = vmul.f32 %v1083, %v1102
  %v1105 = vadd.f32 %v1100, %v1104
  %1106 = vrot.lane.b32.xlu0 %v1073, 32
  %v1107 = vpop.permute.xlu0 %1106
  %v1109 = vadd.f32 %v1002, %v1107
  %v1110 = vxor.u32 %v1109, 2147483648
  %v1111 = vmul.f32 %v1110, 1.442695
  %v1112 = vpow.pop %v1111
  %v1113 = vadd.f32 %v1112, 1.0
  %v1114 = vrcp.pop %v1113
  %v1115 = vmul.f32 1.0, %v1114
  %1117 = vrot.lane.b32.xlu0 %v1075, 32
  %v1118 = vpop.permute.xlu0 %1117
  %v1120 = vadd.f32 %v1002, %v1118
  %v1121 = vxor.u32 %v1120, 2147483648
  %v1122 = vmul.f32 %v1121, 1.442695
  %v1123 = vpow.pop %v1122
  %v1124 = vadd.f32 %v1123, 1.0
  %v1125 = vrcp.pop %v1124
  %v1126 = vmul.f32 1.0, %v1125
  %1127 = vrot.lane.b32.xlu0 %v1075, 96
  %v1128 = vpop.permute.xlu0 %1127
  %v1130 = vmul.f32 %v1115, %v1128
  %1132 = vrot.lane.b32.xlu0 %v1130, 64
  %v1133 = vpop.permute.xlu0 %1132
  %v1135 = vadd.f32 %v1002, %v1133
  %v1136 = vtanh.pop %v1135
  %v1137 = vsub.f32 1.0, %v1126
  %1139 = vrot.lane.b32.xlu0 %v1136, 96
  %v1140 = vpop.permute.xlu0 %1139
  %v1142 = vmul.f32 %v1137, %v1140
  %v1143 = vmul.f32 %v1126, %v998
  %v1144 = vadd.f32 %v1142, %v1143
  %1146 = vrot.lane.b32.xlu0 %v1105, 96
  %v1147 = vpop.permute.xlu0 %1146
  %s1149 = scalar_lea.vmem %s4, 12
  %1150 = vst.msk [vmem:[%s1149] sm:$0x3] %vm194, %v1147
  %1152 = vrot.lane.b32.xlu0 %v1144, 96
  %v1153 = vpop.permute.xlu0 %1152
  %s1155 = scalar_lea.vmem %s5, 2
  %1156 = vst.msk [vmem:[%s1155] sm:$0x3] %vm194, %v1153
  %v1157 = vsel %vm202, %v1147, %v1144
  %s1158 = scalar_lea.vmem %s0, 14
  %v1159 = vld [vmem:[%s1158] sm:$0x3]
  %v1160 = vld [vmem:[%s1] sm:$0x3]
  %v1162 = vsel %vm50, %v1157, 0
  %1164 = vmatprep.subr.mxu0 %v20
  %1165 = vmatpush1.msra.mxu0 %v19
  %1166 = vmatprep.subr.mxu0 %v22
  %1167 = vmatpush1.msra.mxu0 %v21
  %1168 = vmatprep.subr.mxu0 %v24
  %1169 = vmatpush1.msra.mxu0 %v23
  %1170 = vmatprep.subr.mxu0 %v26
  %1171 = vmatpush1.msra.mxu0 %v25
  %1172 = vmatprep.subr.mxu0 %v28
  %1173 = vmatpush1.msra.mxu0 %v27
  %1174 = vmatprep.subr.mxu0 %v30
  %1175 = vmatpush1.msra.mxu0 %v29
  %1176 = vmatprep.subr.mxu0 %v32
  %1177 = vmatpush1.msra.mxu0 %v31
  %1178 = vmatprep.subr.mxu0 %v34
  %1179 = vmatpush1.msra.mxu0 %v33
  %1180 = vmatprep.subr.mxu0 0.0
  %1181 = vmatpush1.msra.mxu0 0.0
  %1182 = vmatprep.subr.mxu0 0.0
  %1183 = vmatpush1.msra.mxu0 0.0
  %1184 = vmatprep.subr.mxu0 0.0
  %1185 = vmatpush1.msra.mxu0 0.0
  %1186 = vmatprep.subr.mxu0 0.0
  %1187 = vmatpush1.msra.mxu0 0.0
  %1188 = vmatprep.subr.mxu0 0.0
  %1189 = vmatpush1.msra.mxu0 0.0
  %1190 = vmatprep.subr.mxu0 0.0
  %1191 = vmatpush1.msra.mxu0 0.0
  %1192 = vmatprep.subr.mxu0 0.0
  %1193 = vmatpush1.msra.mxu0 0.0
  %1194 = vmatprep.subr.mxu0 0.0
  %1195 = vmatpush1.msra.mxu0 0.0
  %1196 = vmatprep.subr.mxu0 0.0
  %1197 = vmatpush1.msra.mxu0 0.0
  %1198 = vmatprep.subr.mxu0 0.0
  %1199 = vmatpush1.msra.mxu0 0.0
  %1200 = vmatprep.subr.mxu0 0.0
  %1201 = vmatpush1.msra.mxu0 0.0
  %1202 = vmatprep.subr.mxu0 0.0
  %1203 = vmatpush1.msra.mxu0 0.0
  %1204 = vmatprep.subr.mxu0 0.0
  %1205 = vmatpush1.msra.mxu0 0.0
  %1206 = vmatprep.subr.mxu0 0.0
  %1207 = vmatpush1.msra.mxu0 0.0
  %1208 = vmatprep.subr.mxu0 0.0
  %1209 = vmatpush1.msra.mxu0 0.0
  %1210 = vmatprep.subr.mxu0 0.0
  %1211 = vmatpush1.msra.mxu0 0.0
  %1212 = vmatprep.subr.mxu0 0.0
  %1213 = vmatpush1.msra.mxu0 0.0
  %1214 = vmatprep.subr.mxu0 0.0
  %1215 = vmatpush1.msra.mxu0 0.0
  %1216 = vmatprep.subr.mxu0 0.0
  %1217 = vmatpush1.msra.mxu0 0.0
  %1218 = vmatprep.subr.mxu0 0.0
  %1219 = vmatpush1.msra.mxu0 0.0
  %1220 = vmatprep.subr.mxu0 0.0
  %1221 = vmatpush1.msra.mxu0 0.0
  %1222 = vmatprep.subr.mxu0 0.0
  %1223 = vmatpush1.msra.mxu0 0.0
  %1224 = vmatprep.subr.mxu0 0.0
  %1225 = vmatpush1.msra.mxu0 0.0
  %1226 = vmatprep.subr.mxu0 0.0
  %1227 = vmatpush1.msra.mxu0 0.0
  %1228 = vmatprep.mubr.f32.mxu0 0.0
  %1229 = vmatmul.mubr.f32.gmra.mrb[0].mxu0 %v1162
  %v1230 = vpop.f32.mrb[0].mxu0
  %v1231 = vadd.f32 %v43, %v1230
  %v1232 = vpop.f32.mrb[0].mxu0
  %v1233 = vadd.f32 %v47, %v1232
  %1234 = vdwg.mxu0
  %v1235 = vadd.f32 %v1159, %v1231
  %v1236 = vxor.u32 %v1235, 2147483648
  %v1237 = vmul.f32 %v1236, 1.442695
  %v1238 = vpow.pop %v1237
  %v1239 = vadd.f32 %v1238, 1.0
  %v1240 = vrcp.pop %v1239
  %v1241 = vmul.f32 1.0, %v1240
  %1243 = vrot.lane.b32.xlu0 %v1231, 64
  %v1244 = vpop.permute.xlu0 %1243
  %v1246 = vmul.f32 %v1241, %v1244
  %1248 = vrot.lane.b32.xlu0 %v1246, 64
  %v1249 = vpop.permute.xlu0 %1248
  %v1251 = vadd.f32 %v1159, %v1249
  %v1252 = vtanh.pop %v1251
  %v1253 = vsub.f32 1.0, %v1241
  %1255 = vrot.lane.b32.xlu0 %v1252, 96
  %v1256 = vpop.permute.xlu0 %1255
  %v1258 = vmul.f32 %v1253, %v1256
  %1259 = vrot.lane.b32.xlu0 %v1157, 32
  %v1260 = vpop.permute.xlu0 %1259
  %v1262 = vmul.f32 %v1241, %v1260
  %v1263 = vadd.f32 %v1258, %v1262
  %1264 = vrot.lane.b32.xlu0 %v1231, 32
  %v1265 = vpop.permute.xlu0 %1264
  %v1267 = vadd.f32 %v1160, %v1265
  %v1268 = vxor.u32 %v1267, 2147483648
  %v1269 = vmul.f32 %v1268, 1.442695
  %v1270 = vpow.pop %v1269
  %v1271 = vadd.f32 %v1270, 1.0
  %v1272 = vrcp.pop %v1271
  %v1273 = vmul.f32 1.0, %v1272
  %1275 = vrot.lane.b32.xlu0 %v1233, 32
  %v1276 = vpop.permute.xlu0 %1275
  %v1278 = vadd.f32 %v1160, %v1276
  %v1279 = vxor.u32 %v1278, 2147483648
  %v1280 = vmul.f32 %v1279, 1.442695
  %v1281 = vpow.pop %v1280
  %v1282 = vadd.f32 %v1281, 1.0
  %v1283 = vrcp.pop %v1282
  %v1284 = vmul.f32 1.0, %v1283
  %1285 = vrot.lane.b32.xlu0 %v1233, 96
  %v1286 = vpop.permute.xlu0 %1285
  %v1288 = vmul.f32 %v1273, %v1286
  %1290 = vrot.lane.b32.xlu0 %v1288, 64
  %v1291 = vpop.permute.xlu0 %1290
  %v1293 = vadd.f32 %v1160, %v1291
  %v1294 = vtanh.pop %v1293
  %v1295 = vsub.f32 1.0, %v1284
  %1297 = vrot.lane.b32.xlu0 %v1294, 96
  %v1298 = vpop.permute.xlu0 %1297
  %v1300 = vmul.f32 %v1295, %v1298
  %v1301 = vmul.f32 %v1284, %v1157
  %v1302 = vadd.f32 %v1300, %v1301
  %1304 = vrot.lane.b32.xlu0 %v1263, 96
  %v1305 = vpop.permute.xlu0 %1304
  %s1307 = scalar_lea.vmem %s4, 14
  %1308 = vst.msk [vmem:[%s1307] sm:$0x3] %vm194, %v1305
  %1310 = vrot.lane.b32.xlu0 %v1302, 96
  %v1311 = vpop.permute.xlu0 %1310
  %1313 = vst.msk [vmem:[%s5] sm:$0x3] %vm194, %v1311
  // Predicated region
  $region18: #{tacotron_encoder.8} parent=0 // pred_check
    _
  $region19: #{tacotron_encoder.8} parent=0 // pred_check_branch
    %1315 = sbr.rel (0) target = $region21
  $region20: #{tacotron_encoder.8} parent=0 // pred_region
    _
  $region21: #{tacotron_encoder.8} parent=0 // pred_fallthru
    _
  // Predicated region
  $region22: #{tacotron_encoder.8} parent=0 // pred_check
    _
  $region23: #{tacotron_encoder.8} parent=0 // pred_check_branch
    %1317 = sbr.rel (0) target = $region25
  $region24: #{tacotron_encoder.8} parent=0 // pred_region
    _
  $region25: #{tacotron_encoder.8} parent=0 // pred_fallthru
    _
  // Predicated region
  $region26: #{tacotron_encoder.8} parent=0 // pred_check
    _
  $region27: #{tacotron_encoder.8} parent=0 // pred_check_branch
    %1319 = sbr.rel (0) target = $region29
  $region28: #{tacotron_encoder.8} parent=0 // pred_region
    _
  $region29: #{tacotron_encoder.8} parent=0 // pred_fallthru
    _
  // Predicated region
  $region30: #{tacotron_encoder.8} parent=0 // pred_check
    _
  $region31: #{tacotron_encoder.8} parent=0 // pred_check_branch
    %1321 = sbr.rel (0) target = $region33
  $region32: #{tacotron_encoder.8} parent=0 // pred_region
    _
  $region33: #{tacotron_encoder.8} parent=0 // pred_fallthru
    _

</llo_original>
